<compile_context>
chip_gen: v7x
topology: tpu7x:2x2x1
jax: 0.10.0
libtpu: 0.0.40
codegen_flags: <defaults>
</compile_context>

<pallas_src>
import functools

import jax
import jax.numpy as jnp
from jax.experimental import pallas as pl
from jax.experimental.pallas import tpu as pltpu


def _cdiv(a, b):
    return -(-a // b)


def _round_up(a, b):
    return _cdiv(a, b) * b


# --------------------------------------------------------------------------- #
# Kernel
# --------------------------------------------------------------------------- #
def _glstm_kernel(xproj_ref, noise_ref, whh_ref, crep_ref, packed_ref,
                  h_scr, c_scr, *, hidden_size, time_block, unroll):
    """One grid step = `time_block` timesteps for one batch tile.

    Grid = (batch_tiles ["parallel"], time_blocks ["arbitrary"]).

    xproj_ref : (T, bt, 4*HS) bf16  precomputed x @ W_ih + bias, gates [i,f,o,g]
    noise_ref : (T, bt, HS)   bf16  standard-normal eps per step
    whh_ref   : (HS, 4*HS)    bf16  recurrent weights, gates [i,f,o,g]
    crep_ref  : (HS, CW)      f32   c_reparameterize, zero-padded to CW lanes
    packed_ref: (T, bt, 4*HS) f32   [pre_h | c_new | c_mu | c_std] per step
    h_scr/c_scr: (bt, HS)     f32   recurrent carry across time blocks
    """
    HS = hidden_size
    f32 = jnp.float32

    @pl.when(pl.program_id(1) == 0)           # first time block of this batch tile
    def _init():
        h_scr[...] = jnp.zeros_like(h_scr)    # PyTorch: h_0 = c_0 = zeros
        c_scr[...] = jnp.zeros_like(c_scr)

    w_hh = whh_ref[...]                       # resident bf16 MXU operand
    c_rep = crep_ref[...]                     # resident f32 (tiny)

    def step(t, carry):
        h_t, c_t = carry                      # f32 (bt, HS)

        # Only the recurrent matmul remains on the serial critical path.
        gates = xproj_ref[t].astype(f32) + jnp.dot(
            h_t.astype(w_hh.dtype), w_hh, preferred_element_type=f32)

        # Gate order [i, f, o, g]: one sigmoid launch + one tanh launch.
        sig = jax.nn.sigmoid(gates[:, :3 * HS])
        i_t = sig[:, :HS]
        f_t = sig[:, HS:2 * HS]
        o_t = sig[:, 2 * HS:]
        g_t = jnp.tanh(gates[:, 3 * HS:])

        pre_c = f_t * c_t + i_t * g_t
        pre_h = o_t * jnp.tanh(c_t)           # uses OLD c_t, exactly as in PyTorch

        # Reparameterized cell state; kept in f32 (correctness review), output
        # width padded to CW lanes so the MXU result is lane-dense.
        c_params = jnp.dot(pre_c, c_rep, preferred_element_type=f32)
        c_mu = jnp.clip(c_params[:, :HS], 1e-6, 1e6)
        c_std = jnp.maximum(jax.nn.softplus(c_params[:, HS:2 * HS]), 1e-6)
        c_new = c_mu + noise_ref[t].astype(f32) * c_std

        # Single lane-dense (4*HS-wide) store per step.
        packed_ref[t] = jnp.concatenate([pre_h, c_new, c_mu, c_std], axis=-1)
        return (pre_h, c_new)

    h_fin, c_fin = jax.lax.fori_loop(0, time_block, step,
                                     (h_scr[...], c_scr[...]), unroll=unroll)
    h_scr[...] = h_fin
    c_scr[...] = c_fin


# --------------------------------------------------------------------------- #
# Sizing helpers
# --------------------------------------------------------------------------- #
def _permute_gates(w, axis):
    """Reorder gate blocks [i, f, g, o] -> [i, f, o, g] along `axis`."""
    i, f, g, o = jnp.split(w, 4, axis=axis)
    return jnp.concatenate([i, f, o, g], axis=axis)


def _vmem_budget_bytes():
    """~75% of this generation's VMEM (~48 MiB on v7x, ~96 MiB on v5e/v6e)."""
    try:
        cap = int(pltpu.get_tpu_info().vmem_capacity_bytes)
    except Exception:
        cap = 64 * 1024 * 1024            # conservative fallback: v7x per-TC VMEM
    return (cap * 3) // 4


def _batch_tiling(bs):
    """(bs_tile, n_tiles).  Sublane-aligned batch tiles; 2+ tiles for larger
    batches so the leading 'parallel' grid axis can use both v7x TensorCores;
    each tile capped at 256 rows (one v6e/v7x MXU pass of M)."""
    bs8 = _round_up(bs, 8)
    if bs8 < 32:
        return bs8, 1
    n_tiles = max(2, _cdiv(bs8, 256))
    tile = _round_up(_cdiv(bs8, n_tiles), 16)   # 16-row alignment (bf16 sublane pairs)
    return tile, n_tiles


def _choose_time_block(seq_len, bs_tile, hs, vmem_budget):
    """Largest time block fitting the VMEM budget (capped at 64); the wrapper
    pads seq up to a multiple of it, so odd/prime seq lengths never degrade."""
    # Streamed bytes per timestep: bf16 x_proj(4HS) + bf16 noise(HS) + f32 out(4HS),
    # each double-buffered by the pipeline.
    per_t = 2 * bs_tile * (4 * hs * 2 + hs * 2 + 4 * hs * 4)
    fixed = (hs * 4 * hs * 2                       # W_hh (bf16, single-buffered)
             + hs * _round_up(2 * hs, 128) * 4     # c_rep (f32 padded, single-buffered)
             + 2 * bs_tile * hs * 4                # h/c carries
             + 2 * 1024 * 1024)                    # compiler-internal headroom
    t_cap = max(1, (vmem_budget - fixed) // per_t)
    return int(max(1, min(seq_len, t_cap, 64)))


# --------------------------------------------------------------------------- #
# Wrapper
# --------------------------------------------------------------------------- #
def c_glstm_core_forward(x, noise, w_ih, w_hh, bias, c_rep):
    """x: (bs, seq, input_sz); noise: (bs, seq, HS) standard-normal draws.

    Returns (hidden_seq, c_seq, (None, None), (c_mus, c_stds), (h_t, c_t)),
    matching the PyTorch c_GLSTMCore.forward signature.
    """
    bs, seq, _ = x.shape
    HS = w_hh.shape[0]
    f32, bf16 = jnp.float32, jnp.bfloat16

    # --- prep (outside the serial kernel) ------------------------------------
    # Gate reorder [i,f,g,o] -> [i,f,o,g].
    w_ih_p = _permute_gates(w_ih.astype(f32), axis=1)
    w_hh_p = _permute_gates(w_hh.astype(f32), axis=1)
    bias_p = _permute_gates(bias.astype(f32), axis=0)

    # Hoisted input projection for the whole sequence: bf16 operands, f32 accum.
    x_tm = jnp.transpose(x.astype(f32), (1, 0, 2))            # (seq, bs, D)
    x_proj = jnp.einsum('sbd,dh->sbh', x_tm.astype(bf16), w_ih_p.astype(bf16),
                        preferred_element_type=f32) + bias_p  # (seq, bs, 4*HS)
    x_proj = x_proj.astype(bf16)                              # bf16 streaming
    noise_tm = jnp.transpose(noise, (1, 0, 2)).astype(bf16)   # (seq, bs, HS)

    # Batch tiling (parallel grid axis) and VMEM-budgeted time block.
    bs_tile, n_btiles = _batch_tiling(bs)
    bs_p = bs_tile * n_btiles
    vmem_budget = _vmem_budget_bytes()
    T = _choose_time_block(seq, bs_tile, HS, vmem_budget)
    seq_p = _round_up(seq, T)

    pad = ((0, seq_p - seq), (0, bs_p - bs), (0, 0))
    x_proj = jnp.pad(x_proj, pad)
    noise_tm = jnp.pad(noise_tm, pad)

    # Resident weights: W_hh in bf16 (MXU), c_rep in f32 padded to 128-lane width.
    w_hh_bf = w_hh_p.astype(bf16)
    cw = _round_up(2 * HS, 128)
    c_rep_pad = jnp.pad(c_rep.astype(f32), ((0, 0), (0, cw - 2 * HS)))

    # Adaptive unroll: full unroll only while per-step tensors are a few vregs.
    gates_vregs = _cdiv(bs_tile, 8) * _cdiv(4 * HS, 128)
    unroll = True if gates_vregs <= 4 else 4

    kernel = functools.partial(_glstm_kernel, hidden_size=HS,
                               time_block=T, unroll=unroll)

    def build(single_buffer_weights):
        def const_spec(shape):
            kwargs = {}
            if single_buffer_weights:
                kwargs["pipeline_mode"] = pl.Buffered(1)   # weights never change
            return pl.BlockSpec(shape, lambda b, s: (0,) * len(shape), **kwargs)

        seq_spec = lambda w: pl.BlockSpec((T, bs_tile, w), lambda b, s: (s, b, 0))
        return pl.pallas_call(
            kernel,
            out_shape=jax.ShapeDtypeStruct((seq_p, bs_p, 4 * HS), f32),
            grid_spec=pltpu.PrefetchScalarGridSpec(
                num_scalar_prefetch=0,
                grid=(n_btiles, seq_p // T),
                in_specs=[
                    seq_spec(4 * HS),              # x_proj (bf16)
                    seq_spec(HS),                  # noise  (bf16)
                    const_spec((HS, 4 * HS)),      # W_hh   (bf16, resident)
                    const_spec((HS, cw)),          # c_rep  (f32,  resident)
                ],
                out_specs=seq_spec(4 * HS),        # packed [h|c|mu|std] (f32)
                scratch_shapes=[
                    pltpu.VMEM((bs_tile, HS), f32),   # h_t carry
                    pltpu.VMEM((bs_tile, HS), f32),   # c_t carry
                ],
            ),
            compiler_params=pltpu.CompilerParams(
                dimension_semantics=("parallel", "arbitrary"),
                vmem_limit_bytes=int(vmem_budget)),
        )

    try:
        packed = build(True)(x_proj, noise_tm, w_hh_bf, c_rep_pad)
        packed = jax.block_until_ready(packed)
    except Exception:
        # Fallback if single-buffered (Buffered(1)) specs are rejected.
        packed = build(False)(x_proj, noise_tm, w_hh_bf, c_rep_pad)

    # --- unpack / restore PyTorch layout -------------------------------------
    packed = packed[:seq, :bs, :]               # drop time & batch padding
    hseq = packed[..., 0:HS]
    cseq = packed[..., HS:2 * HS]
    cmus = packed[..., 2 * HS:3 * HS]
    cstds = packed[..., 3 * HS:]

    tb = lambda a: jnp.transpose(a, (1, 0, 2))  # time-major -> batch-major
    h_fin = hseq[-1]                            # (bs, HS) final states
    c_fin = cseq[-1]
    return (tb(hseq), tb(cseq), (None, None), (tb(cmus), tb(cstds)),
            (h_fin, c_fin))


# --------------------------------------------------------------------------- #
# Pure-JAX reference (mirrors the PyTorch loop with the same documented casts:
# bf16 input projection / bf16 h@W_hh operands / bf16-rounded streamed noise;
# the c_reparameterize matmul and all gate math in f32).
# --------------------------------------------------------------------------- #
def _reference_forward(x, noise, w_ih, w_hh, bias, c_rep):
    bs, seq, _ = x.shape
    HS = w_hh.shape[0]
    f32, bf16 = jnp.float32, jnp.bfloat16

    w_ih_bf = w_ih.astype(bf16)
    w_hh_bf = w_hh.astype(bf16)
    c_rep_f = c_rep.astype(f32)

    # Same hoisted bf16 input projection (original [i,f,g,o] gate order).
    x_tm = jnp.transpose(x, (1, 0, 2)).astype(bf16)
    xp_seq = (jnp.einsum('sbd,dh->sbh', x_tm, w_ih_bf,
                         preferred_element_type=f32) + bias
              ).astype(bf16).astype(f32)
    noise_tm = jnp.transpose(noise, (1, 0, 2)).astype(bf16).astype(f32)

    h0 = jnp.zeros((bs, HS), f32)
    c0 = jnp.zeros((bs, HS), f32)

    def step(carry, inp):
        h_t, c_t = carry
        xp_t, eps = inp
        gates = xp_t + jnp.dot(h_t.astype(bf16), w_hh_bf,
                               preferred_element_type=f32)
        i_t = jax.nn.sigmoid(gates[:, :HS])
        f_t = jax.nn.sigmoid(gates[:, HS:2 * HS])
        g_t = jnp.tanh(gates[:, 2 * HS:3 * HS])
        o_t = jax.nn.sigmoid(gates[:, 3 * HS:])
        pre_c = f_t * c_t + i_t * g_t
        pre_h = o_t * jnp.tanh(c_t)
        c_params = jnp.dot(pre_c, c_rep_f, preferred_element_type=f32)
        c_mu = jnp.clip(c_params[:, :HS], 1e-6, 1e6)
        c_std = jnp.maximum(jax.nn.softplus(c_params[:, HS:]), 1e-6)
        c_new = c_mu + eps * c_std
        return (pre_h, c_new), (pre_h, c_new, c_mu, c_std)

    (h_fin, c_fin), (hs, cs, mus, stds) = jax.lax.scan(
        step, (h0, c0), (xp_seq, noise_tm))
    tb = lambda a: jnp.transpose(a, (1, 0, 2))
    return tb(hs), tb(cs), (None, None), (tb(mus), tb(stds)), (h_fin, c_fin)


def _xavier_uniform(key, shape):
    fan_in, fan_out = shape[0], shape[1]
    a = (6.0 / (fan_in + fan_out)) ** 0.5
    return jax.random.uniform(key, shape, jnp.float32, minval=-a, maxval=a)


if __name__ == "__main__":
    # small, deterministic setup: batch=2, seq=8, input_sz=4, hidden=32
    bs, seq, in_sz, HS = 2, 8, 4, 32
    root = jax.random.PRNGKey(0)
    k_x, k_n, k_ih, k_hh, k_cr = jax.random.split(root, 5)

    x = jax.random.normal(k_x, (bs, seq, in_sz), jnp.float32)
    noise = jax.random.normal(k_n, (bs, seq, HS), jnp.float32)   # eps ~ N(0,1)

    w_ih = _xavier_uniform(k_ih, (in_sz, 4 * HS))
    w_hh = _xavier_uniform(k_hh, (HS, 4 * HS))
    bias = jnp.zeros((4 * HS,), jnp.float32)
    # c_reparameterize: xavier, then scale the std-producing half by 1e-5.
    c_rep = _xavier_uniform(k_cr, (HS, 2 * HS))
    scaling = jnp.concatenate(
        [jnp.ones((HS, HS), jnp.float32), jnp.ones((HS, HS), jnp.float32) * 1e-5],
        axis=1)
    c_rep = c_rep * scaling

    out = c_glstm_core_forward(x, noise, w_ih, w_hh, bias, c_rep)
    out = jax.block_until_ready(out)

    ref = _reference_forward(x, noise, w_ih, w_hh, bias, c_rep)
    ref = jax.block_until_ready(ref)

    # Tolerance covers possible Mosaic-vs-XLA default f32-matmul precision
    # differences on the (tiny) c_reparameterize matmul; structural bugs would
    # exceed this by orders of magnitude.
    checks = [(out[0], ref[0]), (out[1], ref[1]),
              (out[3][0], ref[3][0]), (out[3][1], ref[3][1]),
              (out[4][0], ref[4][0]), (out[4][1], ref[4][1])]
    for a, b in checks:
        assert jnp.allclose(a, b, atol=2e-3, rtol=2e-2), \
            float(jnp.max(jnp.abs(a - b)))

    print("KERNEL_OK")
</pallas_src>

<mosaic_0001>
module attributes {stable_mosaic.version = 11 : i64} {
  func.func @_glstm_kernel(%arg0: i32, %arg1: i32, %arg2: memref<8x8x128xbf16, #tpu.memory_space<vmem>>, %arg3: memref<8x8x32xbf16, #tpu.memory_space<vmem>>, %arg4: memref<32x128xbf16, #tpu.memory_space<vmem>>, %arg5: memref<32x128xf32, #tpu.memory_space<vmem>>, %arg6: memref<8x8x128xf32, #tpu.memory_space<vmem>>, %arg7: memref<8x32xf32, #tpu.memory_space<vmem>>, %arg8: memref<8x32xf32, #tpu.memory_space<vmem>>) attributes {dimension_semantics = [#tpu.dimension_semantics<parallel>, #tpu.dimension_semantics<arbitrary>], iteration_bounds = array<i64: 1, 1>, scalar_prefetch = 0 : i64, scratch_operands = 2 : i64, tpu.core_type = #tpu.core_type<tc>, window_params = [{transform_indices = @transform_0, window_bounds = array<i64: 8, 8, 128>}, {transform_indices = @transform_1, window_bounds = array<i64: 8, 8, 32>}, {pipeline_mode = #tpu.pipeline_mode<synchronous>, transform_indices = @transform_2, window_bounds = array<i64: 32, 128>}, {pipeline_mode = #tpu.pipeline_mode<synchronous>, transform_indices = @transform_3, window_bounds = array<i64: 32, 128>}, {transform_indices = @transform_4, window_bounds = array<i64: 8, 8, 128>}]} {
    %c0_i32 = arith.constant 0 : i32
    %0 = arith.cmpi eq, %arg1, %c0_i32 : i32
    %1 = arith.extui %0 : i1 to i32
    %c0_i32_0 = arith.constant 0 : i32
    %2 = arith.cmpi ne, %1, %c0_i32_0 : i32
    scf.if %2 {
      %cst_124 = arith.constant 0.000000e+00 : f32
      %465 = vector.broadcast %cst_124 : f32 to vector<8x32xf32>
      %c0_125 = arith.constant 0 : index
      %c0_126 = arith.constant 0 : index
      %466 = vector.load %arg7[%c0_125, %c0_126] : memref<8x32xf32, #tpu.memory_space<vmem>>, vector<8x32xf32>
      tpu.vector_store %arg7[%c0_125, %c0_126], %465 {strides = array<i32>} : memref<8x32xf32, #tpu.memory_space<vmem>>, vector<8x32xf32>,
      %cst_127 = arith.constant 0.000000e+00 : f32
      %467 = vector.broadcast %cst_127 : f32 to vector<8x32xf32>
      %c0_128 = arith.constant 0 : index
      %c0_129 = arith.constant 0 : index
      %468 = vector.load %arg8[%c0_128, %c0_129] : memref<8x32xf32, #tpu.memory_space<vmem>>, vector<8x32xf32>
      tpu.vector_store %arg8[%c0_128, %c0_129], %467 {strides = array<i32>} : memref<8x32xf32, #tpu.memory_space<vmem>>, vector<8x32xf32>,
    } else {
    }
    %c0 = arith.constant 0 : index
    %c0_1 = arith.constant 0 : index
    %3 = vector.load %arg4[%c0, %c0_1] : memref<32x128xbf16, #tpu.memory_space<vmem>>, vector<32x128xbf16>
    %c0_2 = arith.constant 0 : index
    %c0_3 = arith.constant 0 : index
    %4 = vector.load %arg5[%c0_2, %c0_3] : memref<32x128xf32, #tpu.memory_space<vmem>>, vector<32x128xf32>
    %c0_4 = arith.constant 0 : index
    %c0_5 = arith.constant 0 : index
    %5 = vector.load %arg7[%c0_4, %c0_5] : memref<8x32xf32, #tpu.memory_space<vmem>>, vector<8x32xf32>
    %c0_6 = arith.constant 0 : index
    %c0_7 = arith.constant 0 : index
    %6 = vector.load %arg8[%c0_6, %c0_7] : memref<8x32xf32, #tpu.memory_space<vmem>>, vector<8x32xf32>
    %c0_i32_8 = arith.constant 0 : i32
    %7 = arith.index_cast %c0_i32_8 : i32 to index
    %c0_9 = arith.constant 0 : index
    %c0_10 = arith.constant 0 : index
    %8 = vector.load %arg2[%7, %c0_9, %c0_10] : memref<8x8x128xbf16, #tpu.memory_space<vmem>>, vector<1x8x128xbf16>
    %9 = vector.shape_cast %8 : vector<1x8x128xbf16> to vector<8x128xbf16>
    %10 = arith.extf %9 : vector<8x128xbf16> to vector<8x128xf32>
    %11 = arith.truncf %5 : vector<8x32xf32> to vector<8x32xbf16>
    %cst = arith.constant dense<0.000000e+00> : vector<8x128xf32>
    %12 = tpu.matmul %11, %3, %cst {dimension_numbers = #tpu.dot_dimension_numbers<[1], [0], [0], [1], [0, 0, 1, 1], [], []>} : vector<8x32xbf16>, vector<32x128xbf16>, vector<8x128xf32> -> vector<8x128xf32>
    %13 = arith.addf %10, %12 : vector<8x128xf32>
    %14 = vector.extract_strided_slice %13 {offsets = [0, 0], sizes = [8, 96], strides = [1, 1]} : vector<8x128xf32> to vector<8x96xf32>
    %15 = arith.negf %14 : vector<8x96xf32>
    %16 = math.exp %15 : vector<8x96xf32>
    %cst_11 = arith.constant 1.000000e+00 : f32
    %17 = vector.broadcast %cst_11 : f32 to vector<8x96xf32>
    %18 = arith.addf %17, %16 : vector<8x96xf32>
    %19 = arith.divf %17, %18 : vector<8x96xf32>
    %20 = vector.extract_strided_slice %19 {offsets = [0, 0], sizes = [8, 32], strides = [1, 1]} : vector<8x96xf32> to vector<8x32xf32>
    %21 = vector.extract_strided_slice %19 {offsets = [0, 32], sizes = [8, 32], strides = [1, 1]} : vector<8x96xf32> to vector<8x32xf32>
    %22 = vector.extract_strided_slice %19 {offsets = [0, 64], sizes = [8, 32], strides = [1, 1]} : vector<8x96xf32> to vector<8x32xf32>
    %23 = vector.extract_strided_slice %13 {offsets = [0, 96], sizes = [8, 32], strides = [1, 1]} : vector<8x128xf32> to vector<8x32xf32>
    %24 = math.tanh %23 : vector<8x32xf32>
    %25 = arith.mulf %21, %6 : vector<8x32xf32>
    %26 = arith.mulf %20, %24 : vector<8x32xf32>
    %27 = arith.addf %25, %26 : vector<8x32xf32>
    %28 = math.tanh %6 : vector<8x32xf32>
    %29 = arith.mulf %22, %28 : vector<8x32xf32>
    %cst_12 = arith.constant dense<0.000000e+00> : vector<8x128xf32>
    %30 = tpu.matmul %27, %4, %cst_12 {dimension_numbers = #tpu.dot_dimension_numbers<[1], [0], [0], [1], [0, 0, 1, 1], [], []>} : vector<8x32xf32>, vector<32x128xf32>, vector<8x128xf32> -> vector<8x128xf32>
    %31 = vector.extract_strided_slice %30 {offsets = [0, 0], sizes = [8, 32], strides = [1, 1]} : vector<8x128xf32> to vector<8x32xf32>
    %cst_13 = arith.constant 9.99999997E-7 : f32
    %cst_14 = arith.constant 1.000000e+06 : f32
    %32 = vector.broadcast %cst_13 : f32 to vector<8x32xf32>
    %33 = arith.maximumf %32, %31 : vector<8x32xf32>
    %34 = vector.broadcast %cst_14 : f32 to vector<8x32xf32>
    %35 = arith.minimumf %34, %33 : vector<8x32xf32>
    %36 = vector.extract_strided_slice %30 {offsets = [0, 32], sizes = [8, 32], strides = [1, 1]} : vector<8x128xf32> to vector<8x32xf32>
    %cst_15 = arith.constant 0.000000e+00 : f32
    %37 = vector.broadcast %cst_15 : f32 to vector<8x32xf32>
    %38 = arith.maximumf %36, %37 : vector<8x32xf32>
    %39 = vector.broadcast %cst_15 : f32 to vector<8x32xf32>
    %40 = arith.subf %36, %39 : vector<8x32xf32>
    %41 = arith.cmpf one, %40, %40 : vector<8x32xf32>
    %42 = vector.broadcast %cst_15 : f32 to vector<8x32xf32>
    %43 = arith.addf %36, %42 : vector<8x32xf32>
    %44 = math.absf %40 : vector<8x32xf32>
    %cst_16 = arith.constant 0.000000e+00 : f32
    %45 = vector.broadcast %cst_16 : f32 to vector<8x32xf32>
    %46 = arith.subf %45, %44 : vector<8x32xf32>
    %47 = math.exp %46 : vector<8x32xf32>
    %48 = math.log1p %47 : vector<8x32xf32>
    %49 = arith.addf %38, %48 : vector<8x32xf32>
    %50 = arith.select %41, %43, %49 : vector<8x32xi1>, vector<8x32xf32>
    %cst_17 = arith.constant 9.99999997E-7 : f32
    %51 = vector.broadcast %cst_17 : f32 to vector<8x32xf32>
    %52 = arith.maximumf %50, %51 : vector<8x32xf32>
    %53 = arith.index_cast %c0_i32_8 : i32 to index
    %c0_18 = arith.constant 0 : index
    %c0_19 = arith.constant 0 : index
    %54 = vector.load %arg3[%53, %c0_18, %c0_19] : memref<8x8x32xbf16, #tpu.memory_space<vmem>>, vector<1x8x32xbf16>
    %55 = vector.shape_cast %54 : vector<1x8x32xbf16> to vector<8x32xbf16>
    %56 = arith.extf %55 : vector<8x32xbf16> to vector<8x32xf32>
    %57 = arith.mulf %56, %52 : vector<8x32xf32>
    %58 = arith.addf %35, %57 : vector<8x32xf32>
    %59 = tpu.concatenate %29, %58, %35, %52 in 1 : vector<8x32xf32>, vector<8x32xf32>, vector<8x32xf32>, vector<8x32xf32> -> vector<8x128xf32>
    %60 = arith.index_cast %c0_i32_8 : i32 to index
    %c0_20 = arith.constant 0 : index
    %c0_21 = arith.constant 0 : index
    %61 = vector.load %arg6[%60, %c0_20, %c0_21] : memref<8x8x128xf32, #tpu.memory_space<vmem>>, vector<1x8x128xf32>
    %62 = vector.shape_cast %61 : vector<1x8x128xf32> to vector<8x128xf32>
    %63 = vector.shape_cast %59 : vector<8x128xf32> to vector<1x8x128xf32>
    tpu.vector_store %arg6[%60, %c0_20, %c0_21], %63 {strides = array<i32>} : memref<8x8x128xf32, #tpu.memory_space<vmem>>, vector<1x8x128xf32>,
    %c1_i32 = arith.constant 1 : i32
    %64 = arith.index_cast %c1_i32 : i32 to index
    %c0_22 = arith.constant 0 : index
    %c0_23 = arith.constant 0 : index
    %65 = vector.load %arg2[%64, %c0_22, %c0_23] : memref<8x8x128xbf16, #tpu.memory_space<vmem>>, vector<1x8x128xbf16>
    %66 = vector.shape_cast %65 : vector<1x8x128xbf16> to vector<8x128xbf16>
    %67 = arith.extf %66 : vector<8x128xbf16> to vector<8x128xf32>
    %68 = arith.truncf %29 : vector<8x32xf32> to vector<8x32xbf16>
    %cst_24 = arith.constant dense<0.000000e+00> : vector<8x128xf32>
    %69 = tpu.matmul %68, %3, %cst_24 {dimension_numbers = #tpu.dot_dimension_numbers<[1], [0], [0], [1], [0, 0, 1, 1], [], []>} : vector<8x32xbf16>, vector<32x128xbf16>, vector<8x128xf32> -> vector<8x128xf32>
    %70 = arith.addf %67, %69 : vector<8x128xf32>
    %71 = vector.extract_strided_slice %70 {offsets = [0, 0], sizes = [8, 96], strides = [1, 1]} : vector<8x128xf32> to vector<8x96xf32>
    %72 = arith.negf %71 : vector<8x96xf32>
    %73 = math.exp %72 : vector<8x96xf32>
    %cst_25 = arith.constant 1.000000e+00 : f32
    %74 = vector.broadcast %cst_25 : f32 to vector<8x96xf32>
    %75 = arith.addf %74, %73 : vector<8x96xf32>
    %76 = arith.divf %74, %75 : vector<8x96xf32>
    %77 = vector.extract_strided_slice %76 {offsets = [0, 0], sizes = [8, 32], strides = [1, 1]} : vector<8x96xf32> to vector<8x32xf32>
    %78 = vector.extract_strided_slice %76 {offsets = [0, 32], sizes = [8, 32], strides = [1, 1]} : vector<8x96xf32> to vector<8x32xf32>
    %79 = vector.extract_strided_slice %76 {offsets = [0, 64], sizes = [8, 32], strides = [1, 1]} : vector<8x96xf32> to vector<8x32xf32>
    %80 = vector.extract_strided_slice %70 {offsets = [0, 96], sizes = [8, 32], strides = [1, 1]} : vector<8x128xf32> to vector<8x32xf32>
    %81 = math.tanh %80 : vector<8x32xf32>
    %82 = arith.mulf %78, %58 : vector<8x32xf32>
    %83 = arith.mulf %77, %81 : vector<8x32xf32>
    %84 = arith.addf %82, %83 : vector<8x32xf32>
    %85 = math.tanh %58 : vector<8x32xf32>
    %86 = arith.mulf %79, %85 : vector<8x32xf32>
    %cst_26 = arith.constant dense<0.000000e+00> : vector<8x128xf32>
    %87 = tpu.matmul %84, %4, %cst_26 {dimension_numbers = #tpu.dot_dimension_numbers<[1], [0], [0], [1], [0, 0, 1, 1], [], []>} : vector<8x32xf32>, vector<32x128xf32>, vector<8x128xf32> -> vector<8x128xf32>
    %88 = vector.extract_strided_slice %87 {offsets = [0, 0], sizes = [8, 32], strides = [1, 1]} : vector<8x128xf32> to vector<8x32xf32>
    %cst_27 = arith.constant 9.99999997E-7 : f32
    %cst_28 = arith.constant 1.000000e+06 : f32
    %89 = vector.broadcast %cst_27 : f32 to vector<8x32xf32>
    %90 = arith.maximumf %89, %88 : vector<8x32xf32>
    %91 = vector.broadcast %cst_28 : f32 to vector<8x32xf32>
    %92 = arith.minimumf %91, %90 : vector<8x32xf32>
    %93 = vector.extract_strided_slice %87 {offsets = [0, 32], sizes = [8, 32], strides = [1, 1]} : vector<8x128xf32> to vector<8x32xf32>
    %cst_29 = arith.constant 0.000000e+00 : f32
    %94 = vector.broadcast %cst_29 : f32 to vector<8x32xf32>
    %95 = arith.maximumf %93, %94 : vector<8x32xf32>
    %96 = vector.broadcast %cst_29 : f32 to vector<8x32xf32>
    %97 = arith.subf %93, %96 : vector<8x32xf32>
    %98 = arith.cmpf one, %97, %97 : vector<8x32xf32>
    %99 = vector.broadcast %cst_29 : f32 to vector<8x32xf32>
    %100 = arith.addf %93, %99 : vector<8x32xf32>
    %101 = math.absf %97 : vector<8x32xf32>
    %cst_30 = arith.constant 0.000000e+00 : f32
    %102 = vector.broadcast %cst_30 : f32 to vector<8x32xf32>
    %103 = arith.subf %102, %101 : vector<8x32xf32>
    %104 = math.exp %103 : vector<8x32xf32>
    %105 = math.log1p %104 : vector<8x32xf32>
    %106 = arith.addf %95, %105 : vector<8x32xf32>
    %107 = arith.select %98, %100, %106 : vector<8x32xi1>, vector<8x32xf32>
    %cst_31 = arith.constant 9.99999997E-7 : f32
    %108 = vector.broadcast %cst_31 : f32 to vector<8x32xf32>
    %109 = arith.maximumf %107, %108 : vector<8x32xf32>
    %110 = arith.index_cast %c1_i32 : i32 to index
    %c0_32 = arith.constant 0 : index
    %c0_33 = arith.constant 0 : index
    %111 = vector.load %arg3[%110, %c0_32, %c0_33] : memref<8x8x32xbf16, #tpu.memory_space<vmem>>, vector<1x8x32xbf16>
    %112 = vector.shape_cast %111 : vector<1x8x32xbf16> to vector<8x32xbf16>
    %113 = arith.extf %112 : vector<8x32xbf16> to vector<8x32xf32>
    %114 = arith.mulf %113, %109 : vector<8x32xf32>
    %115 = arith.addf %92, %114 : vector<8x32xf32>
    %116 = tpu.concatenate %86, %115, %92, %109 in 1 : vector<8x32xf32>, vector<8x32xf32>, vector<8x32xf32>, vector<8x32xf32> -> vector<8x128xf32>
    %117 = arith.index_cast %c1_i32 : i32 to index
    %c0_34 = arith.constant 0 : index
    %c0_35 = arith.constant 0 : index
    %118 = vector.load %arg6[%117, %c0_34, %c0_35] : memref<8x8x128xf32, #tpu.memory_space<vmem>>, vector<1x8x128xf32>
    %119 = vector.shape_cast %118 : vector<1x8x128xf32> to vector<8x128xf32>
    %120 = vector.shape_cast %116 : vector<8x128xf32> to vector<1x8x128xf32>
    tpu.vector_store %arg6[%117, %c0_34, %c0_35], %120 {strides = array<i32>} : memref<8x8x128xf32, #tpu.memory_space<vmem>>, vector<1x8x128xf32>,
    %c2_i32 = arith.constant 2 : i32
    %121 = arith.index_cast %c2_i32 : i32 to index
    %c0_36 = arith.constant 0 : index
    %c0_37 = arith.constant 0 : index
    %122 = vector.load %arg2[%121, %c0_36, %c0_37] : memref<8x8x128xbf16, #tpu.memory_space<vmem>>, vector<1x8x128xbf16>
    %123 = vector.shape_cast %122 : vector<1x8x128xbf16> to vector<8x128xbf16>
    %124 = arith.extf %123 : vector<8x128xbf16> to vector<8x128xf32>
    %125 = arith.truncf %86 : vector<8x32xf32> to vector<8x32xbf16>
    %cst_38 = arith.constant dense<0.000000e+00> : vector<8x128xf32>
    %126 = tpu.matmul %125, %3, %cst_38 {dimension_numbers = #tpu.dot_dimension_numbers<[1], [0], [0], [1], [0, 0, 1, 1], [], []>} : vector<8x32xbf16>, vector<32x128xbf16>, vector<8x128xf32> -> vector<8x128xf32>
    %127 = arith.addf %124, %126 : vector<8x128xf32>
    %128 = vector.extract_strided_slice %127 {offsets = [0, 0], sizes = [8, 96], strides = [1, 1]} : vector<8x128xf32> to vector<8x96xf32>
    %129 = arith.negf %128 : vector<8x96xf32>
    %130 = math.exp %129 : vector<8x96xf32>
    %cst_39 = arith.constant 1.000000e+00 : f32
    %131 = vector.broadcast %cst_39 : f32 to vector<8x96xf32>
    %132 = arith.addf %131, %130 : vector<8x96xf32>
    %133 = arith.divf %131, %132 : vector<8x96xf32>
    %134 = vector.extract_strided_slice %133 {offsets = [0, 0], sizes = [8, 32], strides = [1, 1]} : vector<8x96xf32> to vector<8x32xf32>
    %135 = vector.extract_strided_slice %133 {offsets = [0, 32], sizes = [8, 32], strides = [1, 1]} : vector<8x96xf32> to vector<8x32xf32>
    %136 = vector.extract_strided_slice %133 {offsets = [0, 64], sizes = [8, 32], strides = [1, 1]} : vector<8x96xf32> to vector<8x32xf32>
    %137 = vector.extract_strided_slice %127 {offsets = [0, 96], sizes = [8, 32], strides = [1, 1]} : vector<8x128xf32> to vector<8x32xf32>
    %138 = math.tanh %137 : vector<8x32xf32>
    %139 = arith.mulf %135, %115 : vector<8x32xf32>
    %140 = arith.mulf %134, %138 : vector<8x32xf32>
    %141 = arith.addf %139, %140 : vector<8x32xf32>
    %142 = math.tanh %115 : vector<8x32xf32>
    %143 = arith.mulf %136, %142 : vector<8x32xf32>
    %cst_40 = arith.constant dense<0.000000e+00> : vector<8x128xf32>
    %144 = tpu.matmul %141, %4, %cst_40 {dimension_numbers = #tpu.dot_dimension_numbers<[1], [0], [0], [1], [0, 0, 1, 1], [], []>} : vector<8x32xf32>, vector<32x128xf32>, vector<8x128xf32> -> vector<8x128xf32>
    %145 = vector.extract_strided_slice %144 {offsets = [0, 0], sizes = [8, 32], strides = [1, 1]} : vector<8x128xf32> to vector<8x32xf32>
    %cst_41 = arith.constant 9.99999997E-7 : f32
    %cst_42 = arith.constant 1.000000e+06 : f32
    %146 = vector.broadcast %cst_41 : f32 to vector<8x32xf32>
    %147 = arith.maximumf %146, %145 : vector<8x32xf32>
    %148 = vector.broadcast %cst_42 : f32 to vector<8x32xf32>
    %149 = arith.minimumf %148, %147 : vector<8x32xf32>
    %150 = vector.extract_strided_slice %144 {offsets = [0, 32], sizes = [8, 32], strides = [1, 1]} : vector<8x128xf32> to vector<8x32xf32>
    %cst_43 = arith.constant 0.000000e+00 : f32
    %151 = vector.broadcast %cst_43 : f32 to vector<8x32xf32>
    %152 = arith.maximumf %150, %151 : vector<8x32xf32>
    %153 = vector.broadcast %cst_43 : f32 to vector<8x32xf32>
    %154 = arith.subf %150, %153 : vector<8x32xf32>
    %155 = arith.cmpf one, %154, %154 : vector<8x32xf32>
    %156 = vector.broadcast %cst_43 : f32 to vector<8x32xf32>
    %157 = arith.addf %150, %156 : vector<8x32xf32>
    %158 = math.absf %154 : vector<8x32xf32>
    %cst_44 = arith.constant 0.000000e+00 : f32
    %159 = vector.broadcast %cst_44 : f32 to vector<8x32xf32>
    %160 = arith.subf %159, %158 : vector<8x32xf32>
    %161 = math.exp %160 : vector<8x32xf32>
    %162 = math.log1p %161 : vector<8x32xf32>
    %163 = arith.addf %152, %162 : vector<8x32xf32>
    %164 = arith.select %155, %157, %163 : vector<8x32xi1>, vector<8x32xf32>
    %cst_45 = arith.constant 9.99999997E-7 : f32
    %165 = vector.broadcast %cst_45 : f32 to vector<8x32xf32>
    %166 = arith.maximumf %164, %165 : vector<8x32xf32>
    %167 = arith.index_cast %c2_i32 : i32 to index
    %c0_46 = arith.constant 0 : index
    %c0_47 = arith.constant 0 : index
    %168 = vector.load %arg3[%167, %c0_46, %c0_47] : memref<8x8x32xbf16, #tpu.memory_space<vmem>>, vector<1x8x32xbf16>
    %169 = vector.shape_cast %168 : vector<1x8x32xbf16> to vector<8x32xbf16>
    %170 = arith.extf %169 : vector<8x32xbf16> to vector<8x32xf32>
    %171 = arith.mulf %170, %166 : vector<8x32xf32>
    %172 = arith.addf %149, %171 : vector<8x32xf32>
    %173 = tpu.concatenate %143, %172, %149, %166 in 1 : vector<8x32xf32>, vector<8x32xf32>, vector<8x32xf32>, vector<8x32xf32> -> vector<8x128xf32>
    %174 = arith.index_cast %c2_i32 : i32 to index
    %c0_48 = arith.constant 0 : index
    %c0_49 = arith.constant 0 : index
    %175 = vector.load %arg6[%174, %c0_48, %c0_49] : memref<8x8x128xf32, #tpu.memory_space<vmem>>, vector<1x8x128xf32>
    %176 = vector.shape_cast %175 : vector<1x8x128xf32> to vector<8x128xf32>
    %177 = vector.shape_cast %173 : vector<8x128xf32> to vector<1x8x128xf32>
    tpu.vector_store %arg6[%174, %c0_48, %c0_49], %177 {strides = array<i32>} : memref<8x8x128xf32, #tpu.memory_space<vmem>>, vector<1x8x128xf32>,
    %c3_i32 = arith.constant 3 : i32
    %178 = arith.index_cast %c3_i32 : i32 to index
    %c0_50 = arith.constant 0 : index
    %c0_51 = arith.constant 0 : index
    %179 = vector.load %arg2[%178, %c0_50, %c0_51] : memref<8x8x128xbf16, #tpu.memory_space<vmem>>, vector<1x8x128xbf16>
    %180 = vector.shape_cast %179 : vector<1x8x128xbf16> to vector<8x128xbf16>
    %181 = arith.extf %180 : vector<8x128xbf16> to vector<8x128xf32>
    %182 = arith.truncf %143 : vector<8x32xf32> to vector<8x32xbf16>
    %cst_52 = arith.constant dense<0.000000e+00> : vector<8x128xf32>
    %183 = tpu.matmul %182, %3, %cst_52 {dimension_numbers = #tpu.dot_dimension_numbers<[1], [0], [0], [1], [0, 0, 1, 1], [], []>} : vector<8x32xbf16>, vector<32x128xbf16>, vector<8x128xf32> -> vector<8x128xf32>
    %184 = arith.addf %181, %183 : vector<8x128xf32>
    %185 = vector.extract_strided_slice %184 {offsets = [0, 0], sizes = [8, 96], strides = [1, 1]} : vector<8x128xf32> to vector<8x96xf32>
    %186 = arith.negf %185 : vector<8x96xf32>
    %187 = math.exp %186 : vector<8x96xf32>
    %cst_53 = arith.constant 1.000000e+00 : f32
    %188 = vector.broadcast %cst_53 : f32 to vector<8x96xf32>
    %189 = arith.addf %188, %187 : vector<8x96xf32>
    %190 = arith.divf %188, %189 : vector<8x96xf32>
    %191 = vector.extract_strided_slice %190 {offsets = [0, 0], sizes = [8, 32], strides = [1, 1]} : vector<8x96xf32> to vector<8x32xf32>
    %192 = vector.extract_strided_slice %190 {offsets = [0, 32], sizes = [8, 32], strides = [1, 1]} : vector<8x96xf32> to vector<8x32xf32>
    %193 = vector.extract_strided_slice %190 {offsets = [0, 64], sizes = [8, 32], strides = [1, 1]} : vector<8x96xf32> to vector<8x32xf32>
    %194 = vector.extract_strided_slice %184 {offsets = [0, 96], sizes = [8, 32], strides = [1, 1]} : vector<8x128xf32> to vector<8x32xf32>
    %195 = math.tanh %194 : vector<8x32xf32>
    %196 = arith.mulf %192, %172 : vector<8x32xf32>
    %197 = arith.mulf %191, %195 : vector<8x32xf32>
    %198 = arith.addf %196, %197 : vector<8x32xf32>
    %199 = math.tanh %172 : vector<8x32xf32>
    %200 = arith.mulf %193, %199 : vector<8x32xf32>
    %cst_54 = arith.constant dense<0.000000e+00> : vector<8x128xf32>
    %201 = tpu.matmul %198, %4, %cst_54 {dimension_numbers = #tpu.dot_dimension_numbers<[1], [0], [0], [1], [0, 0, 1, 1], [], []>} : vector<8x32xf32>, vector<32x128xf32>, vector<8x128xf32> -> vector<8x128xf32>
    %202 = vector.extract_strided_slice %201 {offsets = [0, 0], sizes = [8, 32], strides = [1, 1]} : vector<8x128xf32> to vector<8x32xf32>
    %cst_55 = arith.constant 9.99999997E-7 : f32
    %cst_56 = arith.constant 1.000000e+06 : f32
    %203 = vector.broadcast %cst_55 : f32 to vector<8x32xf32>
    %204 = arith.maximumf %203, %202 : vector<8x32xf32>
    %205 = vector.broadcast %cst_56 : f32 to vector<8x32xf32>
    %206 = arith.minimumf %205, %204 : vector<8x32xf32>
    %207 = vector.extract_strided_slice %201 {offsets = [0, 32], sizes = [8, 32], strides = [1, 1]} : vector<8x128xf32> to vector<8x32xf32>
    %cst_57 = arith.constant 0.000000e+00 : f32
    %208 = vector.broadcast %cst_57 : f32 to vector<8x32xf32>
    %209 = arith.maximumf %207, %208 : vector<8x32xf32>
    %210 = vector.broadcast %cst_57 : f32 to vector<8x32xf32>
    %211 = arith.subf %207, %210 : vector<8x32xf32>
    %212 = arith.cmpf one, %211, %211 : vector<8x32xf32>
    %213 = vector.broadcast %cst_57 : f32 to vector<8x32xf32>
    %214 = arith.addf %207, %213 : vector<8x32xf32>
    %215 = math.absf %211 : vector<8x32xf32>
    %cst_58 = arith.constant 0.000000e+00 : f32
    %216 = vector.broadcast %cst_58 : f32 to vector<8x32xf32>
    %217 = arith.subf %216, %215 : vector<8x32xf32>
    %218 = math.exp %217 : vector<8x32xf32>
    %219 = math.log1p %218 : vector<8x32xf32>
    %220 = arith.addf %209, %219 : vector<8x32xf32>
    %221 = arith.select %212, %214, %220 : vector<8x32xi1>, vector<8x32xf32>
    %cst_59 = arith.constant 9.99999997E-7 : f32
    %222 = vector.broadcast %cst_59 : f32 to vector<8x32xf32>
    %223 = arith.maximumf %221, %222 : vector<8x32xf32>
    %224 = arith.index_cast %c3_i32 : i32 to index
    %c0_60 = arith.constant 0 : index
    %c0_61 = arith.constant 0 : index
    %225 = vector.load %arg3[%224, %c0_60, %c0_61] : memref<8x8x32xbf16, #tpu.memory_space<vmem>>, vector<1x8x32xbf16>
    %226 = vector.shape_cast %225 : vector<1x8x32xbf16> to vector<8x32xbf16>
    %227 = arith.extf %226 : vector<8x32xbf16> to vector<8x32xf32>
    %228 = arith.mulf %227, %223 : vector<8x32xf32>
    %229 = arith.addf %206, %228 : vector<8x32xf32>
    %230 = tpu.concatenate %200, %229, %206, %223 in 1 : vector<8x32xf32>, vector<8x32xf32>, vector<8x32xf32>, vector<8x32xf32> -> vector<8x128xf32>
    %231 = arith.index_cast %c3_i32 : i32 to index
    %c0_62 = arith.constant 0 : index
    %c0_63 = arith.constant 0 : index
    %232 = vector.load %arg6[%231, %c0_62, %c0_63] : memref<8x8x128xf32, #tpu.memory_space<vmem>>, vector<1x8x128xf32>
    %233 = vector.shape_cast %232 : vector<1x8x128xf32> to vector<8x128xf32>
    %234 = vector.shape_cast %230 : vector<8x128xf32> to vector<1x8x128xf32>
    tpu.vector_store %arg6[%231, %c0_62, %c0_63], %234 {strides = array<i32>} : memref<8x8x128xf32, #tpu.memory_space<vmem>>, vector<1x8x128xf32>,
    %c4_i32 = arith.constant 4 : i32
    %235 = arith.index_cast %c4_i32 : i32 to index
    %c0_64 = arith.constant 0 : index
    %c0_65 = arith.constant 0 : index
    %236 = vector.load %arg2[%235, %c0_64, %c0_65] : memref<8x8x128xbf16, #tpu.memory_space<vmem>>, vector<1x8x128xbf16>
    %237 = vector.shape_cast %236 : vector<1x8x128xbf16> to vector<8x128xbf16>
    %238 = arith.extf %237 : vector<8x128xbf16> to vector<8x128xf32>
    %239 = arith.truncf %200 : vector<8x32xf32> to vector<8x32xbf16>
    %cst_66 = arith.constant dense<0.000000e+00> : vector<8x128xf32>
    %240 = tpu.matmul %239, %3, %cst_66 {dimension_numbers = #tpu.dot_dimension_numbers<[1], [0], [0], [1], [0, 0, 1, 1], [], []>} : vector<8x32xbf16>, vector<32x128xbf16>, vector<8x128xf32> -> vector<8x128xf32>
    %241 = arith.addf %238, %240 : vector<8x128xf32>
    %242 = vector.extract_strided_slice %241 {offsets = [0, 0], sizes = [8, 96], strides = [1, 1]} : vector<8x128xf32> to vector<8x96xf32>
    %243 = arith.negf %242 : vector<8x96xf32>
    %244 = math.exp %243 : vector<8x96xf32>
    %cst_67 = arith.constant 1.000000e+00 : f32
    %245 = vector.broadcast %cst_67 : f32 to vector<8x96xf32>
    %246 = arith.addf %245, %244 : vector<8x96xf32>
    %247 = arith.divf %245, %246 : vector<8x96xf32>
    %248 = vector.extract_strided_slice %247 {offsets = [0, 0], sizes = [8, 32], strides = [1, 1]} : vector<8x96xf32> to vector<8x32xf32>
    %249 = vector.extract_strided_slice %247 {offsets = [0, 32], sizes = [8, 32], strides = [1, 1]} : vector<8x96xf32> to vector<8x32xf32>
    %250 = vector.extract_strided_slice %247 {offsets = [0, 64], sizes = [8, 32], strides = [1, 1]} : vector<8x96xf32> to vector<8x32xf32>
    %251 = vector.extract_strided_slice %241 {offsets = [0, 96], sizes = [8, 32], strides = [1, 1]} : vector<8x128xf32> to vector<8x32xf32>
    %252 = math.tanh %251 : vector<8x32xf32>
    %253 = arith.mulf %249, %229 : vector<8x32xf32>
    %254 = arith.mulf %248, %252 : vector<8x32xf32>
    %255 = arith.addf %253, %254 : vector<8x32xf32>
    %256 = math.tanh %229 : vector<8x32xf32>
    %257 = arith.mulf %250, %256 : vector<8x32xf32>
    %cst_68 = arith.constant dense<0.000000e+00> : vector<8x128xf32>
    %258 = tpu.matmul %255, %4, %cst_68 {dimension_numbers = #tpu.dot_dimension_numbers<[1], [0], [0], [1], [0, 0, 1, 1], [], []>} : vector<8x32xf32>, vector<32x128xf32>, vector<8x128xf32> -> vector<8x128xf32>
    %259 = vector.extract_strided_slice %258 {offsets = [0, 0], sizes = [8, 32], strides = [1, 1]} : vector<8x128xf32> to vector<8x32xf32>
    %cst_69 = arith.constant 9.99999997E-7 : f32
    %cst_70 = arith.constant 1.000000e+06 : f32
    %260 = vector.broadcast %cst_69 : f32 to vector<8x32xf32>
    %261 = arith.maximumf %260, %259 : vector<8x32xf32>
    %262 = vector.broadcast %cst_70 : f32 to vector<8x32xf32>
    %263 = arith.minimumf %262, %261 : vector<8x32xf32>
    %264 = vector.extract_strided_slice %258 {offsets = [0, 32], sizes = [8, 32], strides = [1, 1]} : vector<8x128xf32> to vector<8x32xf32>
    %cst_71 = arith.constant 0.000000e+00 : f32
    %265 = vector.broadcast %cst_71 : f32 to vector<8x32xf32>
    %266 = arith.maximumf %264, %265 : vector<8x32xf32>
    %267 = vector.broadcast %cst_71 : f32 to vector<8x32xf32>
    %268 = arith.subf %264, %267 : vector<8x32xf32>
    %269 = arith.cmpf one, %268, %268 : vector<8x32xf32>
    %270 = vector.broadcast %cst_71 : f32 to vector<8x32xf32>
    %271 = arith.addf %264, %270 : vector<8x32xf32>
    %272 = math.absf %268 : vector<8x32xf32>
    %cst_72 = arith.constant 0.000000e+00 : f32
    %273 = vector.broadcast %cst_72 : f32 to vector<8x32xf32>
    %274 = arith.subf %273, %272 : vector<8x32xf32>
    %275 = math.exp %274 : vector<8x32xf32>
    %276 = math.log1p %275 : vector<8x32xf32>
    %277 = arith.addf %266, %276 : vector<8x32xf32>
    %278 = arith.select %269, %271, %277 : vector<8x32xi1>, vector<8x32xf32>
    %cst_73 = arith.constant 9.99999997E-7 : f32
    %279 = vector.broadcast %cst_73 : f32 to vector<8x32xf32>
    %280 = arith.maximumf %278, %279 : vector<8x32xf32>
    %281 = arith.index_cast %c4_i32 : i32 to index
    %c0_74 = arith.constant 0 : index
    %c0_75 = arith.constant 0 : index
    %282 = vector.load %arg3[%281, %c0_74, %c0_75] : memref<8x8x32xbf16, #tpu.memory_space<vmem>>, vector<1x8x32xbf16>
    %283 = vector.shape_cast %282 : vector<1x8x32xbf16> to vector<8x32xbf16>
    %284 = arith.extf %283 : vector<8x32xbf16> to vector<8x32xf32>
    %285 = arith.mulf %284, %280 : vector<8x32xf32>
    %286 = arith.addf %263, %285 : vector<8x32xf32>
    %287 = tpu.concatenate %257, %286, %263, %280 in 1 : vector<8x32xf32>, vector<8x32xf32>, vector<8x32xf32>, vector<8x32xf32> -> vector<8x128xf32>
    %288 = arith.index_cast %c4_i32 : i32 to index
    %c0_76 = arith.constant 0 : index
    %c0_77 = arith.constant 0 : index
    %289 = vector.load %arg6[%288, %c0_76, %c0_77] : memref<8x8x128xf32, #tpu.memory_space<vmem>>, vector<1x8x128xf32>
    %290 = vector.shape_cast %289 : vector<1x8x128xf32> to vector<8x128xf32>
    %291 = vector.shape_cast %287 : vector<8x128xf32> to vector<1x8x128xf32>
    tpu.vector_store %arg6[%288, %c0_76, %c0_77], %291 {strides = array<i32>} : memref<8x8x128xf32, #tpu.memory_space<vmem>>, vector<1x8x128xf32>,
    %c5_i32 = arith.constant 5 : i32
    %292 = arith.index_cast %c5_i32 : i32 to index
    %c0_78 = arith.constant 0 : index
    %c0_79 = arith.constant 0 : index
    %293 = vector.load %arg2[%292, %c0_78, %c0_79] : memref<8x8x128xbf16, #tpu.memory_space<vmem>>, vector<1x8x128xbf16>
    %294 = vector.shape_cast %293 : vector<1x8x128xbf16> to vector<8x128xbf16>
    %295 = arith.extf %294 : vector<8x128xbf16> to vector<8x128xf32>
    %296 = arith.truncf %257 : vector<8x32xf32> to vector<8x32xbf16>
    %cst_80 = arith.constant dense<0.000000e+00> : vector<8x128xf32>
    %297 = tpu.matmul %296, %3, %cst_80 {dimension_numbers = #tpu.dot_dimension_numbers<[1], [0], [0], [1], [0, 0, 1, 1], [], []>} : vector<8x32xbf16>, vector<32x128xbf16>, vector<8x128xf32> -> vector<8x128xf32>
    %298 = arith.addf %295, %297 : vector<8x128xf32>
    %299 = vector.extract_strided_slice %298 {offsets = [0, 0], sizes = [8, 96], strides = [1, 1]} : vector<8x128xf32> to vector<8x96xf32>
    %300 = arith.negf %299 : vector<8x96xf32>
    %301 = math.exp %300 : vector<8x96xf32>
    %cst_81 = arith.constant 1.000000e+00 : f32
    %302 = vector.broadcast %cst_81 : f32 to vector<8x96xf32>
    %303 = arith.addf %302, %301 : vector<8x96xf32>
    %304 = arith.divf %302, %303 : vector<8x96xf32>
    %305 = vector.extract_strided_slice %304 {offsets = [0, 0], sizes = [8, 32], strides = [1, 1]} : vector<8x96xf32> to vector<8x32xf32>
    %306 = vector.extract_strided_slice %304 {offsets = [0, 32], sizes = [8, 32], strides = [1, 1]} : vector<8x96xf32> to vector<8x32xf32>
    %307 = vector.extract_strided_slice %304 {offsets = [0, 64], sizes = [8, 32], strides = [1, 1]} : vector<8x96xf32> to vector<8x32xf32>
    %308 = vector.extract_strided_slice %298 {offsets = [0, 96], sizes = [8, 32], strides = [1, 1]} : vector<8x128xf32> to vector<8x32xf32>
    %309 = math.tanh %308 : vector<8x32xf32>
    %310 = arith.mulf %306, %286 : vector<8x32xf32>
    %311 = arith.mulf %305, %309 : vector<8x32xf32>
    %312 = arith.addf %310, %311 : vector<8x32xf32>
    %313 = math.tanh %286 : vector<8x32xf32>
    %314 = arith.mulf %307, %313 : vector<8x32xf32>
    %cst_82 = arith.constant dense<0.000000e+00> : vector<8x128xf32>
    %315 = tpu.matmul %312, %4, %cst_82 {dimension_numbers = #tpu.dot_dimension_numbers<[1], [0], [0], [1], [0, 0, 1, 1], [], []>} : vector<8x32xf32>, vector<32x128xf32>, vector<8x128xf32> -> vector<8x128xf32>
    %316 = vector.extract_strided_slice %315 {offsets = [0, 0], sizes = [8, 32], strides = [1, 1]} : vector<8x128xf32> to vector<8x32xf32>
    %cst_83 = arith.constant 9.99999997E-7 : f32
    %cst_84 = arith.constant 1.000000e+06 : f32
    %317 = vector.broadcast %cst_83 : f32 to vector<8x32xf32>
    %318 = arith.maximumf %317, %316 : vector<8x32xf32>
    %319 = vector.broadcast %cst_84 : f32 to vector<8x32xf32>
    %320 = arith.minimumf %319, %318 : vector<8x32xf32>
    %321 = vector.extract_strided_slice %315 {offsets = [0, 32], sizes = [8, 32], strides = [1, 1]} : vector<8x128xf32> to vector<8x32xf32>
    %cst_85 = arith.constant 0.000000e+00 : f32
    %322 = vector.broadcast %cst_85 : f32 to vector<8x32xf32>
    %323 = arith.maximumf %321, %322 : vector<8x32xf32>
    %324 = vector.broadcast %cst_85 : f32 to vector<8x32xf32>
    %325 = arith.subf %321, %324 : vector<8x32xf32>
    %326 = arith.cmpf one, %325, %325 : vector<8x32xf32>
    %327 = vector.broadcast %cst_85 : f32 to vector<8x32xf32>
    %328 = arith.addf %321, %327 : vector<8x32xf32>
    %329 = math.absf %325 : vector<8x32xf32>
    %cst_86 = arith.constant 0.000000e+00 : f32
    %330 = vector.broadcast %cst_86 : f32 to vector<8x32xf32>
    %331 = arith.subf %330, %329 : vector<8x32xf32>
    %332 = math.exp %331 : vector<8x32xf32>
    %333 = math.log1p %332 : vector<8x32xf32>
    %334 = arith.addf %323, %333 : vector<8x32xf32>
    %335 = arith.select %326, %328, %334 : vector<8x32xi1>, vector<8x32xf32>
    %cst_87 = arith.constant 9.99999997E-7 : f32
    %336 = vector.broadcast %cst_87 : f32 to vector<8x32xf32>
    %337 = arith.maximumf %335, %336 : vector<8x32xf32>
    %338 = arith.index_cast %c5_i32 : i32 to index
    %c0_88 = arith.constant 0 : index
    %c0_89 = arith.constant 0 : index
    %339 = vector.load %arg3[%338, %c0_88, %c0_89] : memref<8x8x32xbf16, #tpu.memory_space<vmem>>, vector<1x8x32xbf16>
    %340 = vector.shape_cast %339 : vector<1x8x32xbf16> to vector<8x32xbf16>
    %341 = arith.extf %340 : vector<8x32xbf16> to vector<8x32xf32>
    %342 = arith.mulf %341, %337 : vector<8x32xf32>
    %343 = arith.addf %320, %342 : vector<8x32xf32>
    %344 = tpu.concatenate %314, %343, %320, %337 in 1 : vector<8x32xf32>, vector<8x32xf32>, vector<8x32xf32>, vector<8x32xf32> -> vector<8x128xf32>
    %345 = arith.index_cast %c5_i32 : i32 to index
    %c0_90 = arith.constant 0 : index
    %c0_91 = arith.constant 0 : index
    %346 = vector.load %arg6[%345, %c0_90, %c0_91] : memref<8x8x128xf32, #tpu.memory_space<vmem>>, vector<1x8x128xf32>
    %347 = vector.shape_cast %346 : vector<1x8x128xf32> to vector<8x128xf32>
    %348 = vector.shape_cast %344 : vector<8x128xf32> to vector<1x8x128xf32>
    tpu.vector_store %arg6[%345, %c0_90, %c0_91], %348 {strides = array<i32>} : memref<8x8x128xf32, #tpu.memory_space<vmem>>, vector<1x8x128xf32>,
    %c6_i32 = arith.constant 6 : i32
    %349 = arith.index_cast %c6_i32 : i32 to index
    %c0_92 = arith.constant 0 : index
    %c0_93 = arith.constant 0 : index
    %350 = vector.load %arg2[%349, %c0_92, %c0_93] : memref<8x8x128xbf16, #tpu.memory_space<vmem>>, vector<1x8x128xbf16>
    %351 = vector.shape_cast %350 : vector<1x8x128xbf16> to vector<8x128xbf16>
    %352 = arith.extf %351 : vector<8x128xbf16> to vector<8x128xf32>
    %353 = arith.truncf %314 : vector<8x32xf32> to vector<8x32xbf16>
    %cst_94 = arith.constant dense<0.000000e+00> : vector<8x128xf32>
    %354 = tpu.matmul %353, %3, %cst_94 {dimension_numbers = #tpu.dot_dimension_numbers<[1], [0], [0], [1], [0, 0, 1, 1], [], []>} : vector<8x32xbf16>, vector<32x128xbf16>, vector<8x128xf32> -> vector<8x128xf32>
    %355 = arith.addf %352, %354 : vector<8x128xf32>
    %356 = vector.extract_strided_slice %355 {offsets = [0, 0], sizes = [8, 96], strides = [1, 1]} : vector<8x128xf32> to vector<8x96xf32>
    %357 = arith.negf %356 : vector<8x96xf32>
    %358 = math.exp %357 : vector<8x96xf32>
    %cst_95 = arith.constant 1.000000e+00 : f32
    %359 = vector.broadcast %cst_95 : f32 to vector<8x96xf32>
    %360 = arith.addf %359, %358 : vector<8x96xf32>
    %361 = arith.divf %359, %360 : vector<8x96xf32>
    %362 = vector.extract_strided_slice %361 {offsets = [0, 0], sizes = [8, 32], strides = [1, 1]} : vector<8x96xf32> to vector<8x32xf32>
    %363 = vector.extract_strided_slice %361 {offsets = [0, 32], sizes = [8, 32], strides = [1, 1]} : vector<8x96xf32> to vector<8x32xf32>
    %364 = vector.extract_strided_slice %361 {offsets = [0, 64], sizes = [8, 32], strides = [1, 1]} : vector<8x96xf32> to vector<8x32xf32>
    %365 = vector.extract_strided_slice %355 {offsets = [0, 96], sizes = [8, 32], strides = [1, 1]} : vector<8x128xf32> to vector<8x32xf32>
    %366 = math.tanh %365 : vector<8x32xf32>
    %367 = arith.mulf %363, %343 : vector<8x32xf32>
    %368 = arith.mulf %362, %366 : vector<8x32xf32>
    %369 = arith.addf %367, %368 : vector<8x32xf32>
    %370 = math.tanh %343 : vector<8x32xf32>
    %371 = arith.mulf %364, %370 : vector<8x32xf32>
    %cst_96 = arith.constant dense<0.000000e+00> : vector<8x128xf32>
    %372 = tpu.matmul %369, %4, %cst_96 {dimension_numbers = #tpu.dot_dimension_numbers<[1], [0], [0], [1], [0, 0, 1, 1], [], []>} : vector<8x32xf32>, vector<32x128xf32>, vector<8x128xf32> -> vector<8x128xf32>
    %373 = vector.extract_strided_slice %372 {offsets = [0, 0], sizes = [8, 32], strides = [1, 1]} : vector<8x128xf32> to vector<8x32xf32>
    %cst_97 = arith.constant 9.99999997E-7 : f32
    %cst_98 = arith.constant 1.000000e+06 : f32
    %374 = vector.broadcast %cst_97 : f32 to vector<8x32xf32>
    %375 = arith.maximumf %374, %373 : vector<8x32xf32>
    %376 = vector.broadcast %cst_98 : f32 to vector<8x32xf32>
    %377 = arith.minimumf %376, %375 : vector<8x32xf32>
    %378 = vector.extract_strided_slice %372 {offsets = [0, 32], sizes = [8, 32], strides = [1, 1]} : vector<8x128xf32> to vector<8x32xf32>
    %cst_99 = arith.constant 0.000000e+00 : f32
    %379 = vector.broadcast %cst_99 : f32 to vector<8x32xf32>
    %380 = arith.maximumf %378, %379 : vector<8x32xf32>
    %381 = vector.broadcast %cst_99 : f32 to vector<8x32xf32>
    %382 = arith.subf %378, %381 : vector<8x32xf32>
    %383 = arith.cmpf one, %382, %382 : vector<8x32xf32>
    %384 = vector.broadcast %cst_99 : f32 to vector<8x32xf32>
    %385 = arith.addf %378, %384 : vector<8x32xf32>
    %386 = math.absf %382 : vector<8x32xf32>
    %cst_100 = arith.constant 0.000000e+00 : f32
    %387 = vector.broadcast %cst_100 : f32 to vector<8x32xf32>
    %388 = arith.subf %387, %386 : vector<8x32xf32>
    %389 = math.exp %388 : vector<8x32xf32>
    %390 = math.log1p %389 : vector<8x32xf32>
    %391 = arith.addf %380, %390 : vector<8x32xf32>
    %392 = arith.select %383, %385, %391 : vector<8x32xi1>, vector<8x32xf32>
    %cst_101 = arith.constant 9.99999997E-7 : f32
    %393 = vector.broadcast %cst_101 : f32 to vector<8x32xf32>
    %394 = arith.maximumf %392, %393 : vector<8x32xf32>
    %395 = arith.index_cast %c6_i32 : i32 to index
    %c0_102 = arith.constant 0 : index
    %c0_103 = arith.constant 0 : index
    %396 = vector.load %arg3[%395, %c0_102, %c0_103] : memref<8x8x32xbf16, #tpu.memory_space<vmem>>, vector<1x8x32xbf16>
    %397 = vector.shape_cast %396 : vector<1x8x32xbf16> to vector<8x32xbf16>
    %398 = arith.extf %397 : vector<8x32xbf16> to vector<8x32xf32>
    %399 = arith.mulf %398, %394 : vector<8x32xf32>
    %400 = arith.addf %377, %399 : vector<8x32xf32>
    %401 = tpu.concatenate %371, %400, %377, %394 in 1 : vector<8x32xf32>, vector<8x32xf32>, vector<8x32xf32>, vector<8x32xf32> -> vector<8x128xf32>
    %402 = arith.index_cast %c6_i32 : i32 to index
    %c0_104 = arith.constant 0 : index
    %c0_105 = arith.constant 0 : index
    %403 = vector.load %arg6[%402, %c0_104, %c0_105] : memref<8x8x128xf32, #tpu.memory_space<vmem>>, vector<1x8x128xf32>
    %404 = vector.shape_cast %403 : vector<1x8x128xf32> to vector<8x128xf32>
    %405 = vector.shape_cast %401 : vector<8x128xf32> to vector<1x8x128xf32>
    tpu.vector_store %arg6[%402, %c0_104, %c0_105], %405 {strides = array<i32>} : memref<8x8x128xf32, #tpu.memory_space<vmem>>, vector<1x8x128xf32>,
    %c7_i32 = arith.constant 7 : i32
    %406 = arith.index_cast %c7_i32 : i32 to index
    %c0_106 = arith.constant 0 : index
    %c0_107 = arith.constant 0 : index
    %407 = vector.load %arg2[%406, %c0_106, %c0_107] : memref<8x8x128xbf16, #tpu.memory_space<vmem>>, vector<1x8x128xbf16>
    %408 = vector.shape_cast %407 : vector<1x8x128xbf16> to vector<8x128xbf16>
    %409 = arith.extf %408 : vector<8x128xbf16> to vector<8x128xf32>
    %410 = arith.truncf %371 : vector<8x32xf32> to vector<8x32xbf16>
    %cst_108 = arith.constant dense<0.000000e+00> : vector<8x128xf32>
    %411 = tpu.matmul %410, %3, %cst_108 {dimension_numbers = #tpu.dot_dimension_numbers<[1], [0], [0], [1], [0, 0, 1, 1], [], []>} : vector<8x32xbf16>, vector<32x128xbf16>, vector<8x128xf32> -> vector<8x128xf32>
    %412 = arith.addf %409, %411 : vector<8x128xf32>
    %413 = vector.extract_strided_slice %412 {offsets = [0, 0], sizes = [8, 96], strides = [1, 1]} : vector<8x128xf32> to vector<8x96xf32>
    %414 = arith.negf %413 : vector<8x96xf32>
    %415 = math.exp %414 : vector<8x96xf32>
    %cst_109 = arith.constant 1.000000e+00 : f32
    %416 = vector.broadcast %cst_109 : f32 to vector<8x96xf32>
    %417 = arith.addf %416, %415 : vector<8x96xf32>
    %418 = arith.divf %416, %417 : vector<8x96xf32>
    %419 = vector.extract_strided_slice %418 {offsets = [0, 0], sizes = [8, 32], strides = [1, 1]} : vector<8x96xf32> to vector<8x32xf32>
    %420 = vector.extract_strided_slice %418 {offsets = [0, 32], sizes = [8, 32], strides = [1, 1]} : vector<8x96xf32> to vector<8x32xf32>
    %421 = vector.extract_strided_slice %418 {offsets = [0, 64], sizes = [8, 32], strides = [1, 1]} : vector<8x96xf32> to vector<8x32xf32>
    %422 = vector.extract_strided_slice %412 {offsets = [0, 96], sizes = [8, 32], strides = [1, 1]} : vector<8x128xf32> to vector<8x32xf32>
    %423 = math.tanh %422 : vector<8x32xf32>
    %424 = arith.mulf %420, %400 : vector<8x32xf32>
    %425 = arith.mulf %419, %423 : vector<8x32xf32>
    %426 = arith.addf %424, %425 : vector<8x32xf32>
    %427 = math.tanh %400 : vector<8x32xf32>
    %428 = arith.mulf %421, %427 : vector<8x32xf32>
    %cst_110 = arith.constant dense<0.000000e+00> : vector<8x128xf32>
    %429 = tpu.matmul %426, %4, %cst_110 {dimension_numbers = #tpu.dot_dimension_numbers<[1], [0], [0], [1], [0, 0, 1, 1], [], []>} : vector<8x32xf32>, vector<32x128xf32>, vector<8x128xf32> -> vector<8x128xf32>
    %430 = vector.extract_strided_slice %429 {offsets = [0, 0], sizes = [8, 32], strides = [1, 1]} : vector<8x128xf32> to vector<8x32xf32>
    %cst_111 = arith.constant 9.99999997E-7 : f32
    %cst_112 = arith.constant 1.000000e+06 : f32
    %431 = vector.broadcast %cst_111 : f32 to vector<8x32xf32>
    %432 = arith.maximumf %431, %430 : vector<8x32xf32>
    %433 = vector.broadcast %cst_112 : f32 to vector<8x32xf32>
    %434 = arith.minimumf %433, %432 : vector<8x32xf32>
    %435 = vector.extract_strided_slice %429 {offsets = [0, 32], sizes = [8, 32], strides = [1, 1]} : vector<8x128xf32> to vector<8x32xf32>
    %cst_113 = arith.constant 0.000000e+00 : f32
    %436 = vector.broadcast %cst_113 : f32 to vector<8x32xf32>
    %437 = arith.maximumf %435, %436 : vector<8x32xf32>
    %438 = vector.broadcast %cst_113 : f32 to vector<8x32xf32>
    %439 = arith.subf %435, %438 : vector<8x32xf32>
    %440 = arith.cmpf one, %439, %439 : vector<8x32xf32>
    %441 = vector.broadcast %cst_113 : f32 to vector<8x32xf32>
    %442 = arith.addf %435, %441 : vector<8x32xf32>
    %443 = math.absf %439 : vector<8x32xf32>
    %cst_114 = arith.constant 0.000000e+00 : f32
    %444 = vector.broadcast %cst_114 : f32 to vector<8x32xf32>
    %445 = arith.subf %444, %443 : vector<8x32xf32>
    %446 = math.exp %445 : vector<8x32xf32>
    %447 = math.log1p %446 : vector<8x32xf32>
    %448 = arith.addf %437, %447 : vector<8x32xf32>
    %449 = arith.select %440, %442, %448 : vector<8x32xi1>, vector<8x32xf32>
    %cst_115 = arith.constant 9.99999997E-7 : f32
    %450 = vector.broadcast %cst_115 : f32 to vector<8x32xf32>
    %451 = arith.maximumf %449, %450 : vector<8x32xf32>
    %452 = arith.index_cast %c7_i32 : i32 to index
    %c0_116 = arith.constant 0 : index
    %c0_117 = arith.constant 0 : index
    %453 = vector.load %arg3[%452, %c0_116, %c0_117] : memref<8x8x32xbf16, #tpu.memory_space<vmem>>, vector<1x8x32xbf16>
    %454 = vector.shape_cast %453 : vector<1x8x32xbf16> to vector<8x32xbf16>
    %455 = arith.extf %454 : vector<8x32xbf16> to vector<8x32xf32>
    %456 = arith.mulf %455, %451 : vector<8x32xf32>
    %457 = arith.addf %434, %456 : vector<8x32xf32>
    %458 = tpu.concatenate %428, %457, %434, %451 in 1 : vector<8x32xf32>, vector<8x32xf32>, vector<8x32xf32>, vector<8x32xf32> -> vector<8x128xf32>
    %459 = arith.index_cast %c7_i32 : i32 to index
    %c0_118 = arith.constant 0 : index
    %c0_119 = arith.constant 0 : index
    %460 = vector.load %arg6[%459, %c0_118, %c0_119] : memref<8x8x128xf32, #tpu.memory_space<vmem>>, vector<1x8x128xf32>
    %461 = vector.shape_cast %460 : vector<1x8x128xf32> to vector<8x128xf32>
    %462 = vector.shape_cast %458 : vector<8x128xf32> to vector<1x8x128xf32>
    tpu.vector_store %arg6[%459, %c0_118, %c0_119], %462 {strides = array<i32>} : memref<8x8x128xf32, #tpu.memory_space<vmem>>, vector<1x8x128xf32>,
    %c8_i32 = arith.constant 8 : i32
    %c0_120 = arith.constant 0 : index
    %c0_121 = arith.constant 0 : index
    %463 = vector.load %arg7[%c0_120, %c0_121] : memref<8x32xf32, #tpu.memory_space<vmem>>, vector<8x32xf32>
    tpu.vector_store %arg7[%c0_120, %c0_121], %428 {strides = array<i32>} : memref<8x32xf32, #tpu.memory_space<vmem>>, vector<8x32xf32>,
    %c0_122 = arith.constant 0 : index
    %c0_123 = arith.constant 0 : index
    %464 = vector.load %arg8[%c0_122, %c0_123] : memref<8x32xf32, #tpu.memory_space<vmem>>, vector<8x32xf32>
    tpu.vector_store %arg8[%c0_122, %c0_123], %457 {strides = array<i32>} : memref<8x32xf32, #tpu.memory_space<vmem>>, vector<8x32xf32>,
    return
  }
  func.func @transform_0(%arg0: i32, %arg1: i32) -> (i32, i32, i32) {
    %c0_i32 = arith.constant 0 : i32
    %c0_i32_0 = arith.constant 0 : i32
    return %arg1, %arg0, %c0_i32 : i32, i32, i32
  }
  func.func @transform_1(%arg0: i32, %arg1: i32) -> (i32, i32, i32) {
    %c0_i32 = arith.constant 0 : i32
    %c0_i32_0 = arith.constant 0 : i32
    return %arg1, %arg0, %c0_i32 : i32, i32, i32
  }
  func.func @transform_2(%arg0: i32, %arg1: i32) -> (i32, i32) {
    %c0_i32 = arith.constant 0 : i32
    %c0_i32_0 = arith.constant 0 : i32
    %c0_i32_1 = arith.constant 0 : i32
    return %c0_i32, %c0_i32_0 : i32, i32
  }
  func.func @transform_3(%arg0: i32, %arg1: i32) -> (i32, i32) {
    %c0_i32 = arith.constant 0 : i32
    %c0_i32_0 = arith.constant 0 : i32
    %c0_i32_1 = arith.constant 0 : i32
    return %c0_i32, %c0_i32_0 : i32, i32
  }
  func.func @transform_4(%arg0: i32, %arg1: i32) -> (i32, i32, i32) {
    %c0_i32 = arith.constant 0 : i32
    %c0_i32_0 = arith.constant 0 : i32
    return %arg1, %arg0, %c0_i32 : i32, i32, i32
  }
}

module attributes {stable_mosaic.version = 11 : i64} {
  func.func @_glstm_kernel(%arg0: i32, %arg1: i32, %arg2: memref<8x8x128xbf16, #tpu.memory_space<vmem>>, %arg3: memref<8x8x32xbf16, #tpu.memory_space<vmem>>, %arg4: memref<32x128xbf16, #tpu.memory_space<vmem>>, %arg5: memref<32x128xf32, #tpu.memory_space<vmem>>, %arg6: memref<8x8x128xf32, #tpu.memory_space<vmem>>, %arg7: memref<8x32xf32, #tpu.memory_space<vmem>>, %arg8: memref<8x32xf32, #tpu.memory_space<vmem>>) attributes {dimension_semantics = [#tpu.dimension_semantics<parallel>, #tpu.dimension_semantics<arbitrary>], iteration_bounds = array<i64: 1, 1>, scalar_prefetch = 0 : i64, scratch_operands = 2 : i64, tpu.core_type = #tpu.core_type<tc>, window_params = [{transform_indices = @transform_0, window_bounds = array<i64: 8, 8, 128>}, {transform_indices = @transform_1, window_bounds = array<i64: 8, 8, 32>}, {pipeline_mode = #tpu.pipeline_mode<synchronous>, transform_indices = @transform_2, window_bounds = array<i64: 32, 128>}, {pipeline_mode = #tpu.pipeline_mode<synchronous>, transform_indices = @transform_3, window_bounds = array<i64: 32, 128>}, {transform_indices = @transform_4, window_bounds = array<i64: 8, 8, 128>}]} {
    %c0_i32 = arith.constant 0 : i32
    %0 = arith.cmpi eq, %arg1, %c0_i32 : i32
    %1 = arith.extui %0 : i1 to i32
    %c0_i32_0 = arith.constant 0 : i32
    %2 = arith.cmpi ne, %1, %c0_i32_0 : i32
    scf.if %2 {
      %cst_124 = arith.constant 0.000000e+00 : f32
      %465 = vector.broadcast %cst_124 : f32 to vector<8x32xf32>
      %c0_125 = arith.constant 0 : index
      %c0_126 = arith.constant 0 : index
      %466 = vector.load %arg7[%c0_125, %c0_126] : memref<8x32xf32, #tpu.memory_space<vmem>>, vector<8x32xf32>
      tpu.vector_store %arg7[%c0_125, %c0_126], %465 {strides = array<i32>} : memref<8x32xf32, #tpu.memory_space<vmem>>, vector<8x32xf32>,
      %cst_127 = arith.constant 0.000000e+00 : f32
      %467 = vector.broadcast %cst_127 : f32 to vector<8x32xf32>
      %c0_128 = arith.constant 0 : index
      %c0_129 = arith.constant 0 : index
      %468 = vector.load %arg8[%c0_128, %c0_129] : memref<8x32xf32, #tpu.memory_space<vmem>>, vector<8x32xf32>
      tpu.vector_store %arg8[%c0_128, %c0_129], %467 {strides = array<i32>} : memref<8x32xf32, #tpu.memory_space<vmem>>, vector<8x32xf32>,
    } else {
    }
    %c0 = arith.constant 0 : index
    %c0_1 = arith.constant 0 : index
    %3 = vector.load %arg4[%c0, %c0_1] : memref<32x128xbf16, #tpu.memory_space<vmem>>, vector<32x128xbf16>
    %c0_2 = arith.constant 0 : index
    %c0_3 = arith.constant 0 : index
    %4 = vector.load %arg5[%c0_2, %c0_3] : memref<32x128xf32, #tpu.memory_space<vmem>>, vector<32x128xf32>
    %c0_4 = arith.constant 0 : index
    %c0_5 = arith.constant 0 : index
    %5 = vector.load %arg7[%c0_4, %c0_5] : memref<8x32xf32, #tpu.memory_space<vmem>>, vector<8x32xf32>
    %c0_6 = arith.constant 0 : index
    %c0_7 = arith.constant 0 : index
    %6 = vector.load %arg8[%c0_6, %c0_7] : memref<8x32xf32, #tpu.memory_space<vmem>>, vector<8x32xf32>
    %c0_i32_8 = arith.constant 0 : i32
    %7 = arith.index_cast %c0_i32_8 : i32 to index
    %c0_9 = arith.constant 0 : index
    %c0_10 = arith.constant 0 : index
    %8 = vector.load %arg2[%7, %c0_9, %c0_10] : memref<8x8x128xbf16, #tpu.memory_space<vmem>>, vector<1x8x128xbf16>
    %9 = vector.shape_cast %8 : vector<1x8x128xbf16> to vector<8x128xbf16>
    %10 = arith.extf %9 : vector<8x128xbf16> to vector<8x128xf32>
    %11 = arith.truncf %5 : vector<8x32xf32> to vector<8x32xbf16>
    %cst = arith.constant dense<0.000000e+00> : vector<8x128xf32>
    %12 = tpu.matmul %11, %3, %cst {dimension_numbers = #tpu.dot_dimension_numbers<[1], [0], [0], [1], [0, 0, 1, 1], [], []>} : vector<8x32xbf16>, vector<32x128xbf16>, vector<8x128xf32> -> vector<8x128xf32>
    %13 = arith.addf %10, %12 : vector<8x128xf32>
    %14 = vector.extract_strided_slice %13 {offsets = [0, 0], sizes = [8, 96], strides = [1, 1]} : vector<8x128xf32> to vector<8x96xf32>
    %15 = arith.negf %14 : vector<8x96xf32>
    %16 = math.exp %15 : vector<8x96xf32>
    %cst_11 = arith.constant 1.000000e+00 : f32
    %17 = vector.broadcast %cst_11 : f32 to vector<8x96xf32>
    %18 = arith.addf %17, %16 : vector<8x96xf32>
    %19 = arith.divf %17, %18 : vector<8x96xf32>
    %20 = vector.extract_strided_slice %19 {offsets = [0, 0], sizes = [8, 32], strides = [1, 1]} : vector<8x96xf32> to vector<8x32xf32>
    %21 = vector.extract_strided_slice %19 {offsets = [0, 32], sizes = [8, 32], strides = [1, 1]} : vector<8x96xf32> to vector<8x32xf32>
    %22 = vector.extract_strided_slice %19 {offsets = [0, 64], sizes = [8, 32], strides = [1, 1]} : vector<8x96xf32> to vector<8x32xf32>
    %23 = vector.extract_strided_slice %13 {offsets = [0, 96], sizes = [8, 32], strides = [1, 1]} : vector<8x128xf32> to vector<8x32xf32>
    %24 = math.tanh %23 : vector<8x32xf32>
    %25 = arith.mulf %21, %6 : vector<8x32xf32>
    %26 = arith.mulf %20, %24 : vector<8x32xf32>
    %27 = arith.addf %25, %26 : vector<8x32xf32>
    %28 = math.tanh %6 : vector<8x32xf32>
    %29 = arith.mulf %22, %28 : vector<8x32xf32>
    %cst_12 = arith.constant dense<0.000000e+00> : vector<8x128xf32>
    %30 = tpu.matmul %27, %4, %cst_12 {dimension_numbers = #tpu.dot_dimension_numbers<[1], [0], [0], [1], [0, 0, 1, 1], [], []>} : vector<8x32xf32>, vector<32x128xf32>, vector<8x128xf32> -> vector<8x128xf32>
    %31 = vector.extract_strided_slice %30 {offsets = [0, 0], sizes = [8, 32], strides = [1, 1]} : vector<8x128xf32> to vector<8x32xf32>
    %cst_13 = arith.constant 9.99999997E-7 : f32
    %cst_14 = arith.constant 1.000000e+06 : f32
    %32 = vector.broadcast %cst_13 : f32 to vector<8x32xf32>
    %33 = arith.maximumf %32, %31 : vector<8x32xf32>
    %34 = vector.broadcast %cst_14 : f32 to vector<8x32xf32>
    %35 = arith.minimumf %34, %33 : vector<8x32xf32>
    %36 = vector.extract_strided_slice %30 {offsets = [0, 32], sizes = [8, 32], strides = [1, 1]} : vector<8x128xf32> to vector<8x32xf32>
    %cst_15 = arith.constant 0.000000e+00 : f32
    %37 = vector.broadcast %cst_15 : f32 to vector<8x32xf32>
    %38 = arith.maximumf %36, %37 : vector<8x32xf32>
    %39 = vector.broadcast %cst_15 : f32 to vector<8x32xf32>
    %40 = arith.subf %36, %39 : vector<8x32xf32>
    %41 = arith.cmpf one, %40, %40 : vector<8x32xf32>
    %42 = vector.broadcast %cst_15 : f32 to vector<8x32xf32>
    %43 = arith.addf %36, %42 : vector<8x32xf32>
    %44 = math.absf %40 : vector<8x32xf32>
    %cst_16 = arith.constant 0.000000e+00 : f32
    %45 = vector.broadcast %cst_16 : f32 to vector<8x32xf32>
    %46 = arith.subf %45, %44 : vector<8x32xf32>
    %47 = math.exp %46 : vector<8x32xf32>
    %48 = math.log1p %47 : vector<8x32xf32>
    %49 = arith.addf %38, %48 : vector<8x32xf32>
    %50 = arith.select %41, %43, %49 : vector<8x32xi1>, vector<8x32xf32>
    %cst_17 = arith.constant 9.99999997E-7 : f32
    %51 = vector.broadcast %cst_17 : f32 to vector<8x32xf32>
    %52 = arith.maximumf %50, %51 : vector<8x32xf32>
    %53 = arith.index_cast %c0_i32_8 : i32 to index
    %c0_18 = arith.constant 0 : index
    %c0_19 = arith.constant 0 : index
    %54 = vector.load %arg3[%53, %c0_18, %c0_19] : memref<8x8x32xbf16, #tpu.memory_space<vmem>>, vector<1x8x32xbf16>
    %55 = vector.shape_cast %54 : vector<1x8x32xbf16> to vector<8x32xbf16>
    %56 = arith.extf %55 : vector<8x32xbf16> to vector<8x32xf32>
    %57 = arith.mulf %56, %52 : vector<8x32xf32>
    %58 = arith.addf %35, %57 : vector<8x32xf32>
    %59 = tpu.concatenate %29, %58, %35, %52 in 1 : vector<8x32xf32>, vector<8x32xf32>, vector<8x32xf32>, vector<8x32xf32> -> vector<8x128xf32>
    %60 = arith.index_cast %c0_i32_8 : i32 to index
    %c0_20 = arith.constant 0 : index
    %c0_21 = arith.constant 0 : index
    %61 = vector.load %arg6[%60, %c0_20, %c0_21] : memref<8x8x128xf32, #tpu.memory_space<vmem>>, vector<1x8x128xf32>
    %62 = vector.shape_cast %61 : vector<1x8x128xf32> to vector<8x128xf32>
    %63 = vector.shape_cast %59 : vector<8x128xf32> to vector<1x8x128xf32>
    tpu.vector_store %arg6[%60, %c0_20, %c0_21], %63 {strides = array<i32>} : memref<8x8x128xf32, #tpu.memory_space<vmem>>, vector<1x8x128xf32>,
    %c1_i32 = arith.constant 1 : i32
    %64 = arith.index_cast %c1_i32 : i32 to index
    %c0_22 = arith.constant 0 : index
    %c0_23 = arith.constant 0 : index
    %65 = vector.load %arg2[%64, %c0_22, %c0_23] : memref<8x8x128xbf16, #tpu.memory_space<vmem>>, vector<1x8x128xbf16>
    %66 = vector.shape_cast %65 : vector<1x8x128xbf16> to vector<8x128xbf16>
    %67 = arith.extf %66 : vector<8x128xbf16> to vector<8x128xf32>
    %68 = arith.truncf %29 : vector<8x32xf32> to vector<8x32xbf16>
    %cst_24 = arith.constant dense<0.000000e+00> : vector<8x128xf32>
    %69 = tpu.matmul %68, %3, %cst_24 {dimension_numbers = #tpu.dot_dimension_numbers<[1], [0], [0], [1], [0, 0, 1, 1], [], []>} : vector<8x32xbf16>, vector<32x128xbf16>, vector<8x128xf32> -> vector<8x128xf32>
    %70 = arith.addf %67, %69 : vector<8x128xf32>
    %71 = vector.extract_strided_slice %70 {offsets = [0, 0], sizes = [8, 96], strides = [1, 1]} : vector<8x128xf32> to vector<8x96xf32>
    %72 = arith.negf %71 : vector<8x96xf32>
    %73 = math.exp %72 : vector<8x96xf32>
    %cst_25 = arith.constant 1.000000e+00 : f32
    %74 = vector.broadcast %cst_25 : f32 to vector<8x96xf32>
    %75 = arith.addf %74, %73 : vector<8x96xf32>
    %76 = arith.divf %74, %75 : vector<8x96xf32>
    %77 = vector.extract_strided_slice %76 {offsets = [0, 0], sizes = [8, 32], strides = [1, 1]} : vector<8x96xf32> to vector<8x32xf32>
    %78 = vector.extract_strided_slice %76 {offsets = [0, 32], sizes = [8, 32], strides = [1, 1]} : vector<8x96xf32> to vector<8x32xf32>
    %79 = vector.extract_strided_slice %76 {offsets = [0, 64], sizes = [8, 32], strides = [1, 1]} : vector<8x96xf32> to vector<8x32xf32>
    %80 = vector.extract_strided_slice %70 {offsets = [0, 96], sizes = [8, 32], strides = [1, 1]} : vector<8x128xf32> to vector<8x32xf32>
    %81 = math.tanh %80 : vector<8x32xf32>
    %82 = arith.mulf %78, %58 : vector<8x32xf32>
    %83 = arith.mulf %77, %81 : vector<8x32xf32>
    %84 = arith.addf %82, %83 : vector<8x32xf32>
    %85 = math.tanh %58 : vector<8x32xf32>
    %86 = arith.mulf %79, %85 : vector<8x32xf32>
    %cst_26 = arith.constant dense<0.000000e+00> : vector<8x128xf32>
    %87 = tpu.matmul %84, %4, %cst_26 {dimension_numbers = #tpu.dot_dimension_numbers<[1], [0], [0], [1], [0, 0, 1, 1], [], []>} : vector<8x32xf32>, vector<32x128xf32>, vector<8x128xf32> -> vector<8x128xf32>
    %88 = vector.extract_strided_slice %87 {offsets = [0, 0], sizes = [8, 32], strides = [1, 1]} : vector<8x128xf32> to vector<8x32xf32>
    %cst_27 = arith.constant 9.99999997E-7 : f32
    %cst_28 = arith.constant 1.000000e+06 : f32
    %89 = vector.broadcast %cst_27 : f32 to vector<8x32xf32>
    %90 = arith.maximumf %89, %88 : vector<8x32xf32>
    %91 = vector.broadcast %cst_28 : f32 to vector<8x32xf32>
    %92 = arith.minimumf %91, %90 : vector<8x32xf32>
    %93 = vector.extract_strided_slice %87 {offsets = [0, 32], sizes = [8, 32], strides = [1, 1]} : vector<8x128xf32> to vector<8x32xf32>
    %cst_29 = arith.constant 0.000000e+00 : f32
    %94 = vector.broadcast %cst_29 : f32 to vector<8x32xf32>
    %95 = arith.maximumf %93, %94 : vector<8x32xf32>
    %96 = vector.broadcast %cst_29 : f32 to vector<8x32xf32>
    %97 = arith.subf %93, %96 : vector<8x32xf32>
    %98 = arith.cmpf one, %97, %97 : vector<8x32xf32>
    %99 = vector.broadcast %cst_29 : f32 to vector<8x32xf32>
    %100 = arith.addf %93, %99 : vector<8x32xf32>
    %101 = math.absf %97 : vector<8x32xf32>
    %cst_30 = arith.constant 0.000000e+00 : f32
    %102 = vector.broadcast %cst_30 : f32 to vector<8x32xf32>
    %103 = arith.subf %102, %101 : vector<8x32xf32>
    %104 = math.exp %103 : vector<8x32xf32>
    %105 = math.log1p %104 : vector<8x32xf32>
    %106 = arith.addf %95, %105 : vector<8x32xf32>
    %107 = arith.select %98, %100, %106 : vector<8x32xi1>, vector<8x32xf32>
    %cst_31 = arith.constant 9.99999997E-7 : f32
    %108 = vector.broadcast %cst_31 : f32 to vector<8x32xf32>
    %109 = arith.maximumf %107, %108 : vector<8x32xf32>
    %110 = arith.index_cast %c1_i32 : i32 to index
    %c0_32 = arith.constant 0 : index
    %c0_33 = arith.constant 0 : index
    %111 = vector.load %arg3[%110, %c0_32, %c0_33] : memref<8x8x32xbf16, #tpu.memory_space<vmem>>, vector<1x8x32xbf16>
    %112 = vector.shape_cast %111 : vector<1x8x32xbf16> to vector<8x32xbf16>
    %113 = arith.extf %112 : vector<8x32xbf16> to vector<8x32xf32>
    %114 = arith.mulf %113, %109 : vector<8x32xf32>
    %115 = arith.addf %92, %114 : vector<8x32xf32>
    %116 = tpu.concatenate %86, %115, %92, %109 in 1 : vector<8x32xf32>, vector<8x32xf32>, vector<8x32xf32>, vector<8x32xf32> -> vector<8x128xf32>
    %117 = arith.index_cast %c1_i32 : i32 to index
    %c0_34 = arith.constant 0 : index
    %c0_35 = arith.constant 0 : index
    %118 = vector.load %arg6[%117, %c0_34, %c0_35] : memref<8x8x128xf32, #tpu.memory_space<vmem>>, vector<1x8x128xf32>
    %119 = vector.shape_cast %118 : vector<1x8x128xf32> to vector<8x128xf32>
    %120 = vector.shape_cast %116 : vector<8x128xf32> to vector<1x8x128xf32>
    tpu.vector_store %arg6[%117, %c0_34, %c0_35], %120 {strides = array<i32>} : memref<8x8x128xf32, #tpu.memory_space<vmem>>, vector<1x8x128xf32>,
    %c2_i32 = arith.constant 2 : i32
    %121 = arith.index_cast %c2_i32 : i32 to index
    %c0_36 = arith.constant 0 : index
    %c0_37 = arith.constant 0 : index
    %122 = vector.load %arg2[%121, %c0_36, %c0_37] : memref<8x8x128xbf16, #tpu.memory_space<vmem>>, vector<1x8x128xbf16>
    %123 = vector.shape_cast %122 : vector<1x8x128xbf16> to vector<8x128xbf16>
    %124 = arith.extf %123 : vector<8x128xbf16> to vector<8x128xf32>
    %125 = arith.truncf %86 : vector<8x32xf32> to vector<8x32xbf16>
    %cst_38 = arith.constant dense<0.000000e+00> : vector<8x128xf32>
    %126 = tpu.matmul %125, %3, %cst_38 {dimension_numbers = #tpu.dot_dimension_numbers<[1], [0], [0], [1], [0, 0, 1, 1], [], []>} : vector<8x32xbf16>, vector<32x128xbf16>, vector<8x128xf32> -> vector<8x128xf32>
    %127 = arith.addf %124, %126 : vector<8x128xf32>
    %128 = vector.extract_strided_slice %127 {offsets = [0, 0], sizes = [8, 96], strides = [1, 1]} : vector<8x128xf32> to vector<8x96xf32>
    %129 = arith.negf %128 : vector<8x96xf32>
    %130 = math.exp %129 : vector<8x96xf32>
    %cst_39 = arith.constant 1.000000e+00 : f32
    %131 = vector.broadcast %cst_39 : f32 to vector<8x96xf32>
    %132 = arith.addf %131, %130 : vector<8x96xf32>
    %133 = arith.divf %131, %132 : vector<8x96xf32>
    %134 = vector.extract_strided_slice %133 {offsets = [0, 0], sizes = [8, 32], strides = [1, 1]} : vector<8x96xf32> to vector<8x32xf32>
    %135 = vector.extract_strided_slice %133 {offsets = [0, 32], sizes = [8, 32], strides = [1, 1]} : vector<8x96xf32> to vector<8x32xf32>
    %136 = vector.extract_strided_slice %133 {offsets = [0, 64], sizes = [8, 32], strides = [1, 1]} : vector<8x96xf32> to vector<8x32xf32>
    %137 = vector.extract_strided_slice %127 {offsets = [0, 96], sizes = [8, 32], strides = [1, 1]} : vector<8x128xf32> to vector<8x32xf32>
    %138 = math.tanh %137 : vector<8x32xf32>
    %139 = arith.mulf %135, %115 : vector<8x32xf32>
    %140 = arith.mulf %134, %138 : vector<8x32xf32>
    %141 = arith.addf %139, %140 : vector<8x32xf32>
    %142 = math.tanh %115 : vector<8x32xf32>
    %143 = arith.mulf %136, %142 : vector<8x32xf32>
    %cst_40 = arith.constant dense<0.000000e+00> : vector<8x128xf32>
    %144 = tpu.matmul %141, %4, %cst_40 {dimension_numbers = #tpu.dot_dimension_numbers<[1], [0], [0], [1], [0, 0, 1, 1], [], []>} : vector<8x32xf32>, vector<32x128xf32>, vector<8x128xf32> -> vector<8x128xf32>
    %145 = vector.extract_strided_slice %144 {offsets = [0, 0], sizes = [8, 32], strides = [1, 1]} : vector<8x128xf32> to vector<8x32xf32>
    %cst_41 = arith.constant 9.99999997E-7 : f32
    %cst_42 = arith.constant 1.000000e+06 : f32
    %146 = vector.broadcast %cst_41 : f32 to vector<8x32xf32>
    %147 = arith.maximumf %146, %145 : vector<8x32xf32>
    %148 = vector.broadcast %cst_42 : f32 to vector<8x32xf32>
    %149 = arith.minimumf %148, %147 : vector<8x32xf32>
    %150 = vector.extract_strided_slice %144 {offsets = [0, 32], sizes = [8, 32], strides = [1, 1]} : vector<8x128xf32> to vector<8x32xf32>
    %cst_43 = arith.constant 0.000000e+00 : f32
    %151 = vector.broadcast %cst_43 : f32 to vector<8x32xf32>
    %152 = arith.maximumf %150, %151 : vector<8x32xf32>
    %153 = vector.broadcast %cst_43 : f32 to vector<8x32xf32>
    %154 = arith.subf %150, %153 : vector<8x32xf32>
    %155 = arith.cmpf one, %154, %154 : vector<8x32xf32>
    %156 = vector.broadcast %cst_43 : f32 to vector<8x32xf32>
    %157 = arith.addf %150, %156 : vector<8x32xf32>
    %158 = math.absf %154 : vector<8x32xf32>
    %cst_44 = arith.constant 0.000000e+00 : f32
    %159 = vector.broadcast %cst_44 : f32 to vector<8x32xf32>
    %160 = arith.subf %159, %158 : vector<8x32xf32>
    %161 = math.exp %160 : vector<8x32xf32>
    %162 = math.log1p %161 : vector<8x32xf32>
    %163 = arith.addf %152, %162 : vector<8x32xf32>
    %164 = arith.select %155, %157, %163 : vector<8x32xi1>, vector<8x32xf32>
    %cst_45 = arith.constant 9.99999997E-7 : f32
    %165 = vector.broadcast %cst_45 : f32 to vector<8x32xf32>
    %166 = arith.maximumf %164, %165 : vector<8x32xf32>
    %167 = arith.index_cast %c2_i32 : i32 to index
    %c0_46 = arith.constant 0 : index
    %c0_47 = arith.constant 0 : index
    %168 = vector.load %arg3[%167, %c0_46, %c0_47] : memref<8x8x32xbf16, #tpu.memory_space<vmem>>, vector<1x8x32xbf16>
    %169 = vector.shape_cast %168 : vector<1x8x32xbf16> to vector<8x32xbf16>
    %170 = arith.extf %169 : vector<8x32xbf16> to vector<8x32xf32>
    %171 = arith.mulf %170, %166 : vector<8x32xf32>
    %172 = arith.addf %149, %171 : vector<8x32xf32>
    %173 = tpu.concatenate %143, %172, %149, %166 in 1 : vector<8x32xf32>, vector<8x32xf32>, vector<8x32xf32>, vector<8x32xf32> -> vector<8x128xf32>
    %174 = arith.index_cast %c2_i32 : i32 to index
    %c0_48 = arith.constant 0 : index
    %c0_49 = arith.constant 0 : index
    %175 = vector.load %arg6[%174, %c0_48, %c0_49] : memref<8x8x128xf32, #tpu.memory_space<vmem>>, vector<1x8x128xf32>
    %176 = vector.shape_cast %175 : vector<1x8x128xf32> to vector<8x128xf32>
    %177 = vector.shape_cast %173 : vector<8x128xf32> to vector<1x8x128xf32>
    tpu.vector_store %arg6[%174, %c0_48, %c0_49], %177 {strides = array<i32>} : memref<8x8x128xf32, #tpu.memory_space<vmem>>, vector<1x8x128xf32>,
    %c3_i32 = arith.constant 3 : i32
    %178 = arith.index_cast %c3_i32 : i32 to index
    %c0_50 = arith.constant 0 : index
    %c0_51 = arith.constant 0 : index
    %179 = vector.load %arg2[%178, %c0_50, %c0_51] : memref<8x8x128xbf16, #tpu.memory_space<vmem>>, vector<1x8x128xbf16>
    %180 = vector.shape_cast %179 : vector<1x8x128xbf16> to vector<8x128xbf16>
    %181 = arith.extf %180 : vector<8x128xbf16> to vector<8x128xf32>
    %182 = arith.truncf %143 : vector<8x32xf32> to vector<8x32xbf16>
    %cst_52 = arith.constant dense<0.000000e+00> : vector<8x128xf32>
    %183 = tpu.matmul %182, %3, %cst_52 {dimension_numbers = #tpu.dot_dimension_numbers<[1], [0], [0], [1], [0, 0, 1, 1], [], []>} : vector<8x32xbf16>, vector<32x128xbf16>, vector<8x128xf32> -> vector<8x128xf32>
    %184 = arith.addf %181, %183 : vector<8x128xf32>
    %185 = vector.extract_strided_slice %184 {offsets = [0, 0], sizes = [8, 96], strides = [1, 1]} : vector<8x128xf32> to vector<8x96xf32>
    %186 = arith.negf %185 : vector<8x96xf32>
    %187 = math.exp %186 : vector<8x96xf32>
    %cst_53 = arith.constant 1.000000e+00 : f32
    %188 = vector.broadcast %cst_53 : f32 to vector<8x96xf32>
    %189 = arith.addf %188, %187 : vector<8x96xf32>
    %190 = arith.divf %188, %189 : vector<8x96xf32>
    %191 = vector.extract_strided_slice %190 {offsets = [0, 0], sizes = [8, 32], strides = [1, 1]} : vector<8x96xf32> to vector<8x32xf32>
    %192 = vector.extract_strided_slice %190 {offsets = [0, 32], sizes = [8, 32], strides = [1, 1]} : vector<8x96xf32> to vector<8x32xf32>
    %193 = vector.extract_strided_slice %190 {offsets = [0, 64], sizes = [8, 32], strides = [1, 1]} : vector<8x96xf32> to vector<8x32xf32>
    %194 = vector.extract_strided_slice %184 {offsets = [0, 96], sizes = [8, 32], strides = [1, 1]} : vector<8x128xf32> to vector<8x32xf32>
    %195 = math.tanh %194 : vector<8x32xf32>
    %196 = arith.mulf %192, %172 : vector<8x32xf32>
    %197 = arith.mulf %191, %195 : vector<8x32xf32>
    %198 = arith.addf %196, %197 : vector<8x32xf32>
    %199 = math.tanh %172 : vector<8x32xf32>
    %200 = arith.mulf %193, %199 : vector<8x32xf32>
    %cst_54 = arith.constant dense<0.000000e+00> : vector<8x128xf32>
    %201 = tpu.matmul %198, %4, %cst_54 {dimension_numbers = #tpu.dot_dimension_numbers<[1], [0], [0], [1], [0, 0, 1, 1], [], []>} : vector<8x32xf32>, vector<32x128xf32>, vector<8x128xf32> -> vector<8x128xf32>
    %202 = vector.extract_strided_slice %201 {offsets = [0, 0], sizes = [8, 32], strides = [1, 1]} : vector<8x128xf32> to vector<8x32xf32>
    %cst_55 = arith.constant 9.99999997E-7 : f32
    %cst_56 = arith.constant 1.000000e+06 : f32
    %203 = vector.broadcast %cst_55 : f32 to vector<8x32xf32>
    %204 = arith.maximumf %203, %202 : vector<8x32xf32>
    %205 = vector.broadcast %cst_56 : f32 to vector<8x32xf32>
    %206 = arith.minimumf %205, %204 : vector<8x32xf32>
    %207 = vector.extract_strided_slice %201 {offsets = [0, 32], sizes = [8, 32], strides = [1, 1]} : vector<8x128xf32> to vector<8x32xf32>
    %cst_57 = arith.constant 0.000000e+00 : f32
    %208 = vector.broadcast %cst_57 : f32 to vector<8x32xf32>
    %209 = arith.maximumf %207, %208 : vector<8x32xf32>
    %210 = vector.broadcast %cst_57 : f32 to vector<8x32xf32>
    %211 = arith.subf %207, %210 : vector<8x32xf32>
    %212 = arith.cmpf one, %211, %211 : vector<8x32xf32>
    %213 = vector.broadcast %cst_57 : f32 to vector<8x32xf32>
    %214 = arith.addf %207, %213 : vector<8x32xf32>
    %215 = math.absf %211 : vector<8x32xf32>
    %cst_58 = arith.constant 0.000000e+00 : f32
    %216 = vector.broadcast %cst_58 : f32 to vector<8x32xf32>
    %217 = arith.subf %216, %215 : vector<8x32xf32>
    %218 = math.exp %217 : vector<8x32xf32>
    %219 = math.log1p %218 : vector<8x32xf32>
    %220 = arith.addf %209, %219 : vector<8x32xf32>
    %221 = arith.select %212, %214, %220 : vector<8x32xi1>, vector<8x32xf32>
    %cst_59 = arith.constant 9.99999997E-7 : f32
    %222 = vector.broadcast %cst_59 : f32 to vector<8x32xf32>
    %223 = arith.maximumf %221, %222 : vector<8x32xf32>
    %224 = arith.index_cast %c3_i32 : i32 to index
    %c0_60 = arith.constant 0 : index
    %c0_61 = arith.constant 0 : index
    %225 = vector.load %arg3[%224, %c0_60, %c0_61] : memref<8x8x32xbf16, #tpu.memory_space<vmem>>, vector<1x8x32xbf16>
    %226 = vector.shape_cast %225 : vector<1x8x32xbf16> to vector<8x32xbf16>
    %227 = arith.extf %226 : vector<8x32xbf16> to vector<8x32xf32>
    %228 = arith.mulf %227, %223 : vector<8x32xf32>
    %229 = arith.addf %206, %228 : vector<8x32xf32>
    %230 = tpu.concatenate %200, %229, %206, %223 in 1 : vector<8x32xf32>, vector<8x32xf32>, vector<8x32xf32>, vector<8x32xf32> -> vector<8x128xf32>
    %231 = arith.index_cast %c3_i32 : i32 to index
    %c0_62 = arith.constant 0 : index
    %c0_63 = arith.constant 0 : index
    %232 = vector.load %arg6[%231, %c0_62, %c0_63] : memref<8x8x128xf32, #tpu.memory_space<vmem>>, vector<1x8x128xf32>
    %233 = vector.shape_cast %232 : vector<1x8x128xf32> to vector<8x128xf32>
    %234 = vector.shape_cast %230 : vector<8x128xf32> to vector<1x8x128xf32>
    tpu.vector_store %arg6[%231, %c0_62, %c0_63], %234 {strides = array<i32>} : memref<8x8x128xf32, #tpu.memory_space<vmem>>, vector<1x8x128xf32>,
    %c4_i32 = arith.constant 4 : i32
    %235 = arith.index_cast %c4_i32 : i32 to index
    %c0_64 = arith.constant 0 : index
    %c0_65 = arith.constant 0 : index
    %236 = vector.load %arg2[%235, %c0_64, %c0_65] : memref<8x8x128xbf16, #tpu.memory_space<vmem>>, vector<1x8x128xbf16>
    %237 = vector.shape_cast %236 : vector<1x8x128xbf16> to vector<8x128xbf16>
    %238 = arith.extf %237 : vector<8x128xbf16> to vector<8x128xf32>
    %239 = arith.truncf %200 : vector<8x32xf32> to vector<8x32xbf16>
    %cst_66 = arith.constant dense<0.000000e+00> : vector<8x128xf32>
    %240 = tpu.matmul %239, %3, %cst_66 {dimension_numbers = #tpu.dot_dimension_numbers<[1], [0], [0], [1], [0, 0, 1, 1], [], []>} : vector<8x32xbf16>, vector<32x128xbf16>, vector<8x128xf32> -> vector<8x128xf32>
    %241 = arith.addf %238, %240 : vector<8x128xf32>
    %242 = vector.extract_strided_slice %241 {offsets = [0, 0], sizes = [8, 96], strides = [1, 1]} : vector<8x128xf32> to vector<8x96xf32>
    %243 = arith.negf %242 : vector<8x96xf32>
    %244 = math.exp %243 : vector<8x96xf32>
    %cst_67 = arith.constant 1.000000e+00 : f32
    %245 = vector.broadcast %cst_67 : f32 to vector<8x96xf32>
    %246 = arith.addf %245, %244 : vector<8x96xf32>
    %247 = arith.divf %245, %246 : vector<8x96xf32>
    %248 = vector.extract_strided_slice %247 {offsets = [0, 0], sizes = [8, 32], strides = [1, 1]} : vector<8x96xf32> to vector<8x32xf32>
    %249 = vector.extract_strided_slice %247 {offsets = [0, 32], sizes = [8, 32], strides = [1, 1]} : vector<8x96xf32> to vector<8x32xf32>
    %250 = vector.extract_strided_slice %247 {offsets = [0, 64], sizes = [8, 32], strides = [1, 1]} : vector<8x96xf32> to vector<8x32xf32>
    %251 = vector.extract_strided_slice %241 {offsets = [0, 96], sizes = [8, 32], strides = [1, 1]} : vector<8x128xf32> to vector<8x32xf32>
    %252 = math.tanh %251 : vector<8x32xf32>
    %253 = arith.mulf %249, %229 : vector<8x32xf32>
    %254 = arith.mulf %248, %252 : vector<8x32xf32>
    %255 = arith.addf %253, %254 : vector<8x32xf32>
    %256 = math.tanh %229 : vector<8x32xf32>
    %257 = arith.mulf %250, %256 : vector<8x32xf32>
    %cst_68 = arith.constant dense<0.000000e+00> : vector<8x128xf32>
    %258 = tpu.matmul %255, %4, %cst_68 {dimension_numbers = #tpu.dot_dimension_numbers<[1], [0], [0], [1], [0, 0, 1, 1], [], []>} : vector<8x32xf32>, vector<32x128xf32>, vector<8x128xf32> -> vector<8x128xf32>
    %259 = vector.extract_strided_slice %258 {offsets = [0, 0], sizes = [8, 32], strides = [1, 1]} : vector<8x128xf32> to vector<8x32xf32>
    %cst_69 = arith.constant 9.99999997E-7 : f32
    %cst_70 = arith.constant 1.000000e+06 : f32
    %260 = vector.broadcast %cst_69 : f32 to vector<8x32xf32>
    %261 = arith.maximumf %260, %259 : vector<8x32xf32>
    %262 = vector.broadcast %cst_70 : f32 to vector<8x32xf32>
    %263 = arith.minimumf %262, %261 : vector<8x32xf32>
    %264 = vector.extract_strided_slice %258 {offsets = [0, 32], sizes = [8, 32], strides = [1, 1]} : vector<8x128xf32> to vector<8x32xf32>
    %cst_71 = arith.constant 0.000000e+00 : f32
    %265 = vector.broadcast %cst_71 : f32 to vector<8x32xf32>
    %266 = arith.maximumf %264, %265 : vector<8x32xf32>
    %267 = vector.broadcast %cst_71 : f32 to vector<8x32xf32>
    %268 = arith.subf %264, %267 : vector<8x32xf32>
    %269 = arith.cmpf one, %268, %268 : vector<8x32xf32>
    %270 = vector.broadcast %cst_71 : f32 to vector<8x32xf32>
    %271 = arith.addf %264, %270 : vector<8x32xf32>
    %272 = math.absf %268 : vector<8x32xf32>
    %cst_72 = arith.constant 0.000000e+00 : f32
    %273 = vector.broadcast %cst_72 : f32 to vector<8x32xf32>
    %274 = arith.subf %273, %272 : vector<8x32xf32>
    %275 = math.exp %274 : vector<8x32xf32>
    %276 = math.log1p %275 : vector<8x32xf32>
    %277 = arith.addf %266, %276 : vector<8x32xf32>
    %278 = arith.select %269, %271, %277 : vector<8x32xi1>, vector<8x32xf32>
    %cst_73 = arith.constant 9.99999997E-7 : f32
    %279 = vector.broadcast %cst_73 : f32 to vector<8x32xf32>
    %280 = arith.maximumf %278, %279 : vector<8x32xf32>
    %281 = arith.index_cast %c4_i32 : i32 to index
    %c0_74 = arith.constant 0 : index
    %c0_75 = arith.constant 0 : index
    %282 = vector.load %arg3[%281, %c0_74, %c0_75] : memref<8x8x32xbf16, #tpu.memory_space<vmem>>, vector<1x8x32xbf16>
    %283 = vector.shape_cast %282 : vector<1x8x32xbf16> to vector<8x32xbf16>
    %284 = arith.extf %283 : vector<8x32xbf16> to vector<8x32xf32>
    %285 = arith.mulf %284, %280 : vector<8x32xf32>
    %286 = arith.addf %263, %285 : vector<8x32xf32>
    %287 = tpu.concatenate %257, %286, %263, %280 in 1 : vector<8x32xf32>, vector<8x32xf32>, vector<8x32xf32>, vector<8x32xf32> -> vector<8x128xf32>
    %288 = arith.index_cast %c4_i32 : i32 to index
    %c0_76 = arith.constant 0 : index
    %c0_77 = arith.constant 0 : index
    %289 = vector.load %arg6[%288, %c0_76, %c0_77] : memref<8x8x128xf32, #tpu.memory_space<vmem>>, vector<1x8x128xf32>
    %290 = vector.shape_cast %289 : vector<1x8x128xf32> to vector<8x128xf32>
    %291 = vector.shape_cast %287 : vector<8x128xf32> to vector<1x8x128xf32>
    tpu.vector_store %arg6[%288, %c0_76, %c0_77], %291 {strides = array<i32>} : memref<8x8x128xf32, #tpu.memory_space<vmem>>, vector<1x8x128xf32>,
    %c5_i32 = arith.constant 5 : i32
    %292 = arith.index_cast %c5_i32 : i32 to index
    %c0_78 = arith.constant 0 : index
    %c0_79 = arith.constant 0 : index
    %293 = vector.load %arg2[%292, %c0_78, %c0_79] : memref<8x8x128xbf16, #tpu.memory_space<vmem>>, vector<1x8x128xbf16>
    %294 = vector.shape_cast %293 : vector<1x8x128xbf16> to vector<8x128xbf16>
    %295 = arith.extf %294 : vector<8x128xbf16> to vector<8x128xf32>
    %296 = arith.truncf %257 : vector<8x32xf32> to vector<8x32xbf16>
    %cst_80 = arith.constant dense<0.000000e+00> : vector<8x128xf32>
    %297 = tpu.matmul %296, %3, %cst_80 {dimension_numbers = #tpu.dot_dimension_numbers<[1], [0], [0], [1], [0, 0, 1, 1], [], []>} : vector<8x32xbf16>, vector<32x128xbf16>, vector<8x128xf32> -> vector<8x128xf32>
    %298 = arith.addf %295, %297 : vector<8x128xf32>
    %299 = vector.extract_strided_slice %298 {offsets = [0, 0], sizes = [8, 96], strides = [1, 1]} : vector<8x128xf32> to vector<8x96xf32>
    %300 = arith.negf %299 : vector<8x96xf32>
    %301 = math.exp %300 : vector<8x96xf32>
    %cst_81 = arith.constant 1.000000e+00 : f32
    %302 = vector.broadcast %cst_81 : f32 to vector<8x96xf32>
    %303 = arith.addf %302, %301 : vector<8x96xf32>
    %304 = arith.divf %302, %303 : vector<8x96xf32>
    %305 = vector.extract_strided_slice %304 {offsets = [0, 0], sizes = [8, 32], strides = [1, 1]} : vector<8x96xf32> to vector<8x32xf32>
    %306 = vector.extract_strided_slice %304 {offsets = [0, 32], sizes = [8, 32], strides = [1, 1]} : vector<8x96xf32> to vector<8x32xf32>
    %307 = vector.extract_strided_slice %304 {offsets = [0, 64], sizes = [8, 32], strides = [1, 1]} : vector<8x96xf32> to vector<8x32xf32>
    %308 = vector.extract_strided_slice %298 {offsets = [0, 96], sizes = [8, 32], strides = [1, 1]} : vector<8x128xf32> to vector<8x32xf32>
    %309 = math.tanh %308 : vector<8x32xf32>
    %310 = arith.mulf %306, %286 : vector<8x32xf32>
    %311 = arith.mulf %305, %309 : vector<8x32xf32>
    %312 = arith.addf %310, %311 : vector<8x32xf32>
    %313 = math.tanh %286 : vector<8x32xf32>
    %314 = arith.mulf %307, %313 : vector<8x32xf32>
    %cst_82 = arith.constant dense<0.000000e+00> : vector<8x128xf32>
    %315 = tpu.matmul %312, %4, %cst_82 {dimension_numbers = #tpu.dot_dimension_numbers<[1], [0], [0], [1], [0, 0, 1, 1], [], []>} : vector<8x32xf32>, vector<32x128xf32>, vector<8x128xf32> -> vector<8x128xf32>
    %316 = vector.extract_strided_slice %315 {offsets = [0, 0], sizes = [8, 32], strides = [1, 1]} : vector<8x128xf32> to vector<8x32xf32>
    %cst_83 = arith.constant 9.99999997E-7 : f32
    %cst_84 = arith.constant 1.000000e+06 : f32
    %317 = vector.broadcast %cst_83 : f32 to vector<8x32xf32>
    %318 = arith.maximumf %317, %316 : vector<8x32xf32>
    %319 = vector.broadcast %cst_84 : f32 to vector<8x32xf32>
    %320 = arith.minimumf %319, %318 : vector<8x32xf32>
    %321 = vector.extract_strided_slice %315 {offsets = [0, 32], sizes = [8, 32], strides = [1, 1]} : vector<8x128xf32> to vector<8x32xf32>
    %cst_85 = arith.constant 0.000000e+00 : f32
    %322 = vector.broadcast %cst_85 : f32 to vector<8x32xf32>
    %323 = arith.maximumf %321, %322 : vector<8x32xf32>
    %324 = vector.broadcast %cst_85 : f32 to vector<8x32xf32>
    %325 = arith.subf %321, %324 : vector<8x32xf32>
    %326 = arith.cmpf one, %325, %325 : vector<8x32xf32>
    %327 = vector.broadcast %cst_85 : f32 to vector<8x32xf32>
    %328 = arith.addf %321, %327 : vector<8x32xf32>
    %329 = math.absf %325 : vector<8x32xf32>
    %cst_86 = arith.constant 0.000000e+00 : f32
    %330 = vector.broadcast %cst_86 : f32 to vector<8x32xf32>
    %331 = arith.subf %330, %329 : vector<8x32xf32>
    %332 = math.exp %331 : vector<8x32xf32>
    %333 = math.log1p %332 : vector<8x32xf32>
    %334 = arith.addf %323, %333 : vector<8x32xf32>
    %335 = arith.select %326, %328, %334 : vector<8x32xi1>, vector<8x32xf32>
    %cst_87 = arith.constant 9.99999997E-7 : f32
    %336 = vector.broadcast %cst_87 : f32 to vector<8x32xf32>
    %337 = arith.maximumf %335, %336 : vector<8x32xf32>
    %338 = arith.index_cast %c5_i32 : i32 to index
    %c0_88 = arith.constant 0 : index
    %c0_89 = arith.constant 0 : index
    %339 = vector.load %arg3[%338, %c0_88, %c0_89] : memref<8x8x32xbf16, #tpu.memory_space<vmem>>, vector<1x8x32xbf16>
    %340 = vector.shape_cast %339 : vector<1x8x32xbf16> to vector<8x32xbf16>
    %341 = arith.extf %340 : vector<8x32xbf16> to vector<8x32xf32>
    %342 = arith.mulf %341, %337 : vector<8x32xf32>
    %343 = arith.addf %320, %342 : vector<8x32xf32>
    %344 = tpu.concatenate %314, %343, %320, %337 in 1 : vector<8x32xf32>, vector<8x32xf32>, vector<8x32xf32>, vector<8x32xf32> -> vector<8x128xf32>
    %345 = arith.index_cast %c5_i32 : i32 to index
    %c0_90 = arith.constant 0 : index
    %c0_91 = arith.constant 0 : index
    %346 = vector.load %arg6[%345, %c0_90, %c0_91] : memref<8x8x128xf32, #tpu.memory_space<vmem>>, vector<1x8x128xf32>
    %347 = vector.shape_cast %346 : vector<1x8x128xf32> to vector<8x128xf32>
    %348 = vector.shape_cast %344 : vector<8x128xf32> to vector<1x8x128xf32>
    tpu.vector_store %arg6[%345, %c0_90, %c0_91], %348 {strides = array<i32>} : memref<8x8x128xf32, #tpu.memory_space<vmem>>, vector<1x8x128xf32>,
    %c6_i32 = arith.constant 6 : i32
    %349 = arith.index_cast %c6_i32 : i32 to index
    %c0_92 = arith.constant 0 : index
    %c0_93 = arith.constant 0 : index
    %350 = vector.load %arg2[%349, %c0_92, %c0_93] : memref<8x8x128xbf16, #tpu.memory_space<vmem>>, vector<1x8x128xbf16>
    %351 = vector.shape_cast %350 : vector<1x8x128xbf16> to vector<8x128xbf16>
    %352 = arith.extf %351 : vector<8x128xbf16> to vector<8x128xf32>
    %353 = arith.truncf %314 : vector<8x32xf32> to vector<8x32xbf16>
    %cst_94 = arith.constant dense<0.000000e+00> : vector<8x128xf32>
    %354 = tpu.matmul %353, %3, %cst_94 {dimension_numbers = #tpu.dot_dimension_numbers<[1], [0], [0], [1], [0, 0, 1, 1], [], []>} : vector<8x32xbf16>, vector<32x128xbf16>, vector<8x128xf32> -> vector<8x128xf32>
    %355 = arith.addf %352, %354 : vector<8x128xf32>
    %356 = vector.extract_strided_slice %355 {offsets = [0, 0], sizes = [8, 96], strides = [1, 1]} : vector<8x128xf32> to vector<8x96xf32>
    %357 = arith.negf %356 : vector<8x96xf32>
    %358 = math.exp %357 : vector<8x96xf32>
    %cst_95 = arith.constant 1.000000e+00 : f32
    %359 = vector.broadcast %cst_95 : f32 to vector<8x96xf32>
    %360 = arith.addf %359, %358 : vector<8x96xf32>
    %361 = arith.divf %359, %360 : vector<8x96xf32>
    %362 = vector.extract_strided_slice %361 {offsets = [0, 0], sizes = [8, 32], strides = [1, 1]} : vector<8x96xf32> to vector<8x32xf32>
    %363 = vector.extract_strided_slice %361 {offsets = [0, 32], sizes = [8, 32], strides = [1, 1]} : vector<8x96xf32> to vector<8x32xf32>
    %364 = vector.extract_strided_slice %361 {offsets = [0, 64], sizes = [8, 32], strides = [1, 1]} : vector<8x96xf32> to vector<8x32xf32>
    %365 = vector.extract_strided_slice %355 {offsets = [0, 96], sizes = [8, 32], strides = [1, 1]} : vector<8x128xf32> to vector<8x32xf32>
    %366 = math.tanh %365 : vector<8x32xf32>
    %367 = arith.mulf %363, %343 : vector<8x32xf32>
    %368 = arith.mulf %362, %366 : vector<8x32xf32>
    %369 = arith.addf %367, %368 : vector<8x32xf32>
    %370 = math.tanh %343 : vector<8x32xf32>
    %371 = arith.mulf %364, %370 : vector<8x32xf32>
    %cst_96 = arith.constant dense<0.000000e+00> : vector<8x128xf32>
    %372 = tpu.matmul %369, %4, %cst_96 {dimension_numbers = #tpu.dot_dimension_numbers<[1], [0], [0], [1], [0, 0, 1, 1], [], []>} : vector<8x32xf32>, vector<32x128xf32>, vector<8x128xf32> -> vector<8x128xf32>
    %373 = vector.extract_strided_slice %372 {offsets = [0, 0], sizes = [8, 32], strides = [1, 1]} : vector<8x128xf32> to vector<8x32xf32>
    %cst_97 = arith.constant 9.99999997E-7 : f32
    %cst_98 = arith.constant 1.000000e+06 : f32
    %374 = vector.broadcast %cst_97 : f32 to vector<8x32xf32>
    %375 = arith.maximumf %374, %373 : vector<8x32xf32>
    %376 = vector.broadcast %cst_98 : f32 to vector<8x32xf32>
    %377 = arith.minimumf %376, %375 : vector<8x32xf32>
    %378 = vector.extract_strided_slice %372 {offsets = [0, 32], sizes = [8, 32], strides = [1, 1]} : vector<8x128xf32> to vector<8x32xf32>
    %cst_99 = arith.constant 0.000000e+00 : f32
    %379 = vector.broadcast %cst_99 : f32 to vector<8x32xf32>
    %380 = arith.maximumf %378, %379 : vector<8x32xf32>
    %381 = vector.broadcast %cst_99 : f32 to vector<8x32xf32>
    %382 = arith.subf %378, %381 : vector<8x32xf32>
    %383 = arith.cmpf one, %382, %382 : vector<8x32xf32>
    %384 = vector.broadcast %cst_99 : f32 to vector<8x32xf32>
    %385 = arith.addf %378, %384 : vector<8x32xf32>
    %386 = math.absf %382 : vector<8x32xf32>
    %cst_100 = arith.constant 0.000000e+00 : f32
    %387 = vector.broadcast %cst_100 : f32 to vector<8x32xf32>
    %388 = arith.subf %387, %386 : vector<8x32xf32>
    %389 = math.exp %388 : vector<8x32xf32>
    %390 = math.log1p %389 : vector<8x32xf32>
    %391 = arith.addf %380, %390 : vector<8x32xf32>
    %392 = arith.select %383, %385, %391 : vector<8x32xi1>, vector<8x32xf32>
    %cst_101 = arith.constant 9.99999997E-7 : f32
    %393 = vector.broadcast %cst_101 : f32 to vector<8x32xf32>
    %394 = arith.maximumf %392, %393 : vector<8x32xf32>
    %395 = arith.index_cast %c6_i32 : i32 to index
    %c0_102 = arith.constant 0 : index
    %c0_103 = arith.constant 0 : index
    %396 = vector.load %arg3[%395, %c0_102, %c0_103] : memref<8x8x32xbf16, #tpu.memory_space<vmem>>, vector<1x8x32xbf16>
    %397 = vector.shape_cast %396 : vector<1x8x32xbf16> to vector<8x32xbf16>
    %398 = arith.extf %397 : vector<8x32xbf16> to vector<8x32xf32>
    %399 = arith.mulf %398, %394 : vector<8x32xf32>
    %400 = arith.addf %377, %399 : vector<8x32xf32>
    %401 = tpu.concatenate %371, %400, %377, %394 in 1 : vector<8x32xf32>, vector<8x32xf32>, vector<8x32xf32>, vector<8x32xf32> -> vector<8x128xf32>
    %402 = arith.index_cast %c6_i32 : i32 to index
    %c0_104 = arith.constant 0 : index
    %c0_105 = arith.constant 0 : index
    %403 = vector.load %arg6[%402, %c0_104, %c0_105] : memref<8x8x128xf32, #tpu.memory_space<vmem>>, vector<1x8x128xf32>
    %404 = vector.shape_cast %403 : vector<1x8x128xf32> to vector<8x128xf32>
    %405 = vector.shape_cast %401 : vector<8x128xf32> to vector<1x8x128xf32>
    tpu.vector_store %arg6[%402, %c0_104, %c0_105], %405 {strides = array<i32>} : memref<8x8x128xf32, #tpu.memory_space<vmem>>, vector<1x8x128xf32>,
    %c7_i32 = arith.constant 7 : i32
    %406 = arith.index_cast %c7_i32 : i32 to index
    %c0_106 = arith.constant 0 : index
    %c0_107 = arith.constant 0 : index
    %407 = vector.load %arg2[%406, %c0_106, %c0_107] : memref<8x8x128xbf16, #tpu.memory_space<vmem>>, vector<1x8x128xbf16>
    %408 = vector.shape_cast %407 : vector<1x8x128xbf16> to vector<8x128xbf16>
    %409 = arith.extf %408 : vector<8x128xbf16> to vector<8x128xf32>
    %410 = arith.truncf %371 : vector<8x32xf32> to vector<8x32xbf16>
    %cst_108 = arith.constant dense<0.000000e+00> : vector<8x128xf32>
    %411 = tpu.matmul %410, %3, %cst_108 {dimension_numbers = #tpu.dot_dimension_numbers<[1], [0], [0], [1], [0, 0, 1, 1], [], []>} : vector<8x32xbf16>, vector<32x128xbf16>, vector<8x128xf32> -> vector<8x128xf32>
    %412 = arith.addf %409, %411 : vector<8x128xf32>
    %413 = vector.extract_strided_slice %412 {offsets = [0, 0], sizes = [8, 96], strides = [1, 1]} : vector<8x128xf32> to vector<8x96xf32>
    %414 = arith.negf %413 : vector<8x96xf32>
    %415 = math.exp %414 : vector<8x96xf32>
    %cst_109 = arith.constant 1.000000e+00 : f32
    %416 = vector.broadcast %cst_109 : f32 to vector<8x96xf32>
    %417 = arith.addf %416, %415 : vector<8x96xf32>
    %418 = arith.divf %416, %417 : vector<8x96xf32>
    %419 = vector.extract_strided_slice %418 {offsets = [0, 0], sizes = [8, 32], strides = [1, 1]} : vector<8x96xf32> to vector<8x32xf32>
    %420 = vector.extract_strided_slice %418 {offsets = [0, 32], sizes = [8, 32], strides = [1, 1]} : vector<8x96xf32> to vector<8x32xf32>
    %421 = vector.extract_strided_slice %418 {offsets = [0, 64], sizes = [8, 32], strides = [1, 1]} : vector<8x96xf32> to vector<8x32xf32>
    %422 = vector.extract_strided_slice %412 {offsets = [0, 96], sizes = [8, 32], strides = [1, 1]} : vector<8x128xf32> to vector<8x32xf32>
    %423 = math.tanh %422 : vector<8x32xf32>
    %424 = arith.mulf %420, %400 : vector<8x32xf32>
    %425 = arith.mulf %419, %423 : vector<8x32xf32>
    %426 = arith.addf %424, %425 : vector<8x32xf32>
    %427 = math.tanh %400 : vector<8x32xf32>
    %428 = arith.mulf %421, %427 : vector<8x32xf32>
    %cst_110 = arith.constant dense<0.000000e+00> : vector<8x128xf32>
    %429 = tpu.matmul %426, %4, %cst_110 {dimension_numbers = #tpu.dot_dimension_numbers<[1], [0], [0], [1], [0, 0, 1, 1], [], []>} : vector<8x32xf32>, vector<32x128xf32>, vector<8x128xf32> -> vector<8x128xf32>
    %430 = vector.extract_strided_slice %429 {offsets = [0, 0], sizes = [8, 32], strides = [1, 1]} : vector<8x128xf32> to vector<8x32xf32>
    %cst_111 = arith.constant 9.99999997E-7 : f32
    %cst_112 = arith.constant 1.000000e+06 : f32
    %431 = vector.broadcast %cst_111 : f32 to vector<8x32xf32>
    %432 = arith.maximumf %431, %430 : vector<8x32xf32>
    %433 = vector.broadcast %cst_112 : f32 to vector<8x32xf32>
    %434 = arith.minimumf %433, %432 : vector<8x32xf32>
    %435 = vector.extract_strided_slice %429 {offsets = [0, 32], sizes = [8, 32], strides = [1, 1]} : vector<8x128xf32> to vector<8x32xf32>
    %cst_113 = arith.constant 0.000000e+00 : f32
    %436 = vector.broadcast %cst_113 : f32 to vector<8x32xf32>
    %437 = arith.maximumf %435, %436 : vector<8x32xf32>
    %438 = vector.broadcast %cst_113 : f32 to vector<8x32xf32>
    %439 = arith.subf %435, %438 : vector<8x32xf32>
    %440 = arith.cmpf one, %439, %439 : vector<8x32xf32>
    %441 = vector.broadcast %cst_113 : f32 to vector<8x32xf32>
    %442 = arith.addf %435, %441 : vector<8x32xf32>
    %443 = math.absf %439 : vector<8x32xf32>
    %cst_114 = arith.constant 0.000000e+00 : f32
    %444 = vector.broadcast %cst_114 : f32 to vector<8x32xf32>
    %445 = arith.subf %444, %443 : vector<8x32xf32>
    %446 = math.exp %445 : vector<8x32xf32>
    %447 = math.log1p %446 : vector<8x32xf32>
    %448 = arith.addf %437, %447 : vector<8x32xf32>
    %449 = arith.select %440, %442, %448 : vector<8x32xi1>, vector<8x32xf32>
    %cst_115 = arith.constant 9.99999997E-7 : f32
    %450 = vector.broadcast %cst_115 : f32 to vector<8x32xf32>
    %451 = arith.maximumf %449, %450 : vector<8x32xf32>
    %452 = arith.index_cast %c7_i32 : i32 to index
    %c0_116 = arith.constant 0 : index
    %c0_117 = arith.constant 0 : index
    %453 = vector.load %arg3[%452, %c0_116, %c0_117] : memref<8x8x32xbf16, #tpu.memory_space<vmem>>, vector<1x8x32xbf16>
    %454 = vector.shape_cast %453 : vector<1x8x32xbf16> to vector<8x32xbf16>
    %455 = arith.extf %454 : vector<8x32xbf16> to vector<8x32xf32>
    %456 = arith.mulf %455, %451 : vector<8x32xf32>
    %457 = arith.addf %434, %456 : vector<8x32xf32>
    %458 = tpu.concatenate %428, %457, %434, %451 in 1 : vector<8x32xf32>, vector<8x32xf32>, vector<8x32xf32>, vector<8x32xf32> -> vector<8x128xf32>
    %459 = arith.index_cast %c7_i32 : i32 to index
    %c0_118 = arith.constant 0 : index
    %c0_119 = arith.constant 0 : index
    %460 = vector.load %arg6[%459, %c0_118, %c0_119] : memref<8x8x128xf32, #tpu.memory_space<vmem>>, vector<1x8x128xf32>
    %461 = vector.shape_cast %460 : vector<1x8x128xf32> to vector<8x128xf32>
    %462 = vector.shape_cast %458 : vector<8x128xf32> to vector<1x8x128xf32>
    tpu.vector_store %arg6[%459, %c0_118, %c0_119], %462 {strides = array<i32>} : memref<8x8x128xf32, #tpu.memory_space<vmem>>, vector<1x8x128xf32>,
    %c8_i32 = arith.constant 8 : i32
    %c0_120 = arith.constant 0 : index
    %c0_121 = arith.constant 0 : index
    %463 = vector.load %arg7[%c0_120, %c0_121] : memref<8x32xf32, #tpu.memory_space<vmem>>, vector<8x32xf32>
    tpu.vector_store %arg7[%c0_120, %c0_121], %428 {strides = array<i32>} : memref<8x32xf32, #tpu.memory_space<vmem>>, vector<8x32xf32>,
    %c0_122 = arith.constant 0 : index
    %c0_123 = arith.constant 0 : index
    %464 = vector.load %arg8[%c0_122, %c0_123] : memref<8x32xf32, #tpu.memory_space<vmem>>, vector<8x32xf32>
    tpu.vector_store %arg8[%c0_122, %c0_123], %457 {strides = array<i32>} : memref<8x32xf32, #tpu.memory_space<vmem>>, vector<8x32xf32>,
    return
  }
  func.func @transform_0(%arg0: i32, %arg1: i32) -> (i32, i32, i32) {
    %c0_i32 = arith.constant 0 : i32
    %c0_i32_0 = arith.constant 0 : i32
    return %arg1, %arg0, %c0_i32 : i32, i32, i32
  }
  func.func @transform_1(%arg0: i32, %arg1: i32) -> (i32, i32, i32) {
    %c0_i32 = arith.constant 0 : i32
    %c0_i32_0 = arith.constant 0 : i32
    return %arg1, %arg0, %c0_i32 : i32, i32, i32
  }
  func.func @transform_2(%arg0: i32, %arg1: i32) -> (i32, i32) {
    %c0_i32 = arith.constant 0 : i32
    %c0_i32_0 = arith.constant 0 : i32
    %c0_i32_1 = arith.constant 0 : i32
    return %c0_i32, %c0_i32_0 : i32, i32
  }
  func.func @transform_3(%arg0: i32, %arg1: i32) -> (i32, i32) {
    %c0_i32 = arith.constant 0 : i32
    %c0_i32_0 = arith.constant 0 : i32
    %c0_i32_1 = arith.constant 0 : i32
    return %c0_i32, %c0_i32_0 : i32, i32
  }
  func.func @transform_4(%arg0: i32, %arg1: i32) -> (i32, i32, i32) {
    %c0_i32 = arith.constant 0 : i32
    %c0_i32_0 = arith.constant 0 : i32
    return %arg1, %arg0, %c0_i32 : i32, i32, i32
  }
}

</mosaic_0001>

<llo_original>
// kernel: tpu_custom_call.1
$region0: #{tpu_custom_call.1}
  #allocation0 [shape = 'u32[]', space=smem, size = 0x4, offset = 0x4, fixed_abs, tag = 'smem constant byte address 0x4 - core index']
  #allocation1 [shape = 'u32[144,128]{1,0:T(1,128)}', space=vmem, size = 0x12000, scoped, tag = 'internal scratch']
  #allocation2 [shape = 'f32[8,32]{1,0:T(8,128)}', space=vmem, size = 0x1000, scoped, tag = 'scratch operand']
  #allocation3 [shape = 'f32[8,32]{1,0:T(8,128)}', space=vmem, size = 0x1000, scoped, tag = 'scratch operand']
  %s0 = inlined_call_operand.hbm [shape: bf16[8,8,128], index: 0, kind: input, shape index: {}]
  %s1 = inlined_call_operand.hbm [shape: bf16[8,8,32], index: 1, kind: input, shape index: {}]
  %s2 = inlined_call_operand.hbm [shape: bf16[32,128], index: 2, kind: input, shape index: {}]
  %s3 = inlined_call_operand.hbm [shape: f32[32,128], index: 3, kind: input, shape index: {}]
  %s4 = inlined_call_operand.hbm [shape: f32[8,8,128], index: 4, kind: output, shape index: {}]
  %s5 = sld [smem:[#allocation0]]
  $region46: #{tpu_custom_call.1} parent=0
    _
  %s7 = ssub.s32 1, %s5
  %s8 = scalar_select 0, %s7, %s5
  $region1: #{tpu_custom_call.1} parent=0
    #allocation4 [shape = 'u8[16384]{0}', space=vmem, size = 0x4000, scoped, tag = 'input window, operand 0, single buffered']
    #allocation5 [shape = 's32[1]{0}', space=sflag, size = 0x4, scoped, tag = 'scoped memory for tpu_custom_call.1']
    #allocation6 [shape = 's32[1]{0}', space=sflag, size = 0x4, scoped, tag = 'scoped memory for tpu_custom_call.1']
    #allocation7 [shape = 'u8[16384]{0}', space=vmem, size = 0x4000, scoped, tag = 'input window, operand 1, single buffered']
    #allocation8 [shape = 's32[1]{0}', space=sflag, size = 0x4, scoped, tag = 'scoped memory for tpu_custom_call.1']
    #allocation9 [shape = 'u8[8192]{0}', space=vmem, size = 0x2000, scoped, tag = 'input window, operand 2, single buffered']
    #allocation10 [shape = 'u8[16384]{0}', space=vmem, size = 0x4000, scoped, tag = 'input window, operand 3, single buffered']
    #allocation11 [shape = 's32[1]{0}', space=sflag, size = 0x4, scoped, tag = 'scoped memory for tpu_custom_call.1']
    #allocation12 [shape = 'u8[32768]{0}', space=vmem, size = 0x8000, scoped, tag = 'output window, operand 0, single buffered']
    %9 = vsyncpa [#allocation5], 0
    %10 = vsyncpa [#allocation8], 0
    %11 = vsyncpa [#allocation11], 0
    %12 = vsyncpa [#allocation6], 0
    // Predicated region
    $region2: #{tpu_custom_call.1} parent=1 // pred_check
      _
    $region3: #{tpu_custom_call.1} parent=1 // pred_check_branch
      %14 = sbr.rel (0) target = $region5
    $region4: #{tpu_custom_call.1} parent=1 // pred_region
      %s16 = ssub.s32 512, 512
      %17 = vsyncadd [#allocation5], %s16
      %s18 = sshll.u32 [#allocation4], 4
      %s19 = int_to_ptr.vmem [resolvable:$true] %s18
      %24 = dma.hbm_to_vmem [thread:$0]  %s0, 512, %s19, [#allocation5], 64, 64, 4
    $region5: #{tpu_custom_call.1} parent=1 // pred_fallthru
      _
    // Predicated region
    $region6: #{tpu_custom_call.1} parent=1 // pred_check
      _
    $region7: #{tpu_custom_call.1} parent=1 // pred_check_branch
      %26 = sbr.rel (0) target = $region9
    $region8: #{tpu_custom_call.1} parent=1 // pred_region
      %s28 = ssub.s32 512, 512
      %29 = vsyncadd [#allocation8], %s28
      %s30 = sshll.u32 [#allocation7], 4
      %s31 = int_to_ptr.vmem [resolvable:$true] %s30
      %36 = dma.hbm_to_vmem [thread:$0]  %s1, 512, %s31, [#allocation8], 64, 64, 4
    $region9: #{tpu_custom_call.1} parent=1 // pred_fallthru
      _
    // Predicated region
    $region10: #{tpu_custom_call.1} parent=1 // pred_check
      _
    $region11: #{tpu_custom_call.1} parent=1 // pred_check_branch
      %38 = sbr.rel (0) target = $region13
    $region12: #{tpu_custom_call.1} parent=1 // pred_region
      %s40 = ssub.s32 256, 256
      %41 = vsyncadd [#allocation8], %s40
      %s42 = sshll.u32 [#allocation9], 4
      %s43 = int_to_ptr.vmem [resolvable:$true] %s42
      %48 = dma.hbm_to_vmem [thread:$0]  %s2, 256, %s43, [#allocation8], 64, 64, 4
    $region13: #{tpu_custom_call.1} parent=1 // pred_fallthru
      _
    // Predicated region
    $region14: #{tpu_custom_call.1} parent=1 // pred_check
      _
    $region15: #{tpu_custom_call.1} parent=1 // pred_check_branch
      %50 = sbr.rel (0) target = $region17
    $region16: #{tpu_custom_call.1} parent=1 // pred_region
      %s52 = ssub.s32 512, 512
      %53 = vsyncadd [#allocation11], %s52
      %s54 = sshll.u32 [#allocation10], 4
      %s55 = int_to_ptr.vmem [resolvable:$true] %s54
      %60 = dma.hbm_to_vmem [thread:$0]  %s3, 512, %s55, [#allocation11], 128, 128, 8
    $region17: #{tpu_custom_call.1} parent=1 // pred_fallthru
      _
    // Predicated region
    $region18: #{tpu_custom_call.1} parent=1 // pred_check
      _
    $region19: #{tpu_custom_call.1} parent=1 // pred_check_branch
      %62 = sbr.rel (0) target = $region21
    $region20: #{tpu_custom_call.1} parent=1 // pred_region
      %63 = dma.done [#allocation5], 512
    $region21: #{tpu_custom_call.1} parent=1 // pred_fallthru
      _
    // Predicated region
    $region22: #{tpu_custom_call.1} parent=1 // pred_check
      _
    $region23: #{tpu_custom_call.1} parent=1 // pred_check_branch
      %65 = sbr.rel (0) target = $region25
    $region24: #{tpu_custom_call.1} parent=1 // pred_region
      %66 = dma.done [#allocation8], 512
    $region25: #{tpu_custom_call.1} parent=1 // pred_fallthru
      _
    // Predicated region
    $region26: #{tpu_custom_call.1} parent=1 // pred_check
      _
    $region27: #{tpu_custom_call.1} parent=1 // pred_check_branch
      %68 = sbr.rel (0) target = $region29
    $region28: #{tpu_custom_call.1} parent=1 // pred_region
      %69 = dma.done [#allocation8], 256
    $region29: #{tpu_custom_call.1} parent=1 // pred_fallthru
      _
    // Predicated region
    $region30: #{tpu_custom_call.1} parent=1 // pred_check
      _
    $region31: #{tpu_custom_call.1} parent=1 // pred_check_branch
      %71 = sbr.rel (0) target = $region33
    $region32: #{tpu_custom_call.1} parent=1 // pred_region
      %72 = dma.done [#allocation11], 512
    $region33: #{tpu_custom_call.1} parent=1 // pred_fallthru
      _
    %p74 = scmp.eq.s32.totalorder 0, 0
    // Predicated region
    $region34: #{tpu_custom_call.1} parent=1 // pred_check
      %p75 = pneg %p74
    $region35: #{tpu_custom_call.1} parent=1 // pred_check_branch
      %77 = sbr.rel (%p75) target = $region37
    $region36: #{tpu_custom_call.1} parent=1 // pred_region
      %vm78 = vcmask 261120
      %79 = vst.msk [vmem:[#allocation2] sm:$0xff] %vm78, 0.0
      %80 = vst.msk [vmem:[#allocation3] sm:$0xff] %vm78, 0.0
    $region37: #{tpu_custom_call.1} parent=1 // pred_fallthru
      _
    %v81 = vld [vmem:[#allocation9] sm:$0xf]
    %v82 = vld [vmem:[#allocation9 + $0x4] sm:$0xf]
    %v83 = vld [vmem:[#allocation9 + $0x8] sm:$0xf]
    %v84 = vld [vmem:[#allocation9 + $0xc] sm:$0xf]
    %v85 = vld [vmem:[#allocation10] sm:$0xff]
    %v86 = vld [vmem:[#allocation10 + $0x8] sm:$0xff]
    %v87 = vld [vmem:[#allocation10 + $0x10] sm:$0xff]
    %v88 = vld [vmem:[#allocation10 + $0x18] sm:$0xff]
    %v89 = vld [vmem:[#allocation2] sm:$0xff]
    %v90 = vld [vmem:[#allocation3] sm:$0xff]
    %v91 = vld [vmem:[#allocation4] sm:$0xf]
    %v92 = vunpack.c.l.bf16 %v91
    %v93 = vpack.c.bf16 %v89, %v89
    %v98 = vunpack.c.l.b16 %v81
    %v99 = vunpack.c.l.b16 %v82
    %v100 = vunpack.c.l.b16 %v83
    %v101 = vunpack.c.l.b16 %v84
    %v102 = vpack.c.b16 %v99, %v98
    %v103 = vpack.c.b16 %v101, %v100
    %vm106 = vcmask 261120
    %v108 = vsel %vm106, %v93, 0
    %110 = vmatprep.subr.bf16.mxu0 0
    %111 = vmatpush1.bf16.msra.mxu0 %v102
    %112 = vmatprep.subr.bf16.mxu0 0
    %113 = vmatpush1.bf16.msra.mxu0 %v103
    %114 = vmatprep.subr.bf16.mxu0 0
    %115 = vmatpush1.bf16.msra.mxu0 0
    %116 = vmatprep.subr.bf16.mxu0 0
    %117 = vmatpush1.bf16.msra.mxu0 0
    %118 = vmatprep.subr.bf16.mxu0 0
    %119 = vmatpush1.bf16.msra.mxu0 0
    %120 = vmatprep.subr.bf16.mxu0 0
    %121 = vmatpush1.bf16.msra.mxu0 0
    %122 = vmatprep.subr.bf16.mxu0 0
    %123 = vmatpush1.bf16.msra.mxu0 0
    %124 = vmatprep.subr.bf16.mxu0 0
    %125 = vmatpush1.bf16.msra.mxu0 0
    %126 = vmatprep.subr.bf16.mxu0 0
    %127 = vmatpush1.bf16.msra.mxu0 0
    %128 = vmatprep.subr.bf16.mxu0 0
    %129 = vmatpush1.bf16.msra.mxu0 0
    %130 = vmatprep.subr.bf16.mxu0 0
    %131 = vmatpush1.bf16.msra.mxu0 0
    %132 = vmatprep.subr.bf16.mxu0 0
    %133 = vmatpush1.bf16.msra.mxu0 0
    %134 = vmatprep.subr.bf16.mxu0 0
    %135 = vmatpush1.bf16.msra.mxu0 0
    %136 = vmatprep.subr.bf16.mxu0 0
    %137 = vmatpush1.bf16.msra.mxu0 0
    %138 = vmatprep.subr.bf16.mxu0 0
    %139 = vmatpush1.bf16.msra.mxu0 0
    %140 = vmatprep.subr.bf16.mxu0 0
    %141 = vmatpush1.bf16.msra.mxu0 0
    %142 = vmatprep.mubr.bf16.mxu0 0
    %143 = vmatmul.mubr.bf16.gmra.mrb[0].mxu0 %v108
    %v144 = vpop.f32.mrb[0].mxu0
    %v145 = vadd.f32 0.0, %v144
    %v146 = vpop.f32.mrb[0].mxu0
    %v147 = vpop.f32.mrb[0].mxu0
    %v148 = vpop.f32.mrb[0].mxu0
    %149 = vdwg.mxu0
    %v150 = vadd.f32 %v92, %v145
    %v151 = vxor.u32 %v150, 2147483648
    %v152 = vmul.f32 %v151, 1.442695
    %v153 = vpow.pop %v152
    %v154 = vadd.f32 %v153, 1.0
    %v155 = vrcp.pop %v154
    %v156 = vmul.f32 1.0, %v155
    %v157 = vtanh.pop %v150
    %159 = vrot.lane.b32.xlu0 %v90, 32
    %v160 = vpop.permute.xlu0 %159
    %v162 = vmul.f32 %v156, %v160
    %164 = vrot.lane.b32.xlu0 %v157, 32
    %v165 = vpop.permute.xlu0 %164
    %v167 = vmul.f32 %v156, %v165
    %169 = vrot.lane.b32.xlu0 %v167, 32
    %v170 = vpop.permute.xlu0 %169
    %v172 = vadd.f32 %v162, %v170
    %v173 = vtanh.pop %v90
    %175 = vrot.lane.b32.xlu0 %v173, 64
    %v176 = vpop.permute.xlu0 %175
    %v178 = vmul.f32 %v156, %v176
    %180 = vrot.lane.b32.xlu0 %v172, 96
    %v181 = vpop.permute.xlu0 %180
    %v182 = vsel %vm106, %v181, 0
    %184 = vmatprep.subr.mxu0 0.0
    %185 = vmatpush1.msra.mxu0 %v85
    %186 = vmatprep.subr.mxu0 0.0
    %187 = vmatpush1.msra.mxu0 %v86
    %188 = vmatprep.subr.mxu0 0.0
    %189 = vmatpush1.msra.mxu0 %v87
    %190 = vmatprep.subr.mxu0 0.0
    %191 = vmatpush1.msra.mxu0 %v88
    %192 = vmatprep.subr.mxu0 0.0
    %193 = vmatpush1.msra.mxu0 0.0
    %194 = vmatprep.subr.mxu0 0.0
    %195 = vmatpush1.msra.mxu0 0.0
    %196 = vmatprep.subr.mxu0 0.0
    %197 = vmatpush1.msra.mxu0 0.0
    %198 = vmatprep.subr.mxu0 0.0
    %199 = vmatpush1.msra.mxu0 0.0
    %200 = vmatprep.subr.mxu0 0.0
    %201 = vmatpush1.msra.mxu0 0.0
    %202 = vmatprep.subr.mxu0 0.0
    %203 = vmatpush1.msra.mxu0 0.0
    %204 = vmatprep.subr.mxu0 0.0
    %205 = vmatpush1.msra.mxu0 0.0
    %206 = vmatprep.subr.mxu0 0.0
    %207 = vmatpush1.msra.mxu0 0.0
    %208 = vmatprep.subr.mxu0 0.0
    %209 = vmatpush1.msra.mxu0 0.0
    %210 = vmatprep.subr.mxu0 0.0
    %211 = vmatpush1.msra.mxu0 0.0
    %212 = vmatprep.subr.mxu0 0.0
    %213 = vmatpush1.msra.mxu0 0.0
    %214 = vmatprep.subr.mxu0 0.0
    %215 = vmatpush1.msra.mxu0 0.0
    %216 = vmatprep.subr.mxu0 0.0
    %217 = vmatpush1.msra.mxu0 0.0
    %218 = vmatprep.subr.mxu0 0.0
    %219 = vmatpush1.msra.mxu0 0.0
    %220 = vmatprep.subr.mxu0 0.0
    %221 = vmatpush1.msra.mxu0 0.0
    %222 = vmatprep.subr.mxu0 0.0
    %223 = vmatpush1.msra.mxu0 0.0
    %224 = vmatprep.subr.mxu0 0.0
    %225 = vmatpush1.msra.mxu0 0.0
    %226 = vmatprep.subr.mxu0 0.0
    %227 = vmatpush1.msra.mxu0 0.0
    %228 = vmatprep.subr.mxu0 0.0
    %229 = vmatpush1.msra.mxu0 0.0
    %230 = vmatprep.subr.mxu0 0.0
    %231 = vmatpush1.msra.mxu0 0.0
    %232 = vmatprep.subr.mxu0 0.0
    %233 = vmatpush1.msra.mxu0 0.0
    %234 = vmatprep.subr.mxu0 0.0
    %235 = vmatpush1.msra.mxu0 0.0
    %236 = vmatprep.subr.mxu0 0.0
    %237 = vmatpush1.msra.mxu0 0.0
    %238 = vmatprep.subr.mxu0 0.0
    %239 = vmatpush1.msra.mxu0 0.0
    %240 = vmatprep.subr.mxu0 0.0
    %241 = vmatpush1.msra.mxu0 0.0
    %242 = vmatprep.subr.mxu0 0.0
    %243 = vmatpush1.msra.mxu0 0.0
    %244 = vmatprep.subr.mxu0 0.0
    %245 = vmatpush1.msra.mxu0 0.0
    %246 = vmatprep.subr.mxu0 0.0
    %247 = vmatpush1.msra.mxu0 0.0
    %248 = vmatprep.mubr.f32.mxu0 0.0
    %249 = vmatmul.mubr.f32.gmra.mrb[0].mxu0 %v182
    %v250 = vpop.f32.mrb[0].mxu0
    %v251 = vadd.f32 0.0, %v250
    %v252 = vpop.f32.mrb[0].mxu0
    %253 = vdwg.mxu0
    %v254 = vmax.f32 %v251, 1e-06
    %v255 = vmin.f32 %v254, 1000000.0
    %v256 = vmax.f32 %v251, 0.0
    %vm257 = vcmp.ne.f32.partialorder %v251, %v251
    %v258 = vadd.f32 %v251, 0.0
    %v259 = vand.u32 2147483647, %v251
    %v260 = vsub.f32 0.0, %v259
    %v261 = vmul.f32 %v260, 1.442695
    %v262 = vpow.pop %v261
    %v263 = vadd.f32 %v262, 1.0
    %v264 = vlog2.pop %v263
    %v265 = vmul.f32 %v264, 0.6931472
    %v266 = vmul.f32 -0.5, %v262
    %v267 = vadd.f32 %v266, 1.0
    %v268 = vmul.f32 %v267, %v262
    %v269 = vand.u32 2147483647, %v262
    %vm270 = vcmp.lt.f32.partialorder %v269, 0.0004427343
    %v271 = vsel %vm270, %v268, %v265
    %v272 = vadd.f32 %v256, %v271
    %v273 = vsel %vm257, %v258, %v272
    %v274 = vmax.f32 %v273, 1e-06
    %v275 = vld [vmem:[#allocation7] sm:$0xf]
    %v276 = vunpack.c.l.bf16 %v275
    %278 = vrot.lane.b32.xlu0 %v274, 96
    %v279 = vpop.permute.xlu0 %278
    %v281 = vmul.f32 %v276, %v279
    %v282 = vadd.f32 %v255, %v281
    %284 = vrot.lane.b32.xlu0 %v178, 64
    %v285 = vpop.permute.xlu0 %284
    %288 = vrot.lane.b32.xlu0 %v282, 32
    %v289 = vpop.permute.xlu0 %288
    %292 = vrot.lane.b32.xlu0 %v255, 64
    %v293 = vpop.permute.xlu0 %292
    %295 = vrot.lane.b32.xlu0 %v274, 64
    %v296 = vpop.permute.xlu0 %295
    %v298 = vsel %vm106, %v285, %v289
    %vm299 = vcmask 523264
    %v300 = vsel %vm299, %v298, %v293
    %vm301 = vcmask 785408
    %v302 = vsel %vm301, %v300, %v296
    %303 = vst [vmem:[#allocation12] sm:$0xff] %v302
    %s304 = scalar_lea.vmem [#allocation4], 4
    %v305 = vld [vmem:[%s304] sm:$0xf]
    %v306 = vunpack.c.l.bf16 %v305
    %v307 = vpack.c.bf16 %v178, %v178
    %309 = vrot.lane.b32.xlu0 %v307, 64
    %v310 = vpop.permute.xlu0 %309
    %v312 = vsel %vm106, %v310, 0
    %314 = vmatprep.subr.bf16.mxu0 0
    %315 = vmatpush1.bf16.msra.mxu0 %v102
    %316 = vmatprep.subr.bf16.mxu0 0
    %317 = vmatpush1.bf16.msra.mxu0 %v103
    %318 = vmatprep.subr.bf16.mxu0 0
    %319 = vmatpush1.bf16.msra.mxu0 0
    %320 = vmatprep.subr.bf16.mxu0 0
    %321 = vmatpush1.bf16.msra.mxu0 0
    %322 = vmatprep.subr.bf16.mxu0 0
    %323 = vmatpush1.bf16.msra.mxu0 0
    %324 = vmatprep.subr.bf16.mxu0 0
    %325 = vmatpush1.bf16.msra.mxu0 0
    %326 = vmatprep.subr.bf16.mxu0 0
    %327 = vmatpush1.bf16.msra.mxu0 0
    %328 = vmatprep.subr.bf16.mxu0 0
    %329 = vmatpush1.bf16.msra.mxu0 0
    %330 = vmatprep.subr.bf16.mxu0 0
    %331 = vmatpush1.bf16.msra.mxu0 0
    %332 = vmatprep.subr.bf16.mxu0 0
    %333 = vmatpush1.bf16.msra.mxu0 0
    %334 = vmatprep.subr.bf16.mxu0 0
    %335 = vmatpush1.bf16.msra.mxu0 0
    %336 = vmatprep.subr.bf16.mxu0 0
    %337 = vmatpush1.bf16.msra.mxu0 0
    %338 = vmatprep.subr.bf16.mxu0 0
    %339 = vmatpush1.bf16.msra.mxu0 0
    %340 = vmatprep.subr.bf16.mxu0 0
    %341 = vmatpush1.bf16.msra.mxu0 0
    %342 = vmatprep.subr.bf16.mxu0 0
    %343 = vmatpush1.bf16.msra.mxu0 0
    %344 = vmatprep.subr.bf16.mxu0 0
    %345 = vmatpush1.bf16.msra.mxu0 0
    %346 = vmatprep.mubr.bf16.mxu0 0
    %347 = vmatmul.mubr.bf16.gmra.mrb[0].mxu0 %v312
    %v348 = vpop.f32.mrb[0].mxu0
    %v349 = vadd.f32 0.0, %v348
    %v350 = vpop.f32.mrb[0].mxu0
    %v351 = vpop.f32.mrb[0].mxu0
    %v352 = vpop.f32.mrb[0].mxu0
    %353 = vdwg.mxu0
    %v354 = vadd.f32 %v306, %v349
    %v355 = vxor.u32 %v354, 2147483648
    %v356 = vmul.f32 %v355, 1.442695
    %v357 = vpow.pop %v356
    %v358 = vadd.f32 %v357, 1.0
    %v359 = vrcp.pop %v358
    %v360 = vmul.f32 1.0, %v359
    %v361 = vtanh.pop %v354
    %v362 = vmul.f32 %v360, %v289
    %364 = vrot.lane.b32.xlu0 %v361, 32
    %v365 = vpop.permute.xlu0 %364
    %v367 = vmul.f32 %v360, %v365
    %369 = vrot.lane.b32.xlu0 %v367, 32
    %v370 = vpop.permute.xlu0 %369
    %v372 = vadd.f32 %v362, %v370
    %v373 = vtanh.pop %v282
    %375 = vrot.lane.b32.xlu0 %v373, 64
    %v376 = vpop.permute.xlu0 %375
    %v378 = vmul.f32 %v360, %v376
    %380 = vrot.lane.b32.xlu0 %v372, 96
    %v381 = vpop.permute.xlu0 %380
    %v382 = vsel %vm106, %v381, 0
    %384 = vmatprep.subr.mxu0 0.0
    %385 = vmatpush1.msra.mxu0 %v85
    %386 = vmatprep.subr.mxu0 0.0
    %387 = vmatpush1.msra.mxu0 %v86
    %388 = vmatprep.subr.mxu0 0.0
    %389 = vmatpush1.msra.mxu0 %v87
    %390 = vmatprep.subr.mxu0 0.0
    %391 = vmatpush1.msra.mxu0 %v88
    %392 = vmatprep.subr.mxu0 0.0
    %393 = vmatpush1.msra.mxu0 0.0
    %394 = vmatprep.subr.mxu0 0.0
    %395 = vmatpush1.msra.mxu0 0.0
    %396 = vmatprep.subr.mxu0 0.0
    %397 = vmatpush1.msra.mxu0 0.0
    %398 = vmatprep.subr.mxu0 0.0
    %399 = vmatpush1.msra.mxu0 0.0
    %400 = vmatprep.subr.mxu0 0.0
    %401 = vmatpush1.msra.mxu0 0.0
    %402 = vmatprep.subr.mxu0 0.0
    %403 = vmatpush1.msra.mxu0 0.0
    %404 = vmatprep.subr.mxu0 0.0
    %405 = vmatpush1.msra.mxu0 0.0
    %406 = vmatprep.subr.mxu0 0.0
    %407 = vmatpush1.msra.mxu0 0.0
    %408 = vmatprep.subr.mxu0 0.0
    %409 = vmatpush1.msra.mxu0 0.0
    %410 = vmatprep.subr.mxu0 0.0
    %411 = vmatpush1.msra.mxu0 0.0
    %412 = vmatprep.subr.mxu0 0.0
    %413 = vmatpush1.msra.mxu0 0.0
    %414 = vmatprep.subr.mxu0 0.0
    %415 = vmatpush1.msra.mxu0 0.0
    %416 = vmatprep.subr.mxu0 0.0
    %417 = vmatpush1.msra.mxu0 0.0
    %418 = vmatprep.subr.mxu0 0.0
    %419 = vmatpush1.msra.mxu0 0.0
    %420 = vmatprep.subr.mxu0 0.0
    %421 = vmatpush1.msra.mxu0 0.0
    %422 = vmatprep.subr.mxu0 0.0
    %423 = vmatpush1.msra.mxu0 0.0
    %424 = vmatprep.subr.mxu0 0.0
    %425 = vmatpush1.msra.mxu0 0.0
    %426 = vmatprep.subr.mxu0 0.0
    %427 = vmatpush1.msra.mxu0 0.0
    %428 = vmatprep.subr.mxu0 0.0
    %429 = vmatpush1.msra.mxu0 0.0
    %430 = vmatprep.subr.mxu0 0.0
    %431 = vmatpush1.msra.mxu0 0.0
    %432 = vmatprep.subr.mxu0 0.0
    %433 = vmatpush1.msra.mxu0 0.0
    %434 = vmatprep.subr.mxu0 0.0
    %435 = vmatpush1.msra.mxu0 0.0
    %436 = vmatprep.subr.mxu0 0.0
    %437 = vmatpush1.msra.mxu0 0.0
    %438 = vmatprep.subr.mxu0 0.0
    %439 = vmatpush1.msra.mxu0 0.0
    %440 = vmatprep.subr.mxu0 0.0
    %441 = vmatpush1.msra.mxu0 0.0
    %442 = vmatprep.subr.mxu0 0.0
    %443 = vmatpush1.msra.mxu0 0.0
    %444 = vmatprep.subr.mxu0 0.0
    %445 = vmatpush1.msra.mxu0 0.0
    %446 = vmatprep.subr.mxu0 0.0
    %447 = vmatpush1.msra.mxu0 0.0
    %448 = vmatprep.mubr.f32.mxu0 0.0
    %449 = vmatmul.mubr.f32.gmra.mrb[0].mxu0 %v382
    %v450 = vpop.f32.mrb[0].mxu0
    %v451 = vadd.f32 0.0, %v450
    %v452 = vpop.f32.mrb[0].mxu0
    %453 = vdwg.mxu0
    %v454 = vmax.f32 %v451, 1e-06
    %v455 = vmin.f32 %v454, 1000000.0
    %v456 = vmax.f32 %v451, 0.0
    %vm457 = vcmp.ne.f32.partialorder %v451, %v451
    %v458 = vadd.f32 %v451, 0.0
    %v459 = vand.u32 2147483647, %v451
    %v460 = vsub.f32 0.0, %v459
    %v461 = vmul.f32 %v460, 1.442695
    %v462 = vpow.pop %v461
    %v463 = vadd.f32 %v462, 1.0
    %v464 = vlog2.pop %v463
    %v465 = vmul.f32 %v464, 0.6931472
    %v466 = vmul.f32 -0.5, %v462
    %v467 = vadd.f32 %v466, 1.0
    %v468 = vmul.f32 %v467, %v462
    %v469 = vand.u32 2147483647, %v462
    %vm470 = vcmp.lt.f32.partialorder %v469, 0.0004427343
    %v471 = vsel %vm470, %v468, %v465
    %v472 = vadd.f32 %v456, %v471
    %v473 = vsel %vm457, %v458, %v472
    %v474 = vmax.f32 %v473, 1e-06
    %s475 = scalar_lea.vmem [#allocation7], 4
    %v476 = vld [vmem:[%s475] sm:$0xf]
    %v477 = vunpack.c.l.bf16 %v476
    %479 = vrot.lane.b32.xlu0 %v474, 96
    %v480 = vpop.permute.xlu0 %479
    %v482 = vmul.f32 %v477, %v480
    %v483 = vadd.f32 %v455, %v482
    %485 = vrot.lane.b32.xlu0 %v378, 64
    %v486 = vpop.permute.xlu0 %485
    %489 = vrot.lane.b32.xlu0 %v483, 32
    %v490 = vpop.permute.xlu0 %489
    %493 = vrot.lane.b32.xlu0 %v455, 64
    %v494 = vpop.permute.xlu0 %493
    %496 = vrot.lane.b32.xlu0 %v474, 64
    %v497 = vpop.permute.xlu0 %496
    %v499 = vsel %vm106, %v486, %v490
    %v500 = vsel %vm299, %v499, %v494
    %v501 = vsel %vm301, %v500, %v497
    %s502 = scalar_lea.vmem [#allocation12], 8
    %503 = vst [vmem:[%s502] sm:$0xff] %v501
    %s504 = scalar_lea.vmem [#allocation4], 8
    %v505 = vld [vmem:[%s504] sm:$0xf]
    %v506 = vunpack.c.l.bf16 %v505
    %v507 = vpack.c.bf16 %v378, %v378
    %509 = vrot.lane.b32.xlu0 %v507, 64
    %v510 = vpop.permute.xlu0 %509
    %v512 = vsel %vm106, %v510, 0
    %514 = vmatprep.subr.bf16.mxu0 0
    %515 = vmatpush1.bf16.msra.mxu0 %v102
    %516 = vmatprep.subr.bf16.mxu0 0
    %517 = vmatpush1.bf16.msra.mxu0 %v103
    %518 = vmatprep.subr.bf16.mxu0 0
    %519 = vmatpush1.bf16.msra.mxu0 0
    %520 = vmatprep.subr.bf16.mxu0 0
    %521 = vmatpush1.bf16.msra.mxu0 0
    %522 = vmatprep.subr.bf16.mxu0 0
    %523 = vmatpush1.bf16.msra.mxu0 0
    %524 = vmatprep.subr.bf16.mxu0 0
    %525 = vmatpush1.bf16.msra.mxu0 0
    %526 = vmatprep.subr.bf16.mxu0 0
    %527 = vmatpush1.bf16.msra.mxu0 0
    %528 = vmatprep.subr.bf16.mxu0 0
    %529 = vmatpush1.bf16.msra.mxu0 0
    %530 = vmatprep.subr.bf16.mxu0 0
    %531 = vmatpush1.bf16.msra.mxu0 0
    %532 = vmatprep.subr.bf16.mxu0 0
    %533 = vmatpush1.bf16.msra.mxu0 0
    %534 = vmatprep.subr.bf16.mxu0 0
    %535 = vmatpush1.bf16.msra.mxu0 0
    %536 = vmatprep.subr.bf16.mxu0 0
    %537 = vmatpush1.bf16.msra.mxu0 0
    %538 = vmatprep.subr.bf16.mxu0 0
    %539 = vmatpush1.bf16.msra.mxu0 0
    %540 = vmatprep.subr.bf16.mxu0 0
    %541 = vmatpush1.bf16.msra.mxu0 0
    %542 = vmatprep.subr.bf16.mxu0 0
    %543 = vmatpush1.bf16.msra.mxu0 0
    %544 = vmatprep.subr.bf16.mxu0 0
    %545 = vmatpush1.bf16.msra.mxu0 0
    %546 = vmatprep.mubr.bf16.mxu0 0
    %547 = vmatmul.mubr.bf16.gmra.mrb[0].mxu0 %v512
    %v548 = vpop.f32.mrb[0].mxu0
    %v549 = vadd.f32 0.0, %v548
    %v550 = vpop.f32.mrb[0].mxu0
    %v551 = vpop.f32.mrb[0].mxu0
    %v552 = vpop.f32.mrb[0].mxu0
    %553 = vdwg.mxu0
    %v554 = vadd.f32 %v506, %v549
    %v555 = vxor.u32 %v554, 2147483648
    %v556 = vmul.f32 %v555, 1.442695
    %v557 = vpow.pop %v556
    %v558 = vadd.f32 %v557, 1.0
    %v559 = vrcp.pop %v558
    %v560 = vmul.f32 1.0, %v559
    %v561 = vtanh.pop %v554
    %v562 = vmul.f32 %v560, %v490
    %564 = vrot.lane.b32.xlu0 %v561, 32
    %v565 = vpop.permute.xlu0 %564
    %v567 = vmul.f32 %v560, %v565
    %569 = vrot.lane.b32.xlu0 %v567, 32
    %v570 = vpop.permute.xlu0 %569
    %v572 = vadd.f32 %v562, %v570
    %v573 = vtanh.pop %v483
    %575 = vrot.lane.b32.xlu0 %v573, 64
    %v576 = vpop.permute.xlu0 %575
    %v578 = vmul.f32 %v560, %v576
    %580 = vrot.lane.b32.xlu0 %v572, 96
    %v581 = vpop.permute.xlu0 %580
    %v582 = vsel %vm106, %v581, 0
    %584 = vmatprep.subr.mxu0 0.0
    %585 = vmatpush1.msra.mxu0 %v85
    %586 = vmatprep.subr.mxu0 0.0
    %587 = vmatpush1.msra.mxu0 %v86
    %588 = vmatprep.subr.mxu0 0.0
    %589 = vmatpush1.msra.mxu0 %v87
    %590 = vmatprep.subr.mxu0 0.0
    %591 = vmatpush1.msra.mxu0 %v88
    %592 = vmatprep.subr.mxu0 0.0
    %593 = vmatpush1.msra.mxu0 0.0
    %594 = vmatprep.subr.mxu0 0.0
    %595 = vmatpush1.msra.mxu0 0.0
    %596 = vmatprep.subr.mxu0 0.0
    %597 = vmatpush1.msra.mxu0 0.0
    %598 = vmatprep.subr.mxu0 0.0
    %599 = vmatpush1.msra.mxu0 0.0
    %600 = vmatprep.subr.mxu0 0.0
    %601 = vmatpush1.msra.mxu0 0.0
    %602 = vmatprep.subr.mxu0 0.0
    %603 = vmatpush1.msra.mxu0 0.0
    %604 = vmatprep.subr.mxu0 0.0
    %605 = vmatpush1.msra.mxu0 0.0
    %606 = vmatprep.subr.mxu0 0.0
    %607 = vmatpush1.msra.mxu0 0.0
    %608 = vmatprep.subr.mxu0 0.0
    %609 = vmatpush1.msra.mxu0 0.0
    %610 = vmatprep.subr.mxu0 0.0
    %611 = vmatpush1.msra.mxu0 0.0
    %612 = vmatprep.subr.mxu0 0.0
    %613 = vmatpush1.msra.mxu0 0.0
    %614 = vmatprep.subr.mxu0 0.0
    %615 = vmatpush1.msra.mxu0 0.0
    %616 = vmatprep.subr.mxu0 0.0
    %617 = vmatpush1.msra.mxu0 0.0
    %618 = vmatprep.subr.mxu0 0.0
    %619 = vmatpush1.msra.mxu0 0.0
    %620 = vmatprep.subr.mxu0 0.0
    %621 = vmatpush1.msra.mxu0 0.0
    %622 = vmatprep.subr.mxu0 0.0
    %623 = vmatpush1.msra.mxu0 0.0
    %624 = vmatprep.subr.mxu0 0.0
    %625 = vmatpush1.msra.mxu0 0.0
    %626 = vmatprep.subr.mxu0 0.0
    %627 = vmatpush1.msra.mxu0 0.0
    %628 = vmatprep.subr.mxu0 0.0
    %629 = vmatpush1.msra.mxu0 0.0
    %630 = vmatprep.subr.mxu0 0.0
    %631 = vmatpush1.msra.mxu0 0.0
    %632 = vmatprep.subr.mxu0 0.0
    %633 = vmatpush1.msra.mxu0 0.0
    %634 = vmatprep.subr.mxu0 0.0
    %635 = vmatpush1.msra.mxu0 0.0
    %636 = vmatprep.subr.mxu0 0.0
    %637 = vmatpush1.msra.mxu0 0.0
    %638 = vmatprep.subr.mxu0 0.0
    %639 = vmatpush1.msra.mxu0 0.0
    %640 = vmatprep.subr.mxu0 0.0
    %641 = vmatpush1.msra.mxu0 0.0
    %642 = vmatprep.subr.mxu0 0.0
    %643 = vmatpush1.msra.mxu0 0.0
    %644 = vmatprep.subr.mxu0 0.0
    %645 = vmatpush1.msra.mxu0 0.0
    %646 = vmatprep.subr.mxu0 0.0
    %647 = vmatpush1.msra.mxu0 0.0
    %648 = vmatprep.mubr.f32.mxu0 0.0
    %649 = vmatmul.mubr.f32.gmra.mrb[0].mxu0 %v582
    %v650 = vpop.f32.mrb[0].mxu0
    %v651 = vadd.f32 0.0, %v650
    %v652 = vpop.f32.mrb[0].mxu0
    %653 = vdwg.mxu0
    %v654 = vmax.f32 %v651, 1e-06
    %v655 = vmin.f32 %v654, 1000000.0
    %v656 = vmax.f32 %v651, 0.0
    %vm657 = vcmp.ne.f32.partialorder %v651, %v651
    %v658 = vadd.f32 %v651, 0.0
    %v659 = vand.u32 2147483647, %v651
    %v660 = vsub.f32 0.0, %v659
    %v661 = vmul.f32 %v660, 1.442695
    %v662 = vpow.pop %v661
    %v663 = vadd.f32 %v662, 1.0
    %v664 = vlog2.pop %v663
    %v665 = vmul.f32 %v664, 0.6931472
    %v666 = vmul.f32 -0.5, %v662
    %v667 = vadd.f32 %v666, 1.0
    %v668 = vmul.f32 %v667, %v662
    %v669 = vand.u32 2147483647, %v662
    %vm670 = vcmp.lt.f32.partialorder %v669, 0.0004427343
    %v671 = vsel %vm670, %v668, %v665
    %v672 = vadd.f32 %v656, %v671
    %v673 = vsel %vm657, %v658, %v672
    %v674 = vmax.f32 %v673, 1e-06
    %s675 = scalar_lea.vmem [#allocation7], 8
    %v676 = vld [vmem:[%s675] sm:$0xf]
    %v677 = vunpack.c.l.bf16 %v676
    %679 = vrot.lane.b32.xlu0 %v674, 96
    %v680 = vpop.permute.xlu0 %679
    %v682 = vmul.f32 %v677, %v680
    %v683 = vadd.f32 %v655, %v682
    %685 = vrot.lane.b32.xlu0 %v578, 64
    %v686 = vpop.permute.xlu0 %685
    %689 = vrot.lane.b32.xlu0 %v683, 32
    %v690 = vpop.permute.xlu0 %689
    %693 = vrot.lane.b32.xlu0 %v655, 64
    %v694 = vpop.permute.xlu0 %693
    %696 = vrot.lane.b32.xlu0 %v674, 64
    %v697 = vpop.permute.xlu0 %696
    %v699 = vsel %vm106, %v686, %v690
    %v700 = vsel %vm299, %v699, %v694
    %v701 = vsel %vm301, %v700, %v697
    %s702 = scalar_lea.vmem [#allocation12], 16
    %703 = vst [vmem:[%s702] sm:$0xff] %v701
    %s704 = scalar_lea.vmem [#allocation4], 12
    %v705 = vld [vmem:[%s704] sm:$0xf]
    %v706 = vunpack.c.l.bf16 %v705
    %v707 = vpack.c.bf16 %v578, %v578
    %709 = vrot.lane.b32.xlu0 %v707, 64
    %v710 = vpop.permute.xlu0 %709
    %v712 = vsel %vm106, %v710, 0
    %714 = vmatprep.subr.bf16.mxu0 0
    %715 = vmatpush1.bf16.msra.mxu0 %v102
    %716 = vmatprep.subr.bf16.mxu0 0
    %717 = vmatpush1.bf16.msra.mxu0 %v103
    %718 = vmatprep.subr.bf16.mxu0 0
    %719 = vmatpush1.bf16.msra.mxu0 0
    %720 = vmatprep.subr.bf16.mxu0 0
    %721 = vmatpush1.bf16.msra.mxu0 0
    %722 = vmatprep.subr.bf16.mxu0 0
    %723 = vmatpush1.bf16.msra.mxu0 0
    %724 = vmatprep.subr.bf16.mxu0 0
    %725 = vmatpush1.bf16.msra.mxu0 0
    %726 = vmatprep.subr.bf16.mxu0 0
    %727 = vmatpush1.bf16.msra.mxu0 0
    %728 = vmatprep.subr.bf16.mxu0 0
    %729 = vmatpush1.bf16.msra.mxu0 0
    %730 = vmatprep.subr.bf16.mxu0 0
    %731 = vmatpush1.bf16.msra.mxu0 0
    %732 = vmatprep.subr.bf16.mxu0 0
    %733 = vmatpush1.bf16.msra.mxu0 0
    %734 = vmatprep.subr.bf16.mxu0 0
    %735 = vmatpush1.bf16.msra.mxu0 0
    %736 = vmatprep.subr.bf16.mxu0 0
    %737 = vmatpush1.bf16.msra.mxu0 0
    %738 = vmatprep.subr.bf16.mxu0 0
    %739 = vmatpush1.bf16.msra.mxu0 0
    %740 = vmatprep.subr.bf16.mxu0 0
    %741 = vmatpush1.bf16.msra.mxu0 0
    %742 = vmatprep.subr.bf16.mxu0 0
    %743 = vmatpush1.bf16.msra.mxu0 0
    %744 = vmatprep.subr.bf16.mxu0 0
    %745 = vmatpush1.bf16.msra.mxu0 0
    %746 = vmatprep.mubr.bf16.mxu0 0
    %747 = vmatmul.mubr.bf16.gmra.mrb[0].mxu0 %v712
    %v748 = vpop.f32.mrb[0].mxu0
    %v749 = vadd.f32 0.0, %v748
    %v750 = vpop.f32.mrb[0].mxu0
    %v751 = vpop.f32.mrb[0].mxu0
    %v752 = vpop.f32.mrb[0].mxu0
    %753 = vdwg.mxu0
    %v754 = vadd.f32 %v706, %v749
    %v755 = vxor.u32 %v754, 2147483648
    %v756 = vmul.f32 %v755, 1.442695
    %v757 = vpow.pop %v756
    %v758 = vadd.f32 %v757, 1.0
    %v759 = vrcp.pop %v758
    %v760 = vmul.f32 1.0, %v759
    %v761 = vtanh.pop %v754
    %v762 = vmul.f32 %v760, %v690
    %764 = vrot.lane.b32.xlu0 %v761, 32
    %v765 = vpop.permute.xlu0 %764
    %v767 = vmul.f32 %v760, %v765
    %769 = vrot.lane.b32.xlu0 %v767, 32
    %v770 = vpop.permute.xlu0 %769
    %v772 = vadd.f32 %v762, %v770
    %v773 = vtanh.pop %v683
    %775 = vrot.lane.b32.xlu0 %v773, 64
    %v776 = vpop.permute.xlu0 %775
    %v778 = vmul.f32 %v760, %v776
    %780 = vrot.lane.b32.xlu0 %v772, 96
    %v781 = vpop.permute.xlu0 %780
    %v782 = vsel %vm106, %v781, 0
    %784 = vmatprep.subr.mxu0 0.0
    %785 = vmatpush1.msra.mxu0 %v85
    %786 = vmatprep.subr.mxu0 0.0
    %787 = vmatpush1.msra.mxu0 %v86
    %788 = vmatprep.subr.mxu0 0.0
    %789 = vmatpush1.msra.mxu0 %v87
    %790 = vmatprep.subr.mxu0 0.0
    %791 = vmatpush1.msra.mxu0 %v88
    %792 = vmatprep.subr.mxu0 0.0
    %793 = vmatpush1.msra.mxu0 0.0
    %794 = vmatprep.subr.mxu0 0.0
    %795 = vmatpush1.msra.mxu0 0.0
    %796 = vmatprep.subr.mxu0 0.0
    %797 = vmatpush1.msra.mxu0 0.0
    %798 = vmatprep.subr.mxu0 0.0
    %799 = vmatpush1.msra.mxu0 0.0
    %800 = vmatprep.subr.mxu0 0.0
    %801 = vmatpush1.msra.mxu0 0.0
    %802 = vmatprep.subr.mxu0 0.0
    %803 = vmatpush1.msra.mxu0 0.0
    %804 = vmatprep.subr.mxu0 0.0
    %805 = vmatpush1.msra.mxu0 0.0
    %806 = vmatprep.subr.mxu0 0.0
    %807 = vmatpush1.msra.mxu0 0.0
    %808 = vmatprep.subr.mxu0 0.0
    %809 = vmatpush1.msra.mxu0 0.0
    %810 = vmatprep.subr.mxu0 0.0
    %811 = vmatpush1.msra.mxu0 0.0
    %812 = vmatprep.subr.mxu0 0.0
    %813 = vmatpush1.msra.mxu0 0.0
    %814 = vmatprep.subr.mxu0 0.0
    %815 = vmatpush1.msra.mxu0 0.0
    %816 = vmatprep.subr.mxu0 0.0
    %817 = vmatpush1.msra.mxu0 0.0
    %818 = vmatprep.subr.mxu0 0.0
    %819 = vmatpush1.msra.mxu0 0.0
    %820 = vmatprep.subr.mxu0 0.0
    %821 = vmatpush1.msra.mxu0 0.0
    %822 = vmatprep.subr.mxu0 0.0
    %823 = vmatpush1.msra.mxu0 0.0
    %824 = vmatprep.subr.mxu0 0.0
    %825 = vmatpush1.msra.mxu0 0.0
    %826 = vmatprep.subr.mxu0 0.0
    %827 = vmatpush1.msra.mxu0 0.0
    %828 = vmatprep.subr.mxu0 0.0
    %829 = vmatpush1.msra.mxu0 0.0
    %830 = vmatprep.subr.mxu0 0.0
    %831 = vmatpush1.msra.mxu0 0.0
    %832 = vmatprep.subr.mxu0 0.0
    %833 = vmatpush1.msra.mxu0 0.0
    %834 = vmatprep.subr.mxu0 0.0
    %835 = vmatpush1.msra.mxu0 0.0
    %836 = vmatprep.subr.mxu0 0.0
    %837 = vmatpush1.msra.mxu0 0.0
    %838 = vmatprep.subr.mxu0 0.0
    %839 = vmatpush1.msra.mxu0 0.0
    %840 = vmatprep.subr.mxu0 0.0
    %841 = vmatpush1.msra.mxu0 0.0
    %842 = vmatprep.subr.mxu0 0.0
    %843 = vmatpush1.msra.mxu0 0.0
    %844 = vmatprep.subr.mxu0 0.0
    %845 = vmatpush1.msra.mxu0 0.0
    %846 = vmatprep.subr.mxu0 0.0
    %847 = vmatpush1.msra.mxu0 0.0
    %848 = vmatprep.mubr.f32.mxu0 0.0
    %849 = vmatmul.mubr.f32.gmra.mrb[0].mxu0 %v782
    %v850 = vpop.f32.mrb[0].mxu0
    %v851 = vadd.f32 0.0, %v850
    %v852 = vpop.f32.mrb[0].mxu0
    %853 = vdwg.mxu0
    %v854 = vmax.f32 %v851, 1e-06
    %v855 = vmin.f32 %v854, 1000000.0
    %v856 = vmax.f32 %v851, 0.0
    %vm857 = vcmp.ne.f32.partialorder %v851, %v851
    %v858 = vadd.f32 %v851, 0.0
    %v859 = vand.u32 2147483647, %v851
    %v860 = vsub.f32 0.0, %v859
    %v861 = vmul.f32 %v860, 1.442695
    %v862 = vpow.pop %v861
    %v863 = vadd.f32 %v862, 1.0
    %v864 = vlog2.pop %v863
    %v865 = vmul.f32 %v864, 0.6931472
    %v866 = vmul.f32 -0.5, %v862
    %v867 = vadd.f32 %v866, 1.0
    %v868 = vmul.f32 %v867, %v862
    %v869 = vand.u32 2147483647, %v862
    %vm870 = vcmp.lt.f32.partialorder %v869, 0.0004427343
    %v871 = vsel %vm870, %v868, %v865
    %v872 = vadd.f32 %v856, %v871
    %v873 = vsel %vm857, %v858, %v872
    %v874 = vmax.f32 %v873, 1e-06
    %s875 = scalar_lea.vmem [#allocation7], 12
    %v876 = vld [vmem:[%s875] sm:$0xf]
    %v877 = vunpack.c.l.bf16 %v876
    %879 = vrot.lane.b32.xlu0 %v874, 96
    %v880 = vpop.permute.xlu0 %879
    %v882 = vmul.f32 %v877, %v880
    %v883 = vadd.f32 %v855, %v882
    %885 = vrot.lane.b32.xlu0 %v778, 64
    %v886 = vpop.permute.xlu0 %885
    %889 = vrot.lane.b32.xlu0 %v883, 32
    %v890 = vpop.permute.xlu0 %889
    %893 = vrot.lane.b32.xlu0 %v855, 64
    %v894 = vpop.permute.xlu0 %893
    %896 = vrot.lane.b32.xlu0 %v874, 64
    %v897 = vpop.permute.xlu0 %896
    %v899 = vsel %vm106, %v886, %v890
    %v900 = vsel %vm299, %v899, %v894
    %v901 = vsel %vm301, %v900, %v897
    %s902 = scalar_lea.vmem [#allocation12], 24
    %903 = vst [vmem:[%s902] sm:$0xff] %v901
    %s904 = scalar_lea.vmem [#allocation4], 16
    %v905 = vld [vmem:[%s904] sm:$0xf]
    %v906 = vunpack.c.l.bf16 %v905
    %v907 = vpack.c.bf16 %v778, %v778
    %909 = vrot.lane.b32.xlu0 %v907, 64
    %v910 = vpop.permute.xlu0 %909
    %v912 = vsel %vm106, %v910, 0
    %914 = vmatprep.subr.bf16.mxu0 0
    %915 = vmatpush1.bf16.msra.mxu0 %v102
    %916 = vmatprep.subr.bf16.mxu0 0
    %917 = vmatpush1.bf16.msra.mxu0 %v103
    %918 = vmatprep.subr.bf16.mxu0 0
    %919 = vmatpush1.bf16.msra.mxu0 0
    %920 = vmatprep.subr.bf16.mxu0 0
    %921 = vmatpush1.bf16.msra.mxu0 0
    %922 = vmatprep.subr.bf16.mxu0 0
    %923 = vmatpush1.bf16.msra.mxu0 0
    %924 = vmatprep.subr.bf16.mxu0 0
    %925 = vmatpush1.bf16.msra.mxu0 0
    %926 = vmatprep.subr.bf16.mxu0 0
    %927 = vmatpush1.bf16.msra.mxu0 0
    %928 = vmatprep.subr.bf16.mxu0 0
    %929 = vmatpush1.bf16.msra.mxu0 0
    %930 = vmatprep.subr.bf16.mxu0 0
    %931 = vmatpush1.bf16.msra.mxu0 0
    %932 = vmatprep.subr.bf16.mxu0 0
    %933 = vmatpush1.bf16.msra.mxu0 0
    %934 = vmatprep.subr.bf16.mxu0 0
    %935 = vmatpush1.bf16.msra.mxu0 0
    %936 = vmatprep.subr.bf16.mxu0 0
    %937 = vmatpush1.bf16.msra.mxu0 0
    %938 = vmatprep.subr.bf16.mxu0 0
    %939 = vmatpush1.bf16.msra.mxu0 0
    %940 = vmatprep.subr.bf16.mxu0 0
    %941 = vmatpush1.bf16.msra.mxu0 0
    %942 = vmatprep.subr.bf16.mxu0 0
    %943 = vmatpush1.bf16.msra.mxu0 0
    %944 = vmatprep.subr.bf16.mxu0 0
    %945 = vmatpush1.bf16.msra.mxu0 0
    %946 = vmatprep.mubr.bf16.mxu0 0
    %947 = vmatmul.mubr.bf16.gmra.mrb[0].mxu0 %v912
    %v948 = vpop.f32.mrb[0].mxu0
    %v949 = vadd.f32 0.0, %v948
    %v950 = vpop.f32.mrb[0].mxu0
    %v951 = vpop.f32.mrb[0].mxu0
    %v952 = vpop.f32.mrb[0].mxu0
    %953 = vdwg.mxu0
    %v954 = vadd.f32 %v906, %v949
    %v955 = vxor.u32 %v954, 2147483648
    %v956 = vmul.f32 %v955, 1.442695
    %v957 = vpow.pop %v956
    %v958 = vadd.f32 %v957, 1.0
    %v959 = vrcp.pop %v958
    %v960 = vmul.f32 1.0, %v959
    %v961 = vtanh.pop %v954
    %v962 = vmul.f32 %v960, %v890
    %964 = vrot.lane.b32.xlu0 %v961, 32
    %v965 = vpop.permute.xlu0 %964
    %v967 = vmul.f32 %v960, %v965
    %969 = vrot.lane.b32.xlu0 %v967, 32
    %v970 = vpop.permute.xlu0 %969
    %v972 = vadd.f32 %v962, %v970
    %v973 = vtanh.pop %v883
    %975 = vrot.lane.b32.xlu0 %v973, 64
    %v976 = vpop.permute.xlu0 %975
    %v978 = vmul.f32 %v960, %v976
    %980 = vrot.lane.b32.xlu0 %v972, 96
    %v981 = vpop.permute.xlu0 %980
    %v982 = vsel %vm106, %v981, 0
    %984 = vmatprep.subr.mxu0 0.0
    %985 = vmatpush1.msra.mxu0 %v85
    %986 = vmatprep.subr.mxu0 0.0
    %987 = vmatpush1.msra.mxu0 %v86
    %988 = vmatprep.subr.mxu0 0.0
    %989 = vmatpush1.msra.mxu0 %v87
    %990 = vmatprep.subr.mxu0 0.0
    %991 = vmatpush1.msra.mxu0 %v88
    %992 = vmatprep.subr.mxu0 0.0
    %993 = vmatpush1.msra.mxu0 0.0
    %994 = vmatprep.subr.mxu0 0.0
    %995 = vmatpush1.msra.mxu0 0.0
    %996 = vmatprep.subr.mxu0 0.0
    %997 = vmatpush1.msra.mxu0 0.0
    %998 = vmatprep.subr.mxu0 0.0
    %999 = vmatpush1.msra.mxu0 0.0
    %1000 = vmatprep.subr.mxu0 0.0
    %1001 = vmatpush1.msra.mxu0 0.0
    %1002 = vmatprep.subr.mxu0 0.0
    %1003 = vmatpush1.msra.mxu0 0.0
    %1004 = vmatprep.subr.mxu0 0.0
    %1005 = vmatpush1.msra.mxu0 0.0
    %1006 = vmatprep.subr.mxu0 0.0
    %1007 = vmatpush1.msra.mxu0 0.0
    %1008 = vmatprep.subr.mxu0 0.0
    %1009 = vmatpush1.msra.mxu0 0.0
    %1010 = vmatprep.subr.mxu0 0.0
    %1011 = vmatpush1.msra.mxu0 0.0
    %1012 = vmatprep.subr.mxu0 0.0
    %1013 = vmatpush1.msra.mxu0 0.0
    %1014 = vmatprep.subr.mxu0 0.0
    %1015 = vmatpush1.msra.mxu0 0.0
    %1016 = vmatprep.subr.mxu0 0.0
    %1017 = vmatpush1.msra.mxu0 0.0
    %1018 = vmatprep.subr.mxu0 0.0
    %1019 = vmatpush1.msra.mxu0 0.0
    %1020 = vmatprep.subr.mxu0 0.0
    %1021 = vmatpush1.msra.mxu0 0.0
    %1022 = vmatprep.subr.mxu0 0.0
    %1023 = vmatpush1.msra.mxu0 0.0
    %1024 = vmatprep.subr.mxu0 0.0
    %1025 = vmatpush1.msra.mxu0 0.0
    %1026 = vmatprep.subr.mxu0 0.0
    %1027 = vmatpush1.msra.mxu0 0.0
    %1028 = vmatprep.subr.mxu0 0.0
    %1029 = vmatpush1.msra.mxu0 0.0
    %1030 = vmatprep.subr.mxu0 0.0
    %1031 = vmatpush1.msra.mxu0 0.0
    %1032 = vmatprep.subr.mxu0 0.0
    %1033 = vmatpush1.msra.mxu0 0.0
    %1034 = vmatprep.subr.mxu0 0.0
    %1035 = vmatpush1.msra.mxu0 0.0
    %1036 = vmatprep.subr.mxu0 0.0
    %1037 = vmatpush1.msra.mxu0 0.0
    %1038 = vmatprep.subr.mxu0 0.0
    %1039 = vmatpush1.msra.mxu0 0.0
    %1040 = vmatprep.subr.mxu0 0.0
    %1041 = vmatpush1.msra.mxu0 0.0
    %1042 = vmatprep.subr.mxu0 0.0
    %1043 = vmatpush1.msra.mxu0 0.0
    %1044 = vmatprep.subr.mxu0 0.0
    %1045 = vmatpush1.msra.mxu0 0.0
    %1046 = vmatprep.subr.mxu0 0.0
    %1047 = vmatpush1.msra.mxu0 0.0
    %1048 = vmatprep.mubr.f32.mxu0 0.0
    %1049 = vmatmul.mubr.f32.gmra.mrb[0].mxu0 %v982
    %v1050 = vpop.f32.mrb[0].mxu0
    %v1051 = vadd.f32 0.0, %v1050
    %v1052 = vpop.f32.mrb[0].mxu0
    %1053 = vdwg.mxu0
    %v1054 = vmax.f32 %v1051, 1e-06
    %v1055 = vmin.f32 %v1054, 1000000.0
    %v1056 = vmax.f32 %v1051, 0.0
    %vm1057 = vcmp.ne.f32.partialorder %v1051, %v1051
    %v1058 = vadd.f32 %v1051, 0.0
    %v1059 = vand.u32 2147483647, %v1051
    %v1060 = vsub.f32 0.0, %v1059
    %v1061 = vmul.f32 %v1060, 1.442695
    %v1062 = vpow.pop %v1061
    %v1063 = vadd.f32 %v1062, 1.0
    %v1064 = vlog2.pop %v1063
    %v1065 = vmul.f32 %v1064, 0.6931472
    %v1066 = vmul.f32 -0.5, %v1062
    %v1067 = vadd.f32 %v1066, 1.0
    %v1068 = vmul.f32 %v1067, %v1062
    %v1069 = vand.u32 2147483647, %v1062
    %vm1070 = vcmp.lt.f32.partialorder %v1069, 0.0004427343
    %v1071 = vsel %vm1070, %v1068, %v1065
    %v1072 = vadd.f32 %v1056, %v1071
    %v1073 = vsel %vm1057, %v1058, %v1072
    %v1074 = vmax.f32 %v1073, 1e-06
    %s1075 = scalar_lea.vmem [#allocation7], 16
    %v1076 = vld [vmem:[%s1075] sm:$0xf]
    %v1077 = vunpack.c.l.bf16 %v1076
    %1079 = vrot.lane.b32.xlu0 %v1074, 96
    %v1080 = vpop.permute.xlu0 %1079
    %v1082 = vmul.f32 %v1077, %v1080
    %v1083 = vadd.f32 %v1055, %v1082
    %1085 = vrot.lane.b32.xlu0 %v978, 64
    %v1086 = vpop.permute.xlu0 %1085
    %1089 = vrot.lane.b32.xlu0 %v1083, 32
    %v1090 = vpop.permute.xlu0 %1089
    %1093 = vrot.lane.b32.xlu0 %v1055, 64
    %v1094 = vpop.permute.xlu0 %1093
    %1096 = vrot.lane.b32.xlu0 %v1074, 64
    %v1097 = vpop.permute.xlu0 %1096
    %v1099 = vsel %vm106, %v1086, %v1090
    %v1100 = vsel %vm299, %v1099, %v1094
    %v1101 = vsel %vm301, %v1100, %v1097
    %s1102 = scalar_lea.vmem [#allocation12], 32
    %1103 = vst [vmem:[%s1102] sm:$0xff] %v1101
    %s1104 = scalar_lea.vmem [#allocation4], 20
    %v1105 = vld [vmem:[%s1104] sm:$0xf]
    %v1106 = vunpack.c.l.bf16 %v1105
    %v1107 = vpack.c.bf16 %v978, %v978
    %1109 = vrot.lane.b32.xlu0 %v1107, 64
    %v1110 = vpop.permute.xlu0 %1109
    %v1112 = vsel %vm106, %v1110, 0
    %1114 = vmatprep.subr.bf16.mxu0 0
    %1115 = vmatpush1.bf16.msra.mxu0 %v102
    %1116 = vmatprep.subr.bf16.mxu0 0
    %1117 = vmatpush1.bf16.msra.mxu0 %v103
    %1118 = vmatprep.subr.bf16.mxu0 0
    %1119 = vmatpush1.bf16.msra.mxu0 0
    %1120 = vmatprep.subr.bf16.mxu0 0
    %1121 = vmatpush1.bf16.msra.mxu0 0
    %1122 = vmatprep.subr.bf16.mxu0 0
    %1123 = vmatpush1.bf16.msra.mxu0 0
    %1124 = vmatprep.subr.bf16.mxu0 0
    %1125 = vmatpush1.bf16.msra.mxu0 0
    %1126 = vmatprep.subr.bf16.mxu0 0
    %1127 = vmatpush1.bf16.msra.mxu0 0
    %1128 = vmatprep.subr.bf16.mxu0 0
    %1129 = vmatpush1.bf16.msra.mxu0 0
    %1130 = vmatprep.subr.bf16.mxu0 0
    %1131 = vmatpush1.bf16.msra.mxu0 0
    %1132 = vmatprep.subr.bf16.mxu0 0
    %1133 = vmatpush1.bf16.msra.mxu0 0
    %1134 = vmatprep.subr.bf16.mxu0 0
    %1135 = vmatpush1.bf16.msra.mxu0 0
    %1136 = vmatprep.subr.bf16.mxu0 0
    %1137 = vmatpush1.bf16.msra.mxu0 0
    %1138 = vmatprep.subr.bf16.mxu0 0
    %1139 = vmatpush1.bf16.msra.mxu0 0
    %1140 = vmatprep.subr.bf16.mxu0 0
    %1141 = vmatpush1.bf16.msra.mxu0 0
    %1142 = vmatprep.subr.bf16.mxu0 0
    %1143 = vmatpush1.bf16.msra.mxu0 0
    %1144 = vmatprep.subr.bf16.mxu0 0
    %1145 = vmatpush1.bf16.msra.mxu0 0
    %1146 = vmatprep.mubr.bf16.mxu0 0
    %1147 = vmatmul.mubr.bf16.gmra.mrb[0].mxu0 %v1112
    %v1148 = vpop.f32.mrb[0].mxu0
    %v1149 = vadd.f32 0.0, %v1148
    %v1150 = vpop.f32.mrb[0].mxu0
    %v1151 = vpop.f32.mrb[0].mxu0
    %v1152 = vpop.f32.mrb[0].mxu0
    %1153 = vdwg.mxu0
    %v1154 = vadd.f32 %v1106, %v1149
    %v1155 = vxor.u32 %v1154, 2147483648
    %v1156 = vmul.f32 %v1155, 1.442695
    %v1157 = vpow.pop %v1156
    %v1158 = vadd.f32 %v1157, 1.0
    %v1159 = vrcp.pop %v1158
    %v1160 = vmul.f32 1.0, %v1159
    %v1161 = vtanh.pop %v1154
    %v1162 = vmul.f32 %v1160, %v1090
    %1164 = vrot.lane.b32.xlu0 %v1161, 32
    %v1165 = vpop.permute.xlu0 %1164
    %v1167 = vmul.f32 %v1160, %v1165
    %1169 = vrot.lane.b32.xlu0 %v1167, 32
    %v1170 = vpop.permute.xlu0 %1169
    %v1172 = vadd.f32 %v1162, %v1170
    %v1173 = vtanh.pop %v1083
    %1175 = vrot.lane.b32.xlu0 %v1173, 64
    %v1176 = vpop.permute.xlu0 %1175
    %v1178 = vmul.f32 %v1160, %v1176
    %1180 = vrot.lane.b32.xlu0 %v1172, 96
    %v1181 = vpop.permute.xlu0 %1180
    %v1182 = vsel %vm106, %v1181, 0
    %1184 = vmatprep.subr.mxu0 0.0
    %1185 = vmatpush1.msra.mxu0 %v85
    %1186 = vmatprep.subr.mxu0 0.0
    %1187 = vmatpush1.msra.mxu0 %v86
    %1188 = vmatprep.subr.mxu0 0.0
    %1189 = vmatpush1.msra.mxu0 %v87
    %1190 = vmatprep.subr.mxu0 0.0
    %1191 = vmatpush1.msra.mxu0 %v88
    %1192 = vmatprep.subr.mxu0 0.0
    %1193 = vmatpush1.msra.mxu0 0.0
    %1194 = vmatprep.subr.mxu0 0.0
    %1195 = vmatpush1.msra.mxu0 0.0
    %1196 = vmatprep.subr.mxu0 0.0
    %1197 = vmatpush1.msra.mxu0 0.0
    %1198 = vmatprep.subr.mxu0 0.0
    %1199 = vmatpush1.msra.mxu0 0.0
    %1200 = vmatprep.subr.mxu0 0.0
    %1201 = vmatpush1.msra.mxu0 0.0
    %1202 = vmatprep.subr.mxu0 0.0
    %1203 = vmatpush1.msra.mxu0 0.0
    %1204 = vmatprep.subr.mxu0 0.0
    %1205 = vmatpush1.msra.mxu0 0.0
    %1206 = vmatprep.subr.mxu0 0.0
    %1207 = vmatpush1.msra.mxu0 0.0
    %1208 = vmatprep.subr.mxu0 0.0
    %1209 = vmatpush1.msra.mxu0 0.0
    %1210 = vmatprep.subr.mxu0 0.0
    %1211 = vmatpush1.msra.mxu0 0.0
    %1212 = vmatprep.subr.mxu0 0.0
    %1213 = vmatpush1.msra.mxu0 0.0
    %1214 = vmatprep.subr.mxu0 0.0
    %1215 = vmatpush1.msra.mxu0 0.0
    %1216 = vmatprep.subr.mxu0 0.0
    %1217 = vmatpush1.msra.mxu0 0.0
    %1218 = vmatprep.subr.mxu0 0.0
    %1219 = vmatpush1.msra.mxu0 0.0
    %1220 = vmatprep.subr.mxu0 0.0
    %1221 = vmatpush1.msra.mxu0 0.0
    %1222 = vmatprep.subr.mxu0 0.0
    %1223 = vmatpush1.msra.mxu0 0.0
    %1224 = vmatprep.subr.mxu0 0.0
    %1225 = vmatpush1.msra.mxu0 0.0
    %1226 = vmatprep.subr.mxu0 0.0
    %1227 = vmatpush1.msra.mxu0 0.0
    %1228 = vmatprep.subr.mxu0 0.0
    %1229 = vmatpush1.msra.mxu0 0.0
    %1230 = vmatprep.subr.mxu0 0.0
    %1231 = vmatpush1.msra.mxu0 0.0
    %1232 = vmatprep.subr.mxu0 0.0
    %1233 = vmatpush1.msra.mxu0 0.0
    %1234 = vmatprep.subr.mxu0 0.0
    %1235 = vmatpush1.msra.mxu0 0.0
    %1236 = vmatprep.subr.mxu0 0.0
    %1237 = vmatpush1.msra.mxu0 0.0
    %1238 = vmatprep.subr.mxu0 0.0
    %1239 = vmatpush1.msra.mxu0 0.0
    %1240 = vmatprep.subr.mxu0 0.0
    %1241 = vmatpush1.msra.mxu0 0.0
    %1242 = vmatprep.subr.mxu0 0.0
    %1243 = vmatpush1.msra.mxu0 0.0
    %1244 = vmatprep.subr.mxu0 0.0
    %1245 = vmatpush1.msra.mxu0 0.0
    %1246 = vmatprep.subr.mxu0 0.0
    %1247 = vmatpush1.msra.mxu0 0.0
    %1248 = vmatprep.mubr.f32.mxu0 0.0
    %1249 = vmatmul.mubr.f32.gmra.mrb[0].mxu0 %v1182
    %v1250 = vpop.f32.mrb[0].mxu0
    %v1251 = vadd.f32 0.0, %v1250
    %v1252 = vpop.f32.mrb[0].mxu0
    %1253 = vdwg.mxu0
    %v1254 = vmax.f32 %v1251, 1e-06
    %v1255 = vmin.f32 %v1254, 1000000.0
    %v1256 = vmax.f32 %v1251, 0.0
    %vm1257 = vcmp.ne.f32.partialorder %v1251, %v1251
    %v1258 = vadd.f32 %v1251, 0.0
    %v1259 = vand.u32 2147483647, %v1251
    %v1260 = vsub.f32 0.0, %v1259
    %v1261 = vmul.f32 %v1260, 1.442695
    %v1262 = vpow.pop %v1261
    %v1263 = vadd.f32 %v1262, 1.0
    %v1264 = vlog2.pop %v1263
    %v1265 = vmul.f32 %v1264, 0.6931472
    %v1266 = vmul.f32 -0.5, %v1262
    %v1267 = vadd.f32 %v1266, 1.0
    %v1268 = vmul.f32 %v1267, %v1262
    %v1269 = vand.u32 2147483647, %v1262
    %vm1270 = vcmp.lt.f32.partialorder %v1269, 0.0004427343
    %v1271 = vsel %vm1270, %v1268, %v1265
    %v1272 = vadd.f32 %v1256, %v1271
    %v1273 = vsel %vm1257, %v1258, %v1272
    %v1274 = vmax.f32 %v1273, 1e-06
    %s1275 = scalar_lea.vmem [#allocation7], 20
    %v1276 = vld [vmem:[%s1275] sm:$0xf]
    %v1277 = vunpack.c.l.bf16 %v1276
    %1279 = vrot.lane.b32.xlu0 %v1274, 96
    %v1280 = vpop.permute.xlu0 %1279
    %v1282 = vmul.f32 %v1277, %v1280
    %v1283 = vadd.f32 %v1255, %v1282
    %1285 = vrot.lane.b32.xlu0 %v1178, 64
    %v1286 = vpop.permute.xlu0 %1285
    %1289 = vrot.lane.b32.xlu0 %v1283, 32
    %v1290 = vpop.permute.xlu0 %1289
    %1293 = vrot.lane.b32.xlu0 %v1255, 64
    %v1294 = vpop.permute.xlu0 %1293
    %1296 = vrot.lane.b32.xlu0 %v1274, 64
    %v1297 = vpop.permute.xlu0 %1296
    %v1299 = vsel %vm106, %v1286, %v1290
    %v1300 = vsel %vm299, %v1299, %v1294
    %v1301 = vsel %vm301, %v1300, %v1297
    %s1302 = scalar_lea.vmem [#allocation12], 40
    %1303 = vst [vmem:[%s1302] sm:$0xff] %v1301
    %s1304 = scalar_lea.vmem [#allocation4], 24
    %v1305 = vld [vmem:[%s1304] sm:$0xf]
    %v1306 = vunpack.c.l.bf16 %v1305
    %v1307 = vpack.c.bf16 %v1178, %v1178
    %1309 = vrot.lane.b32.xlu0 %v1307, 64
    %v1310 = vpop.permute.xlu0 %1309
    %v1312 = vsel %vm106, %v1310, 0
    %1314 = vmatprep.subr.bf16.mxu0 0
    %1315 = vmatpush1.bf16.msra.mxu0 %v102
    %1316 = vmatprep.subr.bf16.mxu0 0
    %1317 = vmatpush1.bf16.msra.mxu0 %v103
    %1318 = vmatprep.subr.bf16.mxu0 0
    %1319 = vmatpush1.bf16.msra.mxu0 0
    %1320 = vmatprep.subr.bf16.mxu0 0
    %1321 = vmatpush1.bf16.msra.mxu0 0
    %1322 = vmatprep.subr.bf16.mxu0 0
    %1323 = vmatpush1.bf16.msra.mxu0 0
    %1324 = vmatprep.subr.bf16.mxu0 0
    %1325 = vmatpush1.bf16.msra.mxu0 0
    %1326 = vmatprep.subr.bf16.mxu0 0
    %1327 = vmatpush1.bf16.msra.mxu0 0
    %1328 = vmatprep.subr.bf16.mxu0 0
    %1329 = vmatpush1.bf16.msra.mxu0 0
    %1330 = vmatprep.subr.bf16.mxu0 0
    %1331 = vmatpush1.bf16.msra.mxu0 0
    %1332 = vmatprep.subr.bf16.mxu0 0
    %1333 = vmatpush1.bf16.msra.mxu0 0
    %1334 = vmatprep.subr.bf16.mxu0 0
    %1335 = vmatpush1.bf16.msra.mxu0 0
    %1336 = vmatprep.subr.bf16.mxu0 0
    %1337 = vmatpush1.bf16.msra.mxu0 0
    %1338 = vmatprep.subr.bf16.mxu0 0
    %1339 = vmatpush1.bf16.msra.mxu0 0
    %1340 = vmatprep.subr.bf16.mxu0 0
    %1341 = vmatpush1.bf16.msra.mxu0 0
    %1342 = vmatprep.subr.bf16.mxu0 0
    %1343 = vmatpush1.bf16.msra.mxu0 0
    %1344 = vmatprep.subr.bf16.mxu0 0
    %1345 = vmatpush1.bf16.msra.mxu0 0
    %1346 = vmatprep.mubr.bf16.mxu0 0
    %1347 = vmatmul.mubr.bf16.gmra.mrb[0].mxu0 %v1312
    %v1348 = vpop.f32.mrb[0].mxu0
    %v1349 = vadd.f32 0.0, %v1348
    %v1350 = vpop.f32.mrb[0].mxu0
    %v1351 = vpop.f32.mrb[0].mxu0
    %v1352 = vpop.f32.mrb[0].mxu0
    %1353 = vdwg.mxu0
    %v1354 = vadd.f32 %v1306, %v1349
    %v1355 = vxor.u32 %v1354, 2147483648
    %v1356 = vmul.f32 %v1355, 1.442695
    %v1357 = vpow.pop %v1356
    %v1358 = vadd.f32 %v1357, 1.0
    %v1359 = vrcp.pop %v1358
    %v1360 = vmul.f32 1.0, %v1359
    %v1361 = vtanh.pop %v1354
    %v1362 = vmul.f32 %v1360, %v1290
    %1364 = vrot.lane.b32.xlu0 %v1361, 32
    %v1365 = vpop.permute.xlu0 %1364
    %v1367 = vmul.f32 %v1360, %v1365
    %1369 = vrot.lane.b32.xlu0 %v1367, 32
    %v1370 = vpop.permute.xlu0 %1369
    %v1372 = vadd.f32 %v1362, %v1370
    %v1373 = vtanh.pop %v1283
    %1375 = vrot.lane.b32.xlu0 %v1373, 64
    %v1376 = vpop.permute.xlu0 %1375
    %v1378 = vmul.f32 %v1360, %v1376
    %1380 = vrot.lane.b32.xlu0 %v1372, 96
    %v1381 = vpop.permute.xlu0 %1380
    %v1382 = vsel %vm106, %v1381, 0
    %1384 = vmatprep.subr.mxu0 0.0
    %1385 = vmatpush1.msra.mxu0 %v85
    %1386 = vmatprep.subr.mxu0 0.0
    %1387 = vmatpush1.msra.mxu0 %v86
    %1388 = vmatprep.subr.mxu0 0.0
    %1389 = vmatpush1.msra.mxu0 %v87
    %1390 = vmatprep.subr.mxu0 0.0
    %1391 = vmatpush1.msra.mxu0 %v88
    %1392 = vmatprep.subr.mxu0 0.0
    %1393 = vmatpush1.msra.mxu0 0.0
    %1394 = vmatprep.subr.mxu0 0.0
    %1395 = vmatpush1.msra.mxu0 0.0
    %1396 = vmatprep.subr.mxu0 0.0
    %1397 = vmatpush1.msra.mxu0 0.0
    %1398 = vmatprep.subr.mxu0 0.0
    %1399 = vmatpush1.msra.mxu0 0.0
    %1400 = vmatprep.subr.mxu0 0.0
    %1401 = vmatpush1.msra.mxu0 0.0
    %1402 = vmatprep.subr.mxu0 0.0
    %1403 = vmatpush1.msra.mxu0 0.0
    %1404 = vmatprep.subr.mxu0 0.0
    %1405 = vmatpush1.msra.mxu0 0.0
    %1406 = vmatprep.subr.mxu0 0.0
    %1407 = vmatpush1.msra.mxu0 0.0
    %1408 = vmatprep.subr.mxu0 0.0
    %1409 = vmatpush1.msra.mxu0 0.0
    %1410 = vmatprep.subr.mxu0 0.0
    %1411 = vmatpush1.msra.mxu0 0.0
    %1412 = vmatprep.subr.mxu0 0.0
    %1413 = vmatpush1.msra.mxu0 0.0
    %1414 = vmatprep.subr.mxu0 0.0
    %1415 = vmatpush1.msra.mxu0 0.0
    %1416 = vmatprep.subr.mxu0 0.0
    %1417 = vmatpush1.msra.mxu0 0.0
    %1418 = vmatprep.subr.mxu0 0.0
    %1419 = vmatpush1.msra.mxu0 0.0
    %1420 = vmatprep.subr.mxu0 0.0
    %1421 = vmatpush1.msra.mxu0 0.0
    %1422 = vmatprep.subr.mxu0 0.0
    %1423 = vmatpush1.msra.mxu0 0.0
    %1424 = vmatprep.subr.mxu0 0.0
    %1425 = vmatpush1.msra.mxu0 0.0
    %1426 = vmatprep.subr.mxu0 0.0
    %1427 = vmatpush1.msra.mxu0 0.0
    %1428 = vmatprep.subr.mxu0 0.0
    %1429 = vmatpush1.msra.mxu0 0.0
    %1430 = vmatprep.subr.mxu0 0.0
    %1431 = vmatpush1.msra.mxu0 0.0
    %1432 = vmatprep.subr.mxu0 0.0
    %1433 = vmatpush1.msra.mxu0 0.0
    %1434 = vmatprep.subr.mxu0 0.0
    %1435 = vmatpush1.msra.mxu0 0.0
    %1436 = vmatprep.subr.mxu0 0.0
    %1437 = vmatpush1.msra.mxu0 0.0
    %1438 = vmatprep.subr.mxu0 0.0
    %1439 = vmatpush1.msra.mxu0 0.0
    %1440 = vmatprep.subr.mxu0 0.0
    %1441 = vmatpush1.msra.mxu0 0.0
    %1442 = vmatprep.subr.mxu0 0.0
    %1443 = vmatpush1.msra.mxu0 0.0
    %1444 = vmatprep.subr.mxu0 0.0
    %1445 = vmatpush1.msra.mxu0 0.0
    %1446 = vmatprep.subr.mxu0 0.0
    %1447 = vmatpush1.msra.mxu0 0.0
    %1448 = vmatprep.mubr.f32.mxu0 0.0
    %1449 = vmatmul.mubr.f32.gmra.mrb[0].mxu0 %v1382
    %v1450 = vpop.f32.mrb[0].mxu0
    %v1451 = vadd.f32 0.0, %v1450
    %v1452 = vpop.f32.mrb[0].mxu0
    %1453 = vdwg.mxu0
    %v1454 = vmax.f32 %v1451, 1e-06
    %v1455 = vmin.f32 %v1454, 1000000.0
    %v1456 = vmax.f32 %v1451, 0.0
    %vm1457 = vcmp.ne.f32.partialorder %v1451, %v1451
    %v1458 = vadd.f32 %v1451, 0.0
    %v1459 = vand.u32 2147483647, %v1451
    %v1460 = vsub.f32 0.0, %v1459
    %v1461 = vmul.f32 %v1460, 1.442695
    %v1462 = vpow.pop %v1461
    %v1463 = vadd.f32 %v1462, 1.0
    %v1464 = vlog2.pop %v1463
    %v1465 = vmul.f32 %v1464, 0.6931472
    %v1466 = vmul.f32 -0.5, %v1462
    %v1467 = vadd.f32 %v1466, 1.0
    %v1468 = vmul.f32 %v1467, %v1462
    %v1469 = vand.u32 2147483647, %v1462
    %vm1470 = vcmp.lt.f32.partialorder %v1469, 0.0004427343
    %v1471 = vsel %vm1470, %v1468, %v1465
    %v1472 = vadd.f32 %v1456, %v1471
    %v1473 = vsel %vm1457, %v1458, %v1472
    %v1474 = vmax.f32 %v1473, 1e-06
    %s1475 = scalar_lea.vmem [#allocation7], 24
    %v1476 = vld [vmem:[%s1475] sm:$0xf]
    %v1477 = vunpack.c.l.bf16 %v1476
    %1479 = vrot.lane.b32.xlu0 %v1474, 96
    %v1480 = vpop.permute.xlu0 %1479
    %v1482 = vmul.f32 %v1477, %v1480
    %v1483 = vadd.f32 %v1455, %v1482
    %1485 = vrot.lane.b32.xlu0 %v1378, 64
    %v1486 = vpop.permute.xlu0 %1485
    %1489 = vrot.lane.b32.xlu0 %v1483, 32
    %v1490 = vpop.permute.xlu0 %1489
    %1493 = vrot.lane.b32.xlu0 %v1455, 64
    %v1494 = vpop.permute.xlu0 %1493
    %1496 = vrot.lane.b32.xlu0 %v1474, 64
    %v1497 = vpop.permute.xlu0 %1496
    %v1499 = vsel %vm106, %v1486, %v1490
    %v1500 = vsel %vm299, %v1499, %v1494
    %v1501 = vsel %vm301, %v1500, %v1497
    %s1502 = scalar_lea.vmem [#allocation12], 48
    %1503 = vst [vmem:[%s1502] sm:$0xff] %v1501
    %s1504 = scalar_lea.vmem [#allocation4], 28
    %v1505 = vld [vmem:[%s1504] sm:$0xf]
    %v1506 = vunpack.c.l.bf16 %v1505
    %v1507 = vpack.c.bf16 %v1378, %v1378
    %1509 = vrot.lane.b32.xlu0 %v1507, 64
    %v1510 = vpop.permute.xlu0 %1509
    %v1512 = vsel %vm106, %v1510, 0
    %1514 = vmatprep.subr.bf16.mxu0 0
    %1515 = vmatpush1.bf16.msra.mxu0 %v102
    %1516 = vmatprep.subr.bf16.mxu0 0
    %1517 = vmatpush1.bf16.msra.mxu0 %v103
    %1518 = vmatprep.subr.bf16.mxu0 0
    %1519 = vmatpush1.bf16.msra.mxu0 0
    %1520 = vmatprep.subr.bf16.mxu0 0
    %1521 = vmatpush1.bf16.msra.mxu0 0
    %1522 = vmatprep.subr.bf16.mxu0 0
    %1523 = vmatpush1.bf16.msra.mxu0 0
    %1524 = vmatprep.subr.bf16.mxu0 0
    %1525 = vmatpush1.bf16.msra.mxu0 0
    %1526 = vmatprep.subr.bf16.mxu0 0
    %1527 = vmatpush1.bf16.msra.mxu0 0
    %1528 = vmatprep.subr.bf16.mxu0 0
    %1529 = vmatpush1.bf16.msra.mxu0 0
    %1530 = vmatprep.subr.bf16.mxu0 0
    %1531 = vmatpush1.bf16.msra.mxu0 0
    %1532 = vmatprep.subr.bf16.mxu0 0
    %1533 = vmatpush1.bf16.msra.mxu0 0
    %1534 = vmatprep.subr.bf16.mxu0 0
    %1535 = vmatpush1.bf16.msra.mxu0 0
    %1536 = vmatprep.subr.bf16.mxu0 0
    %1537 = vmatpush1.bf16.msra.mxu0 0
    %1538 = vmatprep.subr.bf16.mxu0 0
    %1539 = vmatpush1.bf16.msra.mxu0 0
    %1540 = vmatprep.subr.bf16.mxu0 0
    %1541 = vmatpush1.bf16.msra.mxu0 0
    %1542 = vmatprep.subr.bf16.mxu0 0
    %1543 = vmatpush1.bf16.msra.mxu0 0
    %1544 = vmatprep.subr.bf16.mxu0 0
    %1545 = vmatpush1.bf16.msra.mxu0 0
    %1546 = vmatprep.mubr.bf16.mxu0 0
    %1547 = vmatmul.mubr.bf16.gmra.mrb[0].mxu0 %v1512
    %v1548 = vpop.f32.mrb[0].mxu0
    %v1549 = vadd.f32 0.0, %v1548
    %v1550 = vpop.f32.mrb[0].mxu0
    %v1551 = vpop.f32.mrb[0].mxu0
    %v1552 = vpop.f32.mrb[0].mxu0
    %1553 = vdwg.mxu0
    %v1554 = vadd.f32 %v1506, %v1549
    %v1555 = vxor.u32 %v1554, 2147483648
    %v1556 = vmul.f32 %v1555, 1.442695
    %v1557 = vpow.pop %v1556
    %v1558 = vadd.f32 %v1557, 1.0
    %v1559 = vrcp.pop %v1558
    %v1560 = vmul.f32 1.0, %v1559
    %v1561 = vtanh.pop %v1554
    %v1562 = vmul.f32 %v1560, %v1490
    %1564 = vrot.lane.b32.xlu0 %v1561, 32
    %v1565 = vpop.permute.xlu0 %1564
    %v1567 = vmul.f32 %v1560, %v1565
    %1569 = vrot.lane.b32.xlu0 %v1567, 32
    %v1570 = vpop.permute.xlu0 %1569
    %v1572 = vadd.f32 %v1562, %v1570
    %v1573 = vtanh.pop %v1483
    %1575 = vrot.lane.b32.xlu0 %v1573, 64
    %v1576 = vpop.permute.xlu0 %1575
    %v1578 = vmul.f32 %v1560, %v1576
    %1580 = vrot.lane.b32.xlu0 %v1572, 96
    %v1581 = vpop.permute.xlu0 %1580
    %v1582 = vsel %vm106, %v1581, 0
    %1584 = vmatprep.subr.mxu0 0.0
    %1585 = vmatpush1.msra.mxu0 %v85
    %1586 = vmatprep.subr.mxu0 0.0
    %1587 = vmatpush1.msra.mxu0 %v86
    %1588 = vmatprep.subr.mxu0 0.0
    %1589 = vmatpush1.msra.mxu0 %v87
    %1590 = vmatprep.subr.mxu0 0.0
    %1591 = vmatpush1.msra.mxu0 %v88
    %1592 = vmatprep.subr.mxu0 0.0
    %1593 = vmatpush1.msra.mxu0 0.0
    %1594 = vmatprep.subr.mxu0 0.0
    %1595 = vmatpush1.msra.mxu0 0.0
    %1596 = vmatprep.subr.mxu0 0.0
    %1597 = vmatpush1.msra.mxu0 0.0
    %1598 = vmatprep.subr.mxu0 0.0
    %1599 = vmatpush1.msra.mxu0 0.0
    %1600 = vmatprep.subr.mxu0 0.0
    %1601 = vmatpush1.msra.mxu0 0.0
    %1602 = vmatprep.subr.mxu0 0.0
    %1603 = vmatpush1.msra.mxu0 0.0
    %1604 = vmatprep.subr.mxu0 0.0
    %1605 = vmatpush1.msra.mxu0 0.0
    %1606 = vmatprep.subr.mxu0 0.0
    %1607 = vmatpush1.msra.mxu0 0.0
    %1608 = vmatprep.subr.mxu0 0.0
    %1609 = vmatpush1.msra.mxu0 0.0
    %1610 = vmatprep.subr.mxu0 0.0
    %1611 = vmatpush1.msra.mxu0 0.0
    %1612 = vmatprep.subr.mxu0 0.0
    %1613 = vmatpush1.msra.mxu0 0.0
    %1614 = vmatprep.subr.mxu0 0.0
    %1615 = vmatpush1.msra.mxu0 0.0
    %1616 = vmatprep.subr.mxu0 0.0
    %1617 = vmatpush1.msra.mxu0 0.0
    %1618 = vmatprep.subr.mxu0 0.0
    %1619 = vmatpush1.msra.mxu0 0.0
    %1620 = vmatprep.subr.mxu0 0.0
    %1621 = vmatpush1.msra.mxu0 0.0
    %1622 = vmatprep.subr.mxu0 0.0
    %1623 = vmatpush1.msra.mxu0 0.0
    %1624 = vmatprep.subr.mxu0 0.0
    %1625 = vmatpush1.msra.mxu0 0.0
    %1626 = vmatprep.subr.mxu0 0.0
    %1627 = vmatpush1.msra.mxu0 0.0
    %1628 = vmatprep.subr.mxu0 0.0
    %1629 = vmatpush1.msra.mxu0 0.0
    %1630 = vmatprep.subr.mxu0 0.0
    %1631 = vmatpush1.msra.mxu0 0.0
    %1632 = vmatprep.subr.mxu0 0.0
    %1633 = vmatpush1.msra.mxu0 0.0
    %1634 = vmatprep.subr.mxu0 0.0
    %1635 = vmatpush1.msra.mxu0 0.0
    %1636 = vmatprep.subr.mxu0 0.0
    %1637 = vmatpush1.msra.mxu0 0.0
    %1638 = vmatprep.subr.mxu0 0.0
    %1639 = vmatpush1.msra.mxu0 0.0
    %1640 = vmatprep.subr.mxu0 0.0
    %1641 = vmatpush1.msra.mxu0 0.0
    %1642 = vmatprep.subr.mxu0 0.0
    %1643 = vmatpush1.msra.mxu0 0.0
    %1644 = vmatprep.subr.mxu0 0.0
    %1645 = vmatpush1.msra.mxu0 0.0
    %1646 = vmatprep.subr.mxu0 0.0
    %1647 = vmatpush1.msra.mxu0 0.0
    %1648 = vmatprep.mubr.f32.mxu0 0.0
    %1649 = vmatmul.mubr.f32.gmra.mrb[0].mxu0 %v1582
    %v1650 = vpop.f32.mrb[0].mxu0
    %v1651 = vadd.f32 0.0, %v1650
    %v1652 = vpop.f32.mrb[0].mxu0
    %1653 = vdwg.mxu0
    %v1654 = vmax.f32 %v1651, 1e-06
    %v1655 = vmin.f32 %v1654, 1000000.0
    %v1656 = vmax.f32 %v1651, 0.0
    %vm1657 = vcmp.ne.f32.partialorder %v1651, %v1651
    %v1658 = vadd.f32 %v1651, 0.0
    %v1659 = vand.u32 2147483647, %v1651
    %v1660 = vsub.f32 0.0, %v1659
    %v1661 = vmul.f32 %v1660, 1.442695
    %v1662 = vpow.pop %v1661
    %v1663 = vadd.f32 %v1662, 1.0
    %v1664 = vlog2.pop %v1663
    %v1665 = vmul.f32 %v1664, 0.6931472
    %v1666 = vmul.f32 -0.5, %v1662
    %v1667 = vadd.f32 %v1666, 1.0
    %v1668 = vmul.f32 %v1667, %v1662
    %v1669 = vand.u32 2147483647, %v1662
    %vm1670 = vcmp.lt.f32.partialorder %v1669, 0.0004427343
    %v1671 = vsel %vm1670, %v1668, %v1665
    %v1672 = vadd.f32 %v1656, %v1671
    %v1673 = vsel %vm1657, %v1658, %v1672
    %v1674 = vmax.f32 %v1673, 1e-06
    %s1675 = scalar_lea.vmem [#allocation7], 28
    %v1676 = vld [vmem:[%s1675] sm:$0xf]
    %v1677 = vunpack.c.l.bf16 %v1676
    %1679 = vrot.lane.b32.xlu0 %v1674, 96
    %v1680 = vpop.permute.xlu0 %1679
    %v1682 = vmul.f32 %v1677, %v1680
    %v1683 = vadd.f32 %v1655, %v1682
    %1685 = vrot.lane.b32.xlu0 %v1578, 64
    %v1686 = vpop.permute.xlu0 %1685
    %1689 = vrot.lane.b32.xlu0 %v1683, 32
    %v1690 = vpop.permute.xlu0 %1689
    %1693 = vrot.lane.b32.xlu0 %v1655, 64
    %v1694 = vpop.permute.xlu0 %1693
    %1696 = vrot.lane.b32.xlu0 %v1674, 64
    %v1697 = vpop.permute.xlu0 %1696
    %v1699 = vsel %vm106, %v1686, %v1690
    %v1700 = vsel %vm299, %v1699, %v1694
    %v1701 = vsel %vm301, %v1700, %v1697
    %s1702 = scalar_lea.vmem [#allocation12], 56
    %1703 = vst [vmem:[%s1702] sm:$0xff] %v1701
    %1704 = vst.msk [vmem:[#allocation2] sm:$0xff] %vm106, %v1686
    %1705 = vst.msk [vmem:[#allocation3] sm:$0xff] %vm106, %v1683
    // Predicated region
    $region38: #{tpu_custom_call.1} parent=1 // pred_check
      _
    $region39: #{tpu_custom_call.1} parent=1 // pred_check_branch
      %1707 = sbr.rel (0) target = $region41
    $region40: #{tpu_custom_call.1} parent=1 // pred_region
      %s1709 = ssub.s32 1024, 1024
      %1710 = vsyncadd [#allocation6], %s1709
      %s1711 = sshll.u32 [#allocation12], 4
      %s1712 = int_to_ptr.vmem [resolvable:$true] %s1711
      %1717 = dma.vmem_to_hbm [thread:$0]  %s1712, 1024, %s4, [#allocation6], 128, 128, 8
    $region41: #{tpu_custom_call.1} parent=1 // pred_fallthru
      _
    // Predicated region
    $region42: #{tpu_custom_call.1} parent=1 // pred_check
      _
    $region43: #{tpu_custom_call.1} parent=1 // pred_check_branch
      %1719 = sbr.rel (0) target = $region45
    $region44: #{tpu_custom_call.1} parent=1 // pred_region
      %1720 = dma.done [#allocation6], 1024
    $region45: #{tpu_custom_call.1} parent=1 // pred_fallthru
      _
    %1721 = vsyncpa [#allocation5], 1
    %1722 = vsyncpa [#allocation8], 1
    %1723 = vsyncpa [#allocation11], 1
    %1724 = vsyncpa [#allocation6], 1

// kernel: tpu_custom_call.1
$region0: #{tpu_custom_call.1}
  #allocation0 [shape = 'u32[]', space=smem, size = 0x4, offset = 0x4, fixed_abs, tag = 'smem constant byte address 0x4 - core index']
  #allocation1 [shape = 'u32[144,128]{1,0:T(1,128)}', space=vmem, size = 0x12000, scoped, tag = 'internal scratch']
  #allocation2 [shape = 'f32[8,32]{1,0:T(8,128)}', space=vmem, size = 0x1000, scoped, tag = 'scratch operand']
  #allocation3 [shape = 'f32[8,32]{1,0:T(8,128)}', space=vmem, size = 0x1000, scoped, tag = 'scratch operand']
  %s0 = inlined_call_operand.hbm [shape: bf16[8,8,128], index: 0, kind: input, shape index: {}]
  %s1 = inlined_call_operand.hbm [shape: bf16[8,8,32], index: 1, kind: input, shape index: {}]
  %s2 = inlined_call_operand.hbm [shape: bf16[32,128], index: 2, kind: input, shape index: {}]
  %s3 = inlined_call_operand.hbm [shape: f32[32,128], index: 3, kind: input, shape index: {}]
  %s4 = inlined_call_operand.hbm [shape: f32[8,8,128], index: 4, kind: output, shape index: {}]
  %s5 = sld [smem:[#allocation0]]
  $region46: #{tpu_custom_call.1} parent=0
    _
  %s7 = ssub.s32 1, %s5
  %s8 = scalar_select 0, %s7, %s5
  $region1: #{tpu_custom_call.1} parent=0
    #allocation4 [shape = 'u8[16384]{0}', space=vmem, size = 0x4000, scoped, tag = 'input window, operand 0, single buffered']
    #allocation5 [shape = 's32[1]{0}', space=sflag, size = 0x4, scoped, tag = 'scoped memory for tpu_custom_call.1']
    #allocation6 [shape = 's32[1]{0}', space=sflag, size = 0x4, scoped, tag = 'scoped memory for tpu_custom_call.1']
    #allocation7 [shape = 'u8[16384]{0}', space=vmem, size = 0x4000, scoped, tag = 'input window, operand 1, single buffered']
    #allocation8 [shape = 's32[1]{0}', space=sflag, size = 0x4, scoped, tag = 'scoped memory for tpu_custom_call.1']
    #allocation9 [shape = 'u8[8192]{0}', space=vmem, size = 0x2000, scoped, tag = 'input window, operand 2, single buffered']
    #allocation10 [shape = 'u8[16384]{0}', space=vmem, size = 0x4000, scoped, tag = 'input window, operand 3, single buffered']
    #allocation11 [shape = 's32[1]{0}', space=sflag, size = 0x4, scoped, tag = 'scoped memory for tpu_custom_call.1']
    #allocation12 [shape = 'u8[32768]{0}', space=vmem, size = 0x8000, scoped, tag = 'output window, operand 0, single buffered']
    %9 = vsyncpa [#allocation5], 0
    %10 = vsyncpa [#allocation8], 0
    %11 = vsyncpa [#allocation11], 0
    %12 = vsyncpa [#allocation6], 0
    // Predicated region
    $region2: #{tpu_custom_call.1} parent=1 // pred_check
      _
    $region3: #{tpu_custom_call.1} parent=1 // pred_check_branch
      %14 = sbr.rel (0) target = $region5
    $region4: #{tpu_custom_call.1} parent=1 // pred_region
      %s16 = ssub.s32 512, 512
      %17 = vsyncadd [#allocation5], %s16
      %s18 = sshll.u32 [#allocation4], 4
      %s19 = int_to_ptr.vmem [resolvable:$true] %s18
      %24 = dma.hbm_to_vmem [thread:$0]  %s0, 512, %s19, [#allocation5], 64, 64, 4
    $region5: #{tpu_custom_call.1} parent=1 // pred_fallthru
      _
    // Predicated region
    $region6: #{tpu_custom_call.1} parent=1 // pred_check
      _
    $region7: #{tpu_custom_call.1} parent=1 // pred_check_branch
      %26 = sbr.rel (0) target = $region9
    $region8: #{tpu_custom_call.1} parent=1 // pred_region
      %s28 = ssub.s32 512, 512
      %29 = vsyncadd [#allocation8], %s28
      %s30 = sshll.u32 [#allocation7], 4
      %s31 = int_to_ptr.vmem [resolvable:$true] %s30
      %36 = dma.hbm_to_vmem [thread:$0]  %s1, 512, %s31, [#allocation8], 64, 64, 4
    $region9: #{tpu_custom_call.1} parent=1 // pred_fallthru
      _
    // Predicated region
    $region10: #{tpu_custom_call.1} parent=1 // pred_check
      _
    $region11: #{tpu_custom_call.1} parent=1 // pred_check_branch
      %38 = sbr.rel (0) target = $region13
    $region12: #{tpu_custom_call.1} parent=1 // pred_region
      %s40 = ssub.s32 256, 256
      %41 = vsyncadd [#allocation8], %s40
      %s42 = sshll.u32 [#allocation9], 4
      %s43 = int_to_ptr.vmem [resolvable:$true] %s42
      %48 = dma.hbm_to_vmem [thread:$0]  %s2, 256, %s43, [#allocation8], 64, 64, 4
    $region13: #{tpu_custom_call.1} parent=1 // pred_fallthru
      _
    // Predicated region
    $region14: #{tpu_custom_call.1} parent=1 // pred_check
      _
    $region15: #{tpu_custom_call.1} parent=1 // pred_check_branch
      %50 = sbr.rel (0) target = $region17
    $region16: #{tpu_custom_call.1} parent=1 // pred_region
      %s52 = ssub.s32 512, 512
      %53 = vsyncadd [#allocation11], %s52
      %s54 = sshll.u32 [#allocation10], 4
      %s55 = int_to_ptr.vmem [resolvable:$true] %s54
      %60 = dma.hbm_to_vmem [thread:$0]  %s3, 512, %s55, [#allocation11], 128, 128, 8
    $region17: #{tpu_custom_call.1} parent=1 // pred_fallthru
      _
    // Predicated region
    $region18: #{tpu_custom_call.1} parent=1 // pred_check
      _
    $region19: #{tpu_custom_call.1} parent=1 // pred_check_branch
      %62 = sbr.rel (0) target = $region21
    $region20: #{tpu_custom_call.1} parent=1 // pred_region
      %63 = dma.done [#allocation5], 512
    $region21: #{tpu_custom_call.1} parent=1 // pred_fallthru
      _
    // Predicated region
    $region22: #{tpu_custom_call.1} parent=1 // pred_check
      _
    $region23: #{tpu_custom_call.1} parent=1 // pred_check_branch
      %65 = sbr.rel (0) target = $region25
    $region24: #{tpu_custom_call.1} parent=1 // pred_region
      %66 = dma.done [#allocation8], 512
    $region25: #{tpu_custom_call.1} parent=1 // pred_fallthru
      _
    // Predicated region
    $region26: #{tpu_custom_call.1} parent=1 // pred_check
      _
    $region27: #{tpu_custom_call.1} parent=1 // pred_check_branch
      %68 = sbr.rel (0) target = $region29
    $region28: #{tpu_custom_call.1} parent=1 // pred_region
      %69 = dma.done [#allocation8], 256
    $region29: #{tpu_custom_call.1} parent=1 // pred_fallthru
      _
    // Predicated region
    $region30: #{tpu_custom_call.1} parent=1 // pred_check
      _
    $region31: #{tpu_custom_call.1} parent=1 // pred_check_branch
      %71 = sbr.rel (0) target = $region33
    $region32: #{tpu_custom_call.1} parent=1 // pred_region
      %72 = dma.done [#allocation11], 512
    $region33: #{tpu_custom_call.1} parent=1 // pred_fallthru
      _
    %p74 = scmp.eq.s32.totalorder 0, 0
    // Predicated region
    $region34: #{tpu_custom_call.1} parent=1 // pred_check
      %p75 = pneg %p74
    $region35: #{tpu_custom_call.1} parent=1 // pred_check_branch
      %77 = sbr.rel (%p75) target = $region37
    $region36: #{tpu_custom_call.1} parent=1 // pred_region
      %vm78 = vcmask 261120
      %79 = vst.msk [vmem:[#allocation2] sm:$0xff] %vm78, 0.0
      %80 = vst.msk [vmem:[#allocation3] sm:$0xff] %vm78, 0.0
    $region37: #{tpu_custom_call.1} parent=1 // pred_fallthru
      _
    %v81 = vld [vmem:[#allocation9] sm:$0xf]
    %v82 = vld [vmem:[#allocation9 + $0x4] sm:$0xf]
    %v83 = vld [vmem:[#allocation9 + $0x8] sm:$0xf]
    %v84 = vld [vmem:[#allocation9 + $0xc] sm:$0xf]
    %v85 = vld [vmem:[#allocation10] sm:$0xff]
    %v86 = vld [vmem:[#allocation10 + $0x8] sm:$0xff]
    %v87 = vld [vmem:[#allocation10 + $0x10] sm:$0xff]
    %v88 = vld [vmem:[#allocation10 + $0x18] sm:$0xff]
    %v89 = vld [vmem:[#allocation2] sm:$0xff]
    %v90 = vld [vmem:[#allocation3] sm:$0xff]
    %v91 = vld [vmem:[#allocation4] sm:$0xf]
    %v92 = vunpack.c.l.bf16 %v91
    %v93 = vpack.c.bf16 %v89, %v89
    %v98 = vunpack.c.l.b16 %v81
    %v99 = vunpack.c.l.b16 %v82
    %v100 = vunpack.c.l.b16 %v83
    %v101 = vunpack.c.l.b16 %v84
    %v102 = vpack.c.b16 %v99, %v98
    %v103 = vpack.c.b16 %v101, %v100
    %vm106 = vcmask 261120
    %v108 = vsel %vm106, %v93, 0
    %110 = vmatprep.subr.bf16.mxu0 0
    %111 = vmatpush1.bf16.msra.mxu0 %v102
    %112 = vmatprep.subr.bf16.mxu0 0
    %113 = vmatpush1.bf16.msra.mxu0 %v103
    %114 = vmatprep.subr.bf16.mxu0 0
    %115 = vmatpush1.bf16.msra.mxu0 0
    %116 = vmatprep.subr.bf16.mxu0 0
    %117 = vmatpush1.bf16.msra.mxu0 0
    %118 = vmatprep.subr.bf16.mxu0 0
    %119 = vmatpush1.bf16.msra.mxu0 0
    %120 = vmatprep.subr.bf16.mxu0 0
    %121 = vmatpush1.bf16.msra.mxu0 0
    %122 = vmatprep.subr.bf16.mxu0 0
    %123 = vmatpush1.bf16.msra.mxu0 0
    %124 = vmatprep.subr.bf16.mxu0 0
    %125 = vmatpush1.bf16.msra.mxu0 0
    %126 = vmatprep.subr.bf16.mxu0 0
    %127 = vmatpush1.bf16.msra.mxu0 0
    %128 = vmatprep.subr.bf16.mxu0 0
    %129 = vmatpush1.bf16.msra.mxu0 0
    %130 = vmatprep.subr.bf16.mxu0 0
    %131 = vmatpush1.bf16.msra.mxu0 0
    %132 = vmatprep.subr.bf16.mxu0 0
    %133 = vmatpush1.bf16.msra.mxu0 0
    %134 = vmatprep.subr.bf16.mxu0 0
    %135 = vmatpush1.bf16.msra.mxu0 0
    %136 = vmatprep.subr.bf16.mxu0 0
    %137 = vmatpush1.bf16.msra.mxu0 0
    %138 = vmatprep.subr.bf16.mxu0 0
    %139 = vmatpush1.bf16.msra.mxu0 0
    %140 = vmatprep.subr.bf16.mxu0 0
    %141 = vmatpush1.bf16.msra.mxu0 0
    %142 = vmatprep.mubr.bf16.mxu0 0
    %143 = vmatmul.mubr.bf16.gmra.mrb[0].mxu0 %v108
    %v144 = vpop.f32.mrb[0].mxu0
    %v145 = vadd.f32 0.0, %v144
    %v146 = vpop.f32.mrb[0].mxu0
    %v147 = vpop.f32.mrb[0].mxu0
    %v148 = vpop.f32.mrb[0].mxu0
    %149 = vdwg.mxu0
    %v150 = vadd.f32 %v92, %v145
    %v151 = vxor.u32 %v150, 2147483648
    %v152 = vmul.f32 %v151, 1.442695
    %v153 = vpow.pop %v152
    %v154 = vadd.f32 %v153, 1.0
    %v155 = vrcp.pop %v154
    %v156 = vmul.f32 1.0, %v155
    %v157 = vtanh.pop %v150
    %159 = vrot.lane.b32.xlu0 %v90, 32
    %v160 = vpop.permute.xlu0 %159
    %v162 = vmul.f32 %v156, %v160
    %164 = vrot.lane.b32.xlu0 %v157, 32
    %v165 = vpop.permute.xlu0 %164
    %v167 = vmul.f32 %v156, %v165
    %169 = vrot.lane.b32.xlu0 %v167, 32
    %v170 = vpop.permute.xlu0 %169
    %v172 = vadd.f32 %v162, %v170
    %v173 = vtanh.pop %v90
    %175 = vrot.lane.b32.xlu0 %v173, 64
    %v176 = vpop.permute.xlu0 %175
    %v178 = vmul.f32 %v156, %v176
    %180 = vrot.lane.b32.xlu0 %v172, 96
    %v181 = vpop.permute.xlu0 %180
    %v182 = vsel %vm106, %v181, 0
    %184 = vmatprep.subr.mxu0 0.0
    %185 = vmatpush1.msra.mxu0 %v85
    %186 = vmatprep.subr.mxu0 0.0
    %187 = vmatpush1.msra.mxu0 %v86
    %188 = vmatprep.subr.mxu0 0.0
    %189 = vmatpush1.msra.mxu0 %v87
    %190 = vmatprep.subr.mxu0 0.0
    %191 = vmatpush1.msra.mxu0 %v88
    %192 = vmatprep.subr.mxu0 0.0
    %193 = vmatpush1.msra.mxu0 0.0
    %194 = vmatprep.subr.mxu0 0.0
    %195 = vmatpush1.msra.mxu0 0.0
    %196 = vmatprep.subr.mxu0 0.0
    %197 = vmatpush1.msra.mxu0 0.0
    %198 = vmatprep.subr.mxu0 0.0
    %199 = vmatpush1.msra.mxu0 0.0
    %200 = vmatprep.subr.mxu0 0.0
    %201 = vmatpush1.msra.mxu0 0.0
    %202 = vmatprep.subr.mxu0 0.0
    %203 = vmatpush1.msra.mxu0 0.0
    %204 = vmatprep.subr.mxu0 0.0
    %205 = vmatpush1.msra.mxu0 0.0
    %206 = vmatprep.subr.mxu0 0.0
    %207 = vmatpush1.msra.mxu0 0.0
    %208 = vmatprep.subr.mxu0 0.0
    %209 = vmatpush1.msra.mxu0 0.0
    %210 = vmatprep.subr.mxu0 0.0
    %211 = vmatpush1.msra.mxu0 0.0
    %212 = vmatprep.subr.mxu0 0.0
    %213 = vmatpush1.msra.mxu0 0.0
    %214 = vmatprep.subr.mxu0 0.0
    %215 = vmatpush1.msra.mxu0 0.0
    %216 = vmatprep.subr.mxu0 0.0
    %217 = vmatpush1.msra.mxu0 0.0
    %218 = vmatprep.subr.mxu0 0.0
    %219 = vmatpush1.msra.mxu0 0.0
    %220 = vmatprep.subr.mxu0 0.0
    %221 = vmatpush1.msra.mxu0 0.0
    %222 = vmatprep.subr.mxu0 0.0
    %223 = vmatpush1.msra.mxu0 0.0
    %224 = vmatprep.subr.mxu0 0.0
    %225 = vmatpush1.msra.mxu0 0.0
    %226 = vmatprep.subr.mxu0 0.0
    %227 = vmatpush1.msra.mxu0 0.0
    %228 = vmatprep.subr.mxu0 0.0
    %229 = vmatpush1.msra.mxu0 0.0
    %230 = vmatprep.subr.mxu0 0.0
    %231 = vmatpush1.msra.mxu0 0.0
    %232 = vmatprep.subr.mxu0 0.0
    %233 = vmatpush1.msra.mxu0 0.0
    %234 = vmatprep.subr.mxu0 0.0
    %235 = vmatpush1.msra.mxu0 0.0
    %236 = vmatprep.subr.mxu0 0.0
    %237 = vmatpush1.msra.mxu0 0.0
    %238 = vmatprep.subr.mxu0 0.0
    %239 = vmatpush1.msra.mxu0 0.0
    %240 = vmatprep.subr.mxu0 0.0
    %241 = vmatpush1.msra.mxu0 0.0
    %242 = vmatprep.subr.mxu0 0.0
    %243 = vmatpush1.msra.mxu0 0.0
    %244 = vmatprep.subr.mxu0 0.0
    %245 = vmatpush1.msra.mxu0 0.0
    %246 = vmatprep.subr.mxu0 0.0
    %247 = vmatpush1.msra.mxu0 0.0
    %248 = vmatprep.mubr.f32.mxu0 0.0
    %249 = vmatmul.mubr.f32.gmra.mrb[0].mxu0 %v182
    %v250 = vpop.f32.mrb[0].mxu0
    %v251 = vadd.f32 0.0, %v250
    %v252 = vpop.f32.mrb[0].mxu0
    %253 = vdwg.mxu0
    %v254 = vmax.f32 %v251, 1e-06
    %v255 = vmin.f32 %v254, 1000000.0
    %v256 = vmax.f32 %v251, 0.0
    %vm257 = vcmp.ne.f32.partialorder %v251, %v251
    %v258 = vadd.f32 %v251, 0.0
    %v259 = vand.u32 2147483647, %v251
    %v260 = vsub.f32 0.0, %v259
    %v261 = vmul.f32 %v260, 1.442695
    %v262 = vpow.pop %v261
    %v263 = vadd.f32 %v262, 1.0
    %v264 = vlog2.pop %v263
    %v265 = vmul.f32 %v264, 0.6931472
    %v266 = vmul.f32 -0.5, %v262
    %v267 = vadd.f32 %v266, 1.0
    %v268 = vmul.f32 %v267, %v262
    %v269 = vand.u32 2147483647, %v262
    %vm270 = vcmp.lt.f32.partialorder %v269, 0.0004427343
    %v271 = vsel %vm270, %v268, %v265
    %v272 = vadd.f32 %v256, %v271
    %v273 = vsel %vm257, %v258, %v272
    %v274 = vmax.f32 %v273, 1e-06
    %v275 = vld [vmem:[#allocation7] sm:$0xf]
    %v276 = vunpack.c.l.bf16 %v275
    %278 = vrot.lane.b32.xlu0 %v274, 96
    %v279 = vpop.permute.xlu0 %278
    %v281 = vmul.f32 %v276, %v279
    %v282 = vadd.f32 %v255, %v281
    %284 = vrot.lane.b32.xlu0 %v178, 64
    %v285 = vpop.permute.xlu0 %284
    %288 = vrot.lane.b32.xlu0 %v282, 32
    %v289 = vpop.permute.xlu0 %288
    %292 = vrot.lane.b32.xlu0 %v255, 64
    %v293 = vpop.permute.xlu0 %292
    %295 = vrot.lane.b32.xlu0 %v274, 64
    %v296 = vpop.permute.xlu0 %295
    %v298 = vsel %vm106, %v285, %v289
    %vm299 = vcmask 523264
    %v300 = vsel %vm299, %v298, %v293
    %vm301 = vcmask 785408
    %v302 = vsel %vm301, %v300, %v296
    %303 = vst [vmem:[#allocation12] sm:$0xff] %v302
    %s304 = scalar_lea.vmem [#allocation4], 4
    %v305 = vld [vmem:[%s304] sm:$0xf]
    %v306 = vunpack.c.l.bf16 %v305
    %v307 = vpack.c.bf16 %v178, %v178
    %309 = vrot.lane.b32.xlu0 %v307, 64
    %v310 = vpop.permute.xlu0 %309
    %v312 = vsel %vm106, %v310, 0
    %314 = vmatprep.subr.bf16.mxu0 0
    %315 = vmatpush1.bf16.msra.mxu0 %v102
    %316 = vmatprep.subr.bf16.mxu0 0
    %317 = vmatpush1.bf16.msra.mxu0 %v103
    %318 = vmatprep.subr.bf16.mxu0 0
    %319 = vmatpush1.bf16.msra.mxu0 0
    %320 = vmatprep.subr.bf16.mxu0 0
    %321 = vmatpush1.bf16.msra.mxu0 0
    %322 = vmatprep.subr.bf16.mxu0 0
    %323 = vmatpush1.bf16.msra.mxu0 0
    %324 = vmatprep.subr.bf16.mxu0 0
    %325 = vmatpush1.bf16.msra.mxu0 0
    %326 = vmatprep.subr.bf16.mxu0 0
    %327 = vmatpush1.bf16.msra.mxu0 0
    %328 = vmatprep.subr.bf16.mxu0 0
    %329 = vmatpush1.bf16.msra.mxu0 0
    %330 = vmatprep.subr.bf16.mxu0 0
    %331 = vmatpush1.bf16.msra.mxu0 0
    %332 = vmatprep.subr.bf16.mxu0 0
    %333 = vmatpush1.bf16.msra.mxu0 0
    %334 = vmatprep.subr.bf16.mxu0 0
    %335 = vmatpush1.bf16.msra.mxu0 0
    %336 = vmatprep.subr.bf16.mxu0 0
    %337 = vmatpush1.bf16.msra.mxu0 0
    %338 = vmatprep.subr.bf16.mxu0 0
    %339 = vmatpush1.bf16.msra.mxu0 0
    %340 = vmatprep.subr.bf16.mxu0 0
    %341 = vmatpush1.bf16.msra.mxu0 0
    %342 = vmatprep.subr.bf16.mxu0 0
    %343 = vmatpush1.bf16.msra.mxu0 0
    %344 = vmatprep.subr.bf16.mxu0 0
    %345 = vmatpush1.bf16.msra.mxu0 0
    %346 = vmatprep.mubr.bf16.mxu0 0
    %347 = vmatmul.mubr.bf16.gmra.mrb[0].mxu0 %v312
    %v348 = vpop.f32.mrb[0].mxu0
    %v349 = vadd.f32 0.0, %v348
    %v350 = vpop.f32.mrb[0].mxu0
    %v351 = vpop.f32.mrb[0].mxu0
    %v352 = vpop.f32.mrb[0].mxu0
    %353 = vdwg.mxu0
    %v354 = vadd.f32 %v306, %v349
    %v355 = vxor.u32 %v354, 2147483648
    %v356 = vmul.f32 %v355, 1.442695
    %v357 = vpow.pop %v356
    %v358 = vadd.f32 %v357, 1.0
    %v359 = vrcp.pop %v358
    %v360 = vmul.f32 1.0, %v359
    %v361 = vtanh.pop %v354
    %v362 = vmul.f32 %v360, %v289
    %364 = vrot.lane.b32.xlu0 %v361, 32
    %v365 = vpop.permute.xlu0 %364
    %v367 = vmul.f32 %v360, %v365
    %369 = vrot.lane.b32.xlu0 %v367, 32
    %v370 = vpop.permute.xlu0 %369
    %v372 = vadd.f32 %v362, %v370
    %v373 = vtanh.pop %v282
    %375 = vrot.lane.b32.xlu0 %v373, 64
    %v376 = vpop.permute.xlu0 %375
    %v378 = vmul.f32 %v360, %v376
    %380 = vrot.lane.b32.xlu0 %v372, 96
    %v381 = vpop.permute.xlu0 %380
    %v382 = vsel %vm106, %v381, 0
    %384 = vmatprep.subr.mxu0 0.0
    %385 = vmatpush1.msra.mxu0 %v85
    %386 = vmatprep.subr.mxu0 0.0
    %387 = vmatpush1.msra.mxu0 %v86
    %388 = vmatprep.subr.mxu0 0.0
    %389 = vmatpush1.msra.mxu0 %v87
    %390 = vmatprep.subr.mxu0 0.0
    %391 = vmatpush1.msra.mxu0 %v88
    %392 = vmatprep.subr.mxu0 0.0
    %393 = vmatpush1.msra.mxu0 0.0
    %394 = vmatprep.subr.mxu0 0.0
    %395 = vmatpush1.msra.mxu0 0.0
    %396 = vmatprep.subr.mxu0 0.0
    %397 = vmatpush1.msra.mxu0 0.0
    %398 = vmatprep.subr.mxu0 0.0
    %399 = vmatpush1.msra.mxu0 0.0
    %400 = vmatprep.subr.mxu0 0.0
    %401 = vmatpush1.msra.mxu0 0.0
    %402 = vmatprep.subr.mxu0 0.0
    %403 = vmatpush1.msra.mxu0 0.0
    %404 = vmatprep.subr.mxu0 0.0
    %405 = vmatpush1.msra.mxu0 0.0
    %406 = vmatprep.subr.mxu0 0.0
    %407 = vmatpush1.msra.mxu0 0.0
    %408 = vmatprep.subr.mxu0 0.0
    %409 = vmatpush1.msra.mxu0 0.0
    %410 = vmatprep.subr.mxu0 0.0
    %411 = vmatpush1.msra.mxu0 0.0
    %412 = vmatprep.subr.mxu0 0.0
    %413 = vmatpush1.msra.mxu0 0.0
    %414 = vmatprep.subr.mxu0 0.0
    %415 = vmatpush1.msra.mxu0 0.0
    %416 = vmatprep.subr.mxu0 0.0
    %417 = vmatpush1.msra.mxu0 0.0
    %418 = vmatprep.subr.mxu0 0.0
    %419 = vmatpush1.msra.mxu0 0.0
    %420 = vmatprep.subr.mxu0 0.0
    %421 = vmatpush1.msra.mxu0 0.0
    %422 = vmatprep.subr.mxu0 0.0
    %423 = vmatpush1.msra.mxu0 0.0
    %424 = vmatprep.subr.mxu0 0.0
    %425 = vmatpush1.msra.mxu0 0.0
    %426 = vmatprep.subr.mxu0 0.0
    %427 = vmatpush1.msra.mxu0 0.0
    %428 = vmatprep.subr.mxu0 0.0
    %429 = vmatpush1.msra.mxu0 0.0
    %430 = vmatprep.subr.mxu0 0.0
    %431 = vmatpush1.msra.mxu0 0.0
    %432 = vmatprep.subr.mxu0 0.0
    %433 = vmatpush1.msra.mxu0 0.0
    %434 = vmatprep.subr.mxu0 0.0
    %435 = vmatpush1.msra.mxu0 0.0
    %436 = vmatprep.subr.mxu0 0.0
    %437 = vmatpush1.msra.mxu0 0.0
    %438 = vmatprep.subr.mxu0 0.0
    %439 = vmatpush1.msra.mxu0 0.0
    %440 = vmatprep.subr.mxu0 0.0
    %441 = vmatpush1.msra.mxu0 0.0
    %442 = vmatprep.subr.mxu0 0.0
    %443 = vmatpush1.msra.mxu0 0.0
    %444 = vmatprep.subr.mxu0 0.0
    %445 = vmatpush1.msra.mxu0 0.0
    %446 = vmatprep.subr.mxu0 0.0
    %447 = vmatpush1.msra.mxu0 0.0
    %448 = vmatprep.mubr.f32.mxu0 0.0
    %449 = vmatmul.mubr.f32.gmra.mrb[0].mxu0 %v382
    %v450 = vpop.f32.mrb[0].mxu0
    %v451 = vadd.f32 0.0, %v450
    %v452 = vpop.f32.mrb[0].mxu0
    %453 = vdwg.mxu0
    %v454 = vmax.f32 %v451, 1e-06
    %v455 = vmin.f32 %v454, 1000000.0
    %v456 = vmax.f32 %v451, 0.0
    %vm457 = vcmp.ne.f32.partialorder %v451, %v451
    %v458 = vadd.f32 %v451, 0.0
    %v459 = vand.u32 2147483647, %v451
    %v460 = vsub.f32 0.0, %v459
    %v461 = vmul.f32 %v460, 1.442695
    %v462 = vpow.pop %v461
    %v463 = vadd.f32 %v462, 1.0
    %v464 = vlog2.pop %v463
    %v465 = vmul.f32 %v464, 0.6931472
    %v466 = vmul.f32 -0.5, %v462
    %v467 = vadd.f32 %v466, 1.0
    %v468 = vmul.f32 %v467, %v462
    %v469 = vand.u32 2147483647, %v462
    %vm470 = vcmp.lt.f32.partialorder %v469, 0.0004427343
    %v471 = vsel %vm470, %v468, %v465
    %v472 = vadd.f32 %v456, %v471
    %v473 = vsel %vm457, %v458, %v472
    %v474 = vmax.f32 %v473, 1e-06
    %s475 = scalar_lea.vmem [#allocation7], 4
    %v476 = vld [vmem:[%s475] sm:$0xf]
    %v477 = vunpack.c.l.bf16 %v476
    %479 = vrot.lane.b32.xlu0 %v474, 96
    %v480 = vpop.permute.xlu0 %479
    %v482 = vmul.f32 %v477, %v480
    %v483 = vadd.f32 %v455, %v482
    %485 = vrot.lane.b32.xlu0 %v378, 64
    %v486 = vpop.permute.xlu0 %485
    %489 = vrot.lane.b32.xlu0 %v483, 32
    %v490 = vpop.permute.xlu0 %489
    %493 = vrot.lane.b32.xlu0 %v455, 64
    %v494 = vpop.permute.xlu0 %493
    %496 = vrot.lane.b32.xlu0 %v474, 64
    %v497 = vpop.permute.xlu0 %496
    %v499 = vsel %vm106, %v486, %v490
    %v500 = vsel %vm299, %v499, %v494
    %v501 = vsel %vm301, %v500, %v497
    %s502 = scalar_lea.vmem [#allocation12], 8
    %503 = vst [vmem:[%s502] sm:$0xff] %v501
    %s504 = scalar_lea.vmem [#allocation4], 8
    %v505 = vld [vmem:[%s504] sm:$0xf]
    %v506 = vunpack.c.l.bf16 %v505
    %v507 = vpack.c.bf16 %v378, %v378
    %509 = vrot.lane.b32.xlu0 %v507, 64
    %v510 = vpop.permute.xlu0 %509
    %v512 = vsel %vm106, %v510, 0
    %514 = vmatprep.subr.bf16.mxu0 0
    %515 = vmatpush1.bf16.msra.mxu0 %v102
    %516 = vmatprep.subr.bf16.mxu0 0
    %517 = vmatpush1.bf16.msra.mxu0 %v103
    %518 = vmatprep.subr.bf16.mxu0 0
    %519 = vmatpush1.bf16.msra.mxu0 0
    %520 = vmatprep.subr.bf16.mxu0 0
    %521 = vmatpush1.bf16.msra.mxu0 0
    %522 = vmatprep.subr.bf16.mxu0 0
    %523 = vmatpush1.bf16.msra.mxu0 0
    %524 = vmatprep.subr.bf16.mxu0 0
    %525 = vmatpush1.bf16.msra.mxu0 0
    %526 = vmatprep.subr.bf16.mxu0 0
    %527 = vmatpush1.bf16.msra.mxu0 0
    %528 = vmatprep.subr.bf16.mxu0 0
    %529 = vmatpush1.bf16.msra.mxu0 0
    %530 = vmatprep.subr.bf16.mxu0 0
    %531 = vmatpush1.bf16.msra.mxu0 0
    %532 = vmatprep.subr.bf16.mxu0 0
    %533 = vmatpush1.bf16.msra.mxu0 0
    %534 = vmatprep.subr.bf16.mxu0 0
    %535 = vmatpush1.bf16.msra.mxu0 0
    %536 = vmatprep.subr.bf16.mxu0 0
    %537 = vmatpush1.bf16.msra.mxu0 0
    %538 = vmatprep.subr.bf16.mxu0 0
    %539 = vmatpush1.bf16.msra.mxu0 0
    %540 = vmatprep.subr.bf16.mxu0 0
    %541 = vmatpush1.bf16.msra.mxu0 0
    %542 = vmatprep.subr.bf16.mxu0 0
    %543 = vmatpush1.bf16.msra.mxu0 0
    %544 = vmatprep.subr.bf16.mxu0 0
    %545 = vmatpush1.bf16.msra.mxu0 0
    %546 = vmatprep.mubr.bf16.mxu0 0
    %547 = vmatmul.mubr.bf16.gmra.mrb[0].mxu0 %v512
    %v548 = vpop.f32.mrb[0].mxu0
    %v549 = vadd.f32 0.0, %v548
    %v550 = vpop.f32.mrb[0].mxu0
    %v551 = vpop.f32.mrb[0].mxu0
    %v552 = vpop.f32.mrb[0].mxu0
    %553 = vdwg.mxu0
    %v554 = vadd.f32 %v506, %v549
    %v555 = vxor.u32 %v554, 2147483648
    %v556 = vmul.f32 %v555, 1.442695
    %v557 = vpow.pop %v556
    %v558 = vadd.f32 %v557, 1.0
    %v559 = vrcp.pop %v558
    %v560 = vmul.f32 1.0, %v559
    %v561 = vtanh.pop %v554
    %v562 = vmul.f32 %v560, %v490
    %564 = vrot.lane.b32.xlu0 %v561, 32
    %v565 = vpop.permute.xlu0 %564
    %v567 = vmul.f32 %v560, %v565
    %569 = vrot.lane.b32.xlu0 %v567, 32
    %v570 = vpop.permute.xlu0 %569
    %v572 = vadd.f32 %v562, %v570
    %v573 = vtanh.pop %v483
    %575 = vrot.lane.b32.xlu0 %v573, 64
    %v576 = vpop.permute.xlu0 %575
    %v578 = vmul.f32 %v560, %v576
    %580 = vrot.lane.b32.xlu0 %v572, 96
    %v581 = vpop.permute.xlu0 %580
    %v582 = vsel %vm106, %v581, 0
    %584 = vmatprep.subr.mxu0 0.0
    %585 = vmatpush1.msra.mxu0 %v85
    %586 = vmatprep.subr.mxu0 0.0
    %587 = vmatpush1.msra.mxu0 %v86
    %588 = vmatprep.subr.mxu0 0.0
    %589 = vmatpush1.msra.mxu0 %v87
    %590 = vmatprep.subr.mxu0 0.0
    %591 = vmatpush1.msra.mxu0 %v88
    %592 = vmatprep.subr.mxu0 0.0
    %593 = vmatpush1.msra.mxu0 0.0
    %594 = vmatprep.subr.mxu0 0.0
    %595 = vmatpush1.msra.mxu0 0.0
    %596 = vmatprep.subr.mxu0 0.0
    %597 = vmatpush1.msra.mxu0 0.0
    %598 = vmatprep.subr.mxu0 0.0
    %599 = vmatpush1.msra.mxu0 0.0
    %600 = vmatprep.subr.mxu0 0.0
    %601 = vmatpush1.msra.mxu0 0.0
    %602 = vmatprep.subr.mxu0 0.0
    %603 = vmatpush1.msra.mxu0 0.0
    %604 = vmatprep.subr.mxu0 0.0
    %605 = vmatpush1.msra.mxu0 0.0
    %606 = vmatprep.subr.mxu0 0.0
    %607 = vmatpush1.msra.mxu0 0.0
    %608 = vmatprep.subr.mxu0 0.0
    %609 = vmatpush1.msra.mxu0 0.0
    %610 = vmatprep.subr.mxu0 0.0
    %611 = vmatpush1.msra.mxu0 0.0
    %612 = vmatprep.subr.mxu0 0.0
    %613 = vmatpush1.msra.mxu0 0.0
    %614 = vmatprep.subr.mxu0 0.0
    %615 = vmatpush1.msra.mxu0 0.0
    %616 = vmatprep.subr.mxu0 0.0
    %617 = vmatpush1.msra.mxu0 0.0
    %618 = vmatprep.subr.mxu0 0.0
    %619 = vmatpush1.msra.mxu0 0.0
    %620 = vmatprep.subr.mxu0 0.0
    %621 = vmatpush1.msra.mxu0 0.0
    %622 = vmatprep.subr.mxu0 0.0
    %623 = vmatpush1.msra.mxu0 0.0
    %624 = vmatprep.subr.mxu0 0.0
    %625 = vmatpush1.msra.mxu0 0.0
    %626 = vmatprep.subr.mxu0 0.0
    %627 = vmatpush1.msra.mxu0 0.0
    %628 = vmatprep.subr.mxu0 0.0
    %629 = vmatpush1.msra.mxu0 0.0
    %630 = vmatprep.subr.mxu0 0.0
    %631 = vmatpush1.msra.mxu0 0.0
    %632 = vmatprep.subr.mxu0 0.0
    %633 = vmatpush1.msra.mxu0 0.0
    %634 = vmatprep.subr.mxu0 0.0
    %635 = vmatpush1.msra.mxu0 0.0
    %636 = vmatprep.subr.mxu0 0.0
    %637 = vmatpush1.msra.mxu0 0.0
    %638 = vmatprep.subr.mxu0 0.0
    %639 = vmatpush1.msra.mxu0 0.0
    %640 = vmatprep.subr.mxu0 0.0
    %641 = vmatpush1.msra.mxu0 0.0
    %642 = vmatprep.subr.mxu0 0.0
    %643 = vmatpush1.msra.mxu0 0.0
    %644 = vmatprep.subr.mxu0 0.0
    %645 = vmatpush1.msra.mxu0 0.0
    %646 = vmatprep.subr.mxu0 0.0
    %647 = vmatpush1.msra.mxu0 0.0
    %648 = vmatprep.mubr.f32.mxu0 0.0
    %649 = vmatmul.mubr.f32.gmra.mrb[0].mxu0 %v582
    %v650 = vpop.f32.mrb[0].mxu0
    %v651 = vadd.f32 0.0, %v650
    %v652 = vpop.f32.mrb[0].mxu0
    %653 = vdwg.mxu0
    %v654 = vmax.f32 %v651, 1e-06
    %v655 = vmin.f32 %v654, 1000000.0
    %v656 = vmax.f32 %v651, 0.0
    %vm657 = vcmp.ne.f32.partialorder %v651, %v651
    %v658 = vadd.f32 %v651, 0.0
    %v659 = vand.u32 2147483647, %v651
    %v660 = vsub.f32 0.0, %v659
    %v661 = vmul.f32 %v660, 1.442695
    %v662 = vpow.pop %v661
    %v663 = vadd.f32 %v662, 1.0
    %v664 = vlog2.pop %v663
    %v665 = vmul.f32 %v664, 0.6931472
    %v666 = vmul.f32 -0.5, %v662
    %v667 = vadd.f32 %v666, 1.0
    %v668 = vmul.f32 %v667, %v662
    %v669 = vand.u32 2147483647, %v662
    %vm670 = vcmp.lt.f32.partialorder %v669, 0.0004427343
    %v671 = vsel %vm670, %v668, %v665
    %v672 = vadd.f32 %v656, %v671
    %v673 = vsel %vm657, %v658, %v672
    %v674 = vmax.f32 %v673, 1e-06
    %s675 = scalar_lea.vmem [#allocation7], 8
    %v676 = vld [vmem:[%s675] sm:$0xf]
    %v677 = vunpack.c.l.bf16 %v676
    %679 = vrot.lane.b32.xlu0 %v674, 96
    %v680 = vpop.permute.xlu0 %679
    %v682 = vmul.f32 %v677, %v680
    %v683 = vadd.f32 %v655, %v682
    %685 = vrot.lane.b32.xlu0 %v578, 64
    %v686 = vpop.permute.xlu0 %685
    %689 = vrot.lane.b32.xlu0 %v683, 32
    %v690 = vpop.permute.xlu0 %689
    %693 = vrot.lane.b32.xlu0 %v655, 64
    %v694 = vpop.permute.xlu0 %693
    %696 = vrot.lane.b32.xlu0 %v674, 64
    %v697 = vpop.permute.xlu0 %696
    %v699 = vsel %vm106, %v686, %v690
    %v700 = vsel %vm299, %v699, %v694
    %v701 = vsel %vm301, %v700, %v697
    %s702 = scalar_lea.vmem [#allocation12], 16
    %703 = vst [vmem:[%s702] sm:$0xff] %v701
    %s704 = scalar_lea.vmem [#allocation4], 12
    %v705 = vld [vmem:[%s704] sm:$0xf]
    %v706 = vunpack.c.l.bf16 %v705
    %v707 = vpack.c.bf16 %v578, %v578
    %709 = vrot.lane.b32.xlu0 %v707, 64
    %v710 = vpop.permute.xlu0 %709
    %v712 = vsel %vm106, %v710, 0
    %714 = vmatprep.subr.bf16.mxu0 0
    %715 = vmatpush1.bf16.msra.mxu0 %v102
    %716 = vmatprep.subr.bf16.mxu0 0
    %717 = vmatpush1.bf16.msra.mxu0 %v103
    %718 = vmatprep.subr.bf16.mxu0 0
    %719 = vmatpush1.bf16.msra.mxu0 0
    %720 = vmatprep.subr.bf16.mxu0 0
    %721 = vmatpush1.bf16.msra.mxu0 0
    %722 = vmatprep.subr.bf16.mxu0 0
    %723 = vmatpush1.bf16.msra.mxu0 0
    %724 = vmatprep.subr.bf16.mxu0 0
    %725 = vmatpush1.bf16.msra.mxu0 0
    %726 = vmatprep.subr.bf16.mxu0 0
    %727 = vmatpush1.bf16.msra.mxu0 0
    %728 = vmatprep.subr.bf16.mxu0 0
    %729 = vmatpush1.bf16.msra.mxu0 0
    %730 = vmatprep.subr.bf16.mxu0 0
    %731 = vmatpush1.bf16.msra.mxu0 0
    %732 = vmatprep.subr.bf16.mxu0 0
    %733 = vmatpush1.bf16.msra.mxu0 0
    %734 = vmatprep.subr.bf16.mxu0 0
    %735 = vmatpush1.bf16.msra.mxu0 0
    %736 = vmatprep.subr.bf16.mxu0 0
    %737 = vmatpush1.bf16.msra.mxu0 0
    %738 = vmatprep.subr.bf16.mxu0 0
    %739 = vmatpush1.bf16.msra.mxu0 0
    %740 = vmatprep.subr.bf16.mxu0 0
    %741 = vmatpush1.bf16.msra.mxu0 0
    %742 = vmatprep.subr.bf16.mxu0 0
    %743 = vmatpush1.bf16.msra.mxu0 0
    %744 = vmatprep.subr.bf16.mxu0 0
    %745 = vmatpush1.bf16.msra.mxu0 0
    %746 = vmatprep.mubr.bf16.mxu0 0
    %747 = vmatmul.mubr.bf16.gmra.mrb[0].mxu0 %v712
    %v748 = vpop.f32.mrb[0].mxu0
    %v749 = vadd.f32 0.0, %v748
    %v750 = vpop.f32.mrb[0].mxu0
    %v751 = vpop.f32.mrb[0].mxu0
    %v752 = vpop.f32.mrb[0].mxu0
    %753 = vdwg.mxu0
    %v754 = vadd.f32 %v706, %v749
    %v755 = vxor.u32 %v754, 2147483648
    %v756 = vmul.f32 %v755, 1.442695
    %v757 = vpow.pop %v756
    %v758 = vadd.f32 %v757, 1.0
    %v759 = vrcp.pop %v758
    %v760 = vmul.f32 1.0, %v759
    %v761 = vtanh.pop %v754
    %v762 = vmul.f32 %v760, %v690
    %764 = vrot.lane.b32.xlu0 %v761, 32
    %v765 = vpop.permute.xlu0 %764
    %v767 = vmul.f32 %v760, %v765
    %769 = vrot.lane.b32.xlu0 %v767, 32
    %v770 = vpop.permute.xlu0 %769
    %v772 = vadd.f32 %v762, %v770
    %v773 = vtanh.pop %v683
    %775 = vrot.lane.b32.xlu0 %v773, 64
    %v776 = vpop.permute.xlu0 %775
    %v778 = vmul.f32 %v760, %v776
    %780 = vrot.lane.b32.xlu0 %v772, 96
    %v781 = vpop.permute.xlu0 %780
    %v782 = vsel %vm106, %v781, 0
    %784 = vmatprep.subr.mxu0 0.0
    %785 = vmatpush1.msra.mxu0 %v85
    %786 = vmatprep.subr.mxu0 0.0
    %787 = vmatpush1.msra.mxu0 %v86
    %788 = vmatprep.subr.mxu0 0.0
    %789 = vmatpush1.msra.mxu0 %v87
    %790 = vmatprep.subr.mxu0 0.0
    %791 = vmatpush1.msra.mxu0 %v88
    %792 = vmatprep.subr.mxu0 0.0
    %793 = vmatpush1.msra.mxu0 0.0
    %794 = vmatprep.subr.mxu0 0.0
    %795 = vmatpush1.msra.mxu0 0.0
    %796 = vmatprep.subr.mxu0 0.0
    %797 = vmatpush1.msra.mxu0 0.0
    %798 = vmatprep.subr.mxu0 0.0
    %799 = vmatpush1.msra.mxu0 0.0
    %800 = vmatprep.subr.mxu0 0.0
    %801 = vmatpush1.msra.mxu0 0.0
    %802 = vmatprep.subr.mxu0 0.0
    %803 = vmatpush1.msra.mxu0 0.0
    %804 = vmatprep.subr.mxu0 0.0
    %805 = vmatpush1.msra.mxu0 0.0
    %806 = vmatprep.subr.mxu0 0.0
    %807 = vmatpush1.msra.mxu0 0.0
    %808 = vmatprep.subr.mxu0 0.0
    %809 = vmatpush1.msra.mxu0 0.0
    %810 = vmatprep.subr.mxu0 0.0
    %811 = vmatpush1.msra.mxu0 0.0
    %812 = vmatprep.subr.mxu0 0.0
    %813 = vmatpush1.msra.mxu0 0.0
    %814 = vmatprep.subr.mxu0 0.0
    %815 = vmatpush1.msra.mxu0 0.0
    %816 = vmatprep.subr.mxu0 0.0
    %817 = vmatpush1.msra.mxu0 0.0
    %818 = vmatprep.subr.mxu0 0.0
    %819 = vmatpush1.msra.mxu0 0.0
    %820 = vmatprep.subr.mxu0 0.0
    %821 = vmatpush1.msra.mxu0 0.0
    %822 = vmatprep.subr.mxu0 0.0
    %823 = vmatpush1.msra.mxu0 0.0
    %824 = vmatprep.subr.mxu0 0.0
    %825 = vmatpush1.msra.mxu0 0.0
    %826 = vmatprep.subr.mxu0 0.0
    %827 = vmatpush1.msra.mxu0 0.0
    %828 = vmatprep.subr.mxu0 0.0
    %829 = vmatpush1.msra.mxu0 0.0
    %830 = vmatprep.subr.mxu0 0.0
    %831 = vmatpush1.msra.mxu0 0.0
    %832 = vmatprep.subr.mxu0 0.0
    %833 = vmatpush1.msra.mxu0 0.0
    %834 = vmatprep.subr.mxu0 0.0
    %835 = vmatpush1.msra.mxu0 0.0
    %836 = vmatprep.subr.mxu0 0.0
    %837 = vmatpush1.msra.mxu0 0.0
    %838 = vmatprep.subr.mxu0 0.0
    %839 = vmatpush1.msra.mxu0 0.0
    %840 = vmatprep.subr.mxu0 0.0
    %841 = vmatpush1.msra.mxu0 0.0
    %842 = vmatprep.subr.mxu0 0.0
    %843 = vmatpush1.msra.mxu0 0.0
    %844 = vmatprep.subr.mxu0 0.0
    %845 = vmatpush1.msra.mxu0 0.0
    %846 = vmatprep.subr.mxu0 0.0
    %847 = vmatpush1.msra.mxu0 0.0
    %848 = vmatprep.mubr.f32.mxu0 0.0
    %849 = vmatmul.mubr.f32.gmra.mrb[0].mxu0 %v782
    %v850 = vpop.f32.mrb[0].mxu0
    %v851 = vadd.f32 0.0, %v850
    %v852 = vpop.f32.mrb[0].mxu0
    %853 = vdwg.mxu0
    %v854 = vmax.f32 %v851, 1e-06
    %v855 = vmin.f32 %v854, 1000000.0
    %v856 = vmax.f32 %v851, 0.0
    %vm857 = vcmp.ne.f32.partialorder %v851, %v851
    %v858 = vadd.f32 %v851, 0.0
    %v859 = vand.u32 2147483647, %v851
    %v860 = vsub.f32 0.0, %v859
    %v861 = vmul.f32 %v860, 1.442695
    %v862 = vpow.pop %v861
    %v863 = vadd.f32 %v862, 1.0
    %v864 = vlog2.pop %v863
    %v865 = vmul.f32 %v864, 0.6931472
    %v866 = vmul.f32 -0.5, %v862
    %v867 = vadd.f32 %v866, 1.0
    %v868 = vmul.f32 %v867, %v862
    %v869 = vand.u32 2147483647, %v862
    %vm870 = vcmp.lt.f32.partialorder %v869, 0.0004427343
    %v871 = vsel %vm870, %v868, %v865
    %v872 = vadd.f32 %v856, %v871
    %v873 = vsel %vm857, %v858, %v872
    %v874 = vmax.f32 %v873, 1e-06
    %s875 = scalar_lea.vmem [#allocation7], 12
    %v876 = vld [vmem:[%s875] sm:$0xf]
    %v877 = vunpack.c.l.bf16 %v876
    %879 = vrot.lane.b32.xlu0 %v874, 96
    %v880 = vpop.permute.xlu0 %879
    %v882 = vmul.f32 %v877, %v880
    %v883 = vadd.f32 %v855, %v882
    %885 = vrot.lane.b32.xlu0 %v778, 64
    %v886 = vpop.permute.xlu0 %885
    %889 = vrot.lane.b32.xlu0 %v883, 32
    %v890 = vpop.permute.xlu0 %889
    %893 = vrot.lane.b32.xlu0 %v855, 64
    %v894 = vpop.permute.xlu0 %893
    %896 = vrot.lane.b32.xlu0 %v874, 64
    %v897 = vpop.permute.xlu0 %896
    %v899 = vsel %vm106, %v886, %v890
    %v900 = vsel %vm299, %v899, %v894
    %v901 = vsel %vm301, %v900, %v897
    %s902 = scalar_lea.vmem [#allocation12], 24
    %903 = vst [vmem:[%s902] sm:$0xff] %v901
    %s904 = scalar_lea.vmem [#allocation4], 16
    %v905 = vld [vmem:[%s904] sm:$0xf]
    %v906 = vunpack.c.l.bf16 %v905
    %v907 = vpack.c.bf16 %v778, %v778
    %909 = vrot.lane.b32.xlu0 %v907, 64
    %v910 = vpop.permute.xlu0 %909
    %v912 = vsel %vm106, %v910, 0
    %914 = vmatprep.subr.bf16.mxu0 0
    %915 = vmatpush1.bf16.msra.mxu0 %v102
    %916 = vmatprep.subr.bf16.mxu0 0
    %917 = vmatpush1.bf16.msra.mxu0 %v103
    %918 = vmatprep.subr.bf16.mxu0 0
    %919 = vmatpush1.bf16.msra.mxu0 0
    %920 = vmatprep.subr.bf16.mxu0 0
    %921 = vmatpush1.bf16.msra.mxu0 0
    %922 = vmatprep.subr.bf16.mxu0 0
    %923 = vmatpush1.bf16.msra.mxu0 0
    %924 = vmatprep.subr.bf16.mxu0 0
    %925 = vmatpush1.bf16.msra.mxu0 0
    %926 = vmatprep.subr.bf16.mxu0 0
    %927 = vmatpush1.bf16.msra.mxu0 0
    %928 = vmatprep.subr.bf16.mxu0 0
    %929 = vmatpush1.bf16.msra.mxu0 0
    %930 = vmatprep.subr.bf16.mxu0 0
    %931 = vmatpush1.bf16.msra.mxu0 0
    %932 = vmatprep.subr.bf16.mxu0 0
    %933 = vmatpush1.bf16.msra.mxu0 0
    %934 = vmatprep.subr.bf16.mxu0 0
    %935 = vmatpush1.bf16.msra.mxu0 0
    %936 = vmatprep.subr.bf16.mxu0 0
    %937 = vmatpush1.bf16.msra.mxu0 0
    %938 = vmatprep.subr.bf16.mxu0 0
    %939 = vmatpush1.bf16.msra.mxu0 0
    %940 = vmatprep.subr.bf16.mxu0 0
    %941 = vmatpush1.bf16.msra.mxu0 0
    %942 = vmatprep.subr.bf16.mxu0 0
    %943 = vmatpush1.bf16.msra.mxu0 0
    %944 = vmatprep.subr.bf16.mxu0 0
    %945 = vmatpush1.bf16.msra.mxu0 0
    %946 = vmatprep.mubr.bf16.mxu0 0
    %947 = vmatmul.mubr.bf16.gmra.mrb[0].mxu0 %v912
    %v948 = vpop.f32.mrb[0].mxu0
    %v949 = vadd.f32 0.0, %v948
    %v950 = vpop.f32.mrb[0].mxu0
    %v951 = vpop.f32.mrb[0].mxu0
    %v952 = vpop.f32.mrb[0].mxu0
    %953 = vdwg.mxu0
    %v954 = vadd.f32 %v906, %v949
    %v955 = vxor.u32 %v954, 2147483648
    %v956 = vmul.f32 %v955, 1.442695
    %v957 = vpow.pop %v956
    %v958 = vadd.f32 %v957, 1.0
    %v959 = vrcp.pop %v958
    %v960 = vmul.f32 1.0, %v959
    %v961 = vtanh.pop %v954
    %v962 = vmul.f32 %v960, %v890
    %964 = vrot.lane.b32.xlu0 %v961, 32
    %v965 = vpop.permute.xlu0 %964
    %v967 = vmul.f32 %v960, %v965
    %969 = vrot.lane.b32.xlu0 %v967, 32
    %v970 = vpop.permute.xlu0 %969
    %v972 = vadd.f32 %v962, %v970
    %v973 = vtanh.pop %v883
    %975 = vrot.lane.b32.xlu0 %v973, 64
    %v976 = vpop.permute.xlu0 %975
    %v978 = vmul.f32 %v960, %v976
    %980 = vrot.lane.b32.xlu0 %v972, 96
    %v981 = vpop.permute.xlu0 %980
    %v982 = vsel %vm106, %v981, 0
    %984 = vmatprep.subr.mxu0 0.0
    %985 = vmatpush1.msra.mxu0 %v85
    %986 = vmatprep.subr.mxu0 0.0
    %987 = vmatpush1.msra.mxu0 %v86
    %988 = vmatprep.subr.mxu0 0.0
    %989 = vmatpush1.msra.mxu0 %v87
    %990 = vmatprep.subr.mxu0 0.0
    %991 = vmatpush1.msra.mxu0 %v88
    %992 = vmatprep.subr.mxu0 0.0
    %993 = vmatpush1.msra.mxu0 0.0
    %994 = vmatprep.subr.mxu0 0.0
    %995 = vmatpush1.msra.mxu0 0.0
    %996 = vmatprep.subr.mxu0 0.0
    %997 = vmatpush1.msra.mxu0 0.0
    %998 = vmatprep.subr.mxu0 0.0
    %999 = vmatpush1.msra.mxu0 0.0
    %1000 = vmatprep.subr.mxu0 0.0
    %1001 = vmatpush1.msra.mxu0 0.0
    %1002 = vmatprep.subr.mxu0 0.0
    %1003 = vmatpush1.msra.mxu0 0.0
    %1004 = vmatprep.subr.mxu0 0.0
    %1005 = vmatpush1.msra.mxu0 0.0
    %1006 = vmatprep.subr.mxu0 0.0
    %1007 = vmatpush1.msra.mxu0 0.0
    %1008 = vmatprep.subr.mxu0 0.0
    %1009 = vmatpush1.msra.mxu0 0.0
    %1010 = vmatprep.subr.mxu0 0.0
    %1011 = vmatpush1.msra.mxu0 0.0
    %1012 = vmatprep.subr.mxu0 0.0
    %1013 = vmatpush1.msra.mxu0 0.0
    %1014 = vmatprep.subr.mxu0 0.0
    %1015 = vmatpush1.msra.mxu0 0.0
    %1016 = vmatprep.subr.mxu0 0.0
    %1017 = vmatpush1.msra.mxu0 0.0
    %1018 = vmatprep.subr.mxu0 0.0
    %1019 = vmatpush1.msra.mxu0 0.0
    %1020 = vmatprep.subr.mxu0 0.0
    %1021 = vmatpush1.msra.mxu0 0.0
    %1022 = vmatprep.subr.mxu0 0.0
    %1023 = vmatpush1.msra.mxu0 0.0
    %1024 = vmatprep.subr.mxu0 0.0
    %1025 = vmatpush1.msra.mxu0 0.0
    %1026 = vmatprep.subr.mxu0 0.0
    %1027 = vmatpush1.msra.mxu0 0.0
    %1028 = vmatprep.subr.mxu0 0.0
    %1029 = vmatpush1.msra.mxu0 0.0
    %1030 = vmatprep.subr.mxu0 0.0
    %1031 = vmatpush1.msra.mxu0 0.0
    %1032 = vmatprep.subr.mxu0 0.0
    %1033 = vmatpush1.msra.mxu0 0.0
    %1034 = vmatprep.subr.mxu0 0.0
    %1035 = vmatpush1.msra.mxu0 0.0
    %1036 = vmatprep.subr.mxu0 0.0
    %1037 = vmatpush1.msra.mxu0 0.0
    %1038 = vmatprep.subr.mxu0 0.0
    %1039 = vmatpush1.msra.mxu0 0.0
    %1040 = vmatprep.subr.mxu0 0.0
    %1041 = vmatpush1.msra.mxu0 0.0
    %1042 = vmatprep.subr.mxu0 0.0
    %1043 = vmatpush1.msra.mxu0 0.0
    %1044 = vmatprep.subr.mxu0 0.0
    %1045 = vmatpush1.msra.mxu0 0.0
    %1046 = vmatprep.subr.mxu0 0.0
    %1047 = vmatpush1.msra.mxu0 0.0
    %1048 = vmatprep.mubr.f32.mxu0 0.0
    %1049 = vmatmul.mubr.f32.gmra.mrb[0].mxu0 %v982
    %v1050 = vpop.f32.mrb[0].mxu0
    %v1051 = vadd.f32 0.0, %v1050
    %v1052 = vpop.f32.mrb[0].mxu0
    %1053 = vdwg.mxu0
    %v1054 = vmax.f32 %v1051, 1e-06
    %v1055 = vmin.f32 %v1054, 1000000.0
    %v1056 = vmax.f32 %v1051, 0.0
    %vm1057 = vcmp.ne.f32.partialorder %v1051, %v1051
    %v1058 = vadd.f32 %v1051, 0.0
    %v1059 = vand.u32 2147483647, %v1051
    %v1060 = vsub.f32 0.0, %v1059
    %v1061 = vmul.f32 %v1060, 1.442695
    %v1062 = vpow.pop %v1061
    %v1063 = vadd.f32 %v1062, 1.0
    %v1064 = vlog2.pop %v1063
    %v1065 = vmul.f32 %v1064, 0.6931472
    %v1066 = vmul.f32 -0.5, %v1062
    %v1067 = vadd.f32 %v1066, 1.0
    %v1068 = vmul.f32 %v1067, %v1062
    %v1069 = vand.u32 2147483647, %v1062
    %vm1070 = vcmp.lt.f32.partialorder %v1069, 0.0004427343
    %v1071 = vsel %vm1070, %v1068, %v1065
    %v1072 = vadd.f32 %v1056, %v1071
    %v1073 = vsel %vm1057, %v1058, %v1072
    %v1074 = vmax.f32 %v1073, 1e-06
    %s1075 = scalar_lea.vmem [#allocation7], 16
    %v1076 = vld [vmem:[%s1075] sm:$0xf]
    %v1077 = vunpack.c.l.bf16 %v1076
    %1079 = vrot.lane.b32.xlu0 %v1074, 96
    %v1080 = vpop.permute.xlu0 %1079
    %v1082 = vmul.f32 %v1077, %v1080
    %v1083 = vadd.f32 %v1055, %v1082
    %1085 = vrot.lane.b32.xlu0 %v978, 64
    %v1086 = vpop.permute.xlu0 %1085
    %1089 = vrot.lane.b32.xlu0 %v1083, 32
    %v1090 = vpop.permute.xlu0 %1089
    %1093 = vrot.lane.b32.xlu0 %v1055, 64
    %v1094 = vpop.permute.xlu0 %1093
    %1096 = vrot.lane.b32.xlu0 %v1074, 64
    %v1097 = vpop.permute.xlu0 %1096
    %v1099 = vsel %vm106, %v1086, %v1090
    %v1100 = vsel %vm299, %v1099, %v1094
    %v1101 = vsel %vm301, %v1100, %v1097
    %s1102 = scalar_lea.vmem [#allocation12], 32
    %1103 = vst [vmem:[%s1102] sm:$0xff] %v1101
    %s1104 = scalar_lea.vmem [#allocation4], 20
    %v1105 = vld [vmem:[%s1104] sm:$0xf]
    %v1106 = vunpack.c.l.bf16 %v1105
    %v1107 = vpack.c.bf16 %v978, %v978
    %1109 = vrot.lane.b32.xlu0 %v1107, 64
    %v1110 = vpop.permute.xlu0 %1109
    %v1112 = vsel %vm106, %v1110, 0
    %1114 = vmatprep.subr.bf16.mxu0 0
    %1115 = vmatpush1.bf16.msra.mxu0 %v102
    %1116 = vmatprep.subr.bf16.mxu0 0
    %1117 = vmatpush1.bf16.msra.mxu0 %v103
    %1118 = vmatprep.subr.bf16.mxu0 0
    %1119 = vmatpush1.bf16.msra.mxu0 0
    %1120 = vmatprep.subr.bf16.mxu0 0
    %1121 = vmatpush1.bf16.msra.mxu0 0
    %1122 = vmatprep.subr.bf16.mxu0 0
    %1123 = vmatpush1.bf16.msra.mxu0 0
    %1124 = vmatprep.subr.bf16.mxu0 0
    %1125 = vmatpush1.bf16.msra.mxu0 0
    %1126 = vmatprep.subr.bf16.mxu0 0
    %1127 = vmatpush1.bf16.msra.mxu0 0
    %1128 = vmatprep.subr.bf16.mxu0 0
    %1129 = vmatpush1.bf16.msra.mxu0 0
    %1130 = vmatprep.subr.bf16.mxu0 0
    %1131 = vmatpush1.bf16.msra.mxu0 0
    %1132 = vmatprep.subr.bf16.mxu0 0
    %1133 = vmatpush1.bf16.msra.mxu0 0
    %1134 = vmatprep.subr.bf16.mxu0 0
    %1135 = vmatpush1.bf16.msra.mxu0 0
    %1136 = vmatprep.subr.bf16.mxu0 0
    %1137 = vmatpush1.bf16.msra.mxu0 0
    %1138 = vmatprep.subr.bf16.mxu0 0
    %1139 = vmatpush1.bf16.msra.mxu0 0
    %1140 = vmatprep.subr.bf16.mxu0 0
    %1141 = vmatpush1.bf16.msra.mxu0 0
    %1142 = vmatprep.subr.bf16.mxu0 0
    %1143 = vmatpush1.bf16.msra.mxu0 0
    %1144 = vmatprep.subr.bf16.mxu0 0
    %1145 = vmatpush1.bf16.msra.mxu0 0
    %1146 = vmatprep.mubr.bf16.mxu0 0
    %1147 = vmatmul.mubr.bf16.gmra.mrb[0].mxu0 %v1112
    %v1148 = vpop.f32.mrb[0].mxu0
    %v1149 = vadd.f32 0.0, %v1148
    %v1150 = vpop.f32.mrb[0].mxu0
    %v1151 = vpop.f32.mrb[0].mxu0
    %v1152 = vpop.f32.mrb[0].mxu0
    %1153 = vdwg.mxu0
    %v1154 = vadd.f32 %v1106, %v1149
    %v1155 = vxor.u32 %v1154, 2147483648
    %v1156 = vmul.f32 %v1155, 1.442695
    %v1157 = vpow.pop %v1156
    %v1158 = vadd.f32 %v1157, 1.0
    %v1159 = vrcp.pop %v1158
    %v1160 = vmul.f32 1.0, %v1159
    %v1161 = vtanh.pop %v1154
    %v1162 = vmul.f32 %v1160, %v1090
    %1164 = vrot.lane.b32.xlu0 %v1161, 32
    %v1165 = vpop.permute.xlu0 %1164
    %v1167 = vmul.f32 %v1160, %v1165
    %1169 = vrot.lane.b32.xlu0 %v1167, 32
    %v1170 = vpop.permute.xlu0 %1169
    %v1172 = vadd.f32 %v1162, %v1170
    %v1173 = vtanh.pop %v1083
    %1175 = vrot.lane.b32.xlu0 %v1173, 64
    %v1176 = vpop.permute.xlu0 %1175
    %v1178 = vmul.f32 %v1160, %v1176
    %1180 = vrot.lane.b32.xlu0 %v1172, 96
    %v1181 = vpop.permute.xlu0 %1180
    %v1182 = vsel %vm106, %v1181, 0
    %1184 = vmatprep.subr.mxu0 0.0
    %1185 = vmatpush1.msra.mxu0 %v85
    %1186 = vmatprep.subr.mxu0 0.0
    %1187 = vmatpush1.msra.mxu0 %v86
    %1188 = vmatprep.subr.mxu0 0.0
    %1189 = vmatpush1.msra.mxu0 %v87
    %1190 = vmatprep.subr.mxu0 0.0
    %1191 = vmatpush1.msra.mxu0 %v88
    %1192 = vmatprep.subr.mxu0 0.0
    %1193 = vmatpush1.msra.mxu0 0.0
    %1194 = vmatprep.subr.mxu0 0.0
    %1195 = vmatpush1.msra.mxu0 0.0
    %1196 = vmatprep.subr.mxu0 0.0
    %1197 = vmatpush1.msra.mxu0 0.0
    %1198 = vmatprep.subr.mxu0 0.0
    %1199 = vmatpush1.msra.mxu0 0.0
    %1200 = vmatprep.subr.mxu0 0.0
    %1201 = vmatpush1.msra.mxu0 0.0
    %1202 = vmatprep.subr.mxu0 0.0
    %1203 = vmatpush1.msra.mxu0 0.0
    %1204 = vmatprep.subr.mxu0 0.0
    %1205 = vmatpush1.msra.mxu0 0.0
    %1206 = vmatprep.subr.mxu0 0.0
    %1207 = vmatpush1.msra.mxu0 0.0
    %1208 = vmatprep.subr.mxu0 0.0
    %1209 = vmatpush1.msra.mxu0 0.0
    %1210 = vmatprep.subr.mxu0 0.0
    %1211 = vmatpush1.msra.mxu0 0.0
    %1212 = vmatprep.subr.mxu0 0.0
    %1213 = vmatpush1.msra.mxu0 0.0
    %1214 = vmatprep.subr.mxu0 0.0
    %1215 = vmatpush1.msra.mxu0 0.0
    %1216 = vmatprep.subr.mxu0 0.0
    %1217 = vmatpush1.msra.mxu0 0.0
    %1218 = vmatprep.subr.mxu0 0.0
    %1219 = vmatpush1.msra.mxu0 0.0
    %1220 = vmatprep.subr.mxu0 0.0
    %1221 = vmatpush1.msra.mxu0 0.0
    %1222 = vmatprep.subr.mxu0 0.0
    %1223 = vmatpush1.msra.mxu0 0.0
    %1224 = vmatprep.subr.mxu0 0.0
    %1225 = vmatpush1.msra.mxu0 0.0
    %1226 = vmatprep.subr.mxu0 0.0
    %1227 = vmatpush1.msra.mxu0 0.0
    %1228 = vmatprep.subr.mxu0 0.0
    %1229 = vmatpush1.msra.mxu0 0.0
    %1230 = vmatprep.subr.mxu0 0.0
    %1231 = vmatpush1.msra.mxu0 0.0
    %1232 = vmatprep.subr.mxu0 0.0
    %1233 = vmatpush1.msra.mxu0 0.0
    %1234 = vmatprep.subr.mxu0 0.0
    %1235 = vmatpush1.msra.mxu0 0.0
    %1236 = vmatprep.subr.mxu0 0.0
    %1237 = vmatpush1.msra.mxu0 0.0
    %1238 = vmatprep.subr.mxu0 0.0
    %1239 = vmatpush1.msra.mxu0 0.0
    %1240 = vmatprep.subr.mxu0 0.0
    %1241 = vmatpush1.msra.mxu0 0.0
    %1242 = vmatprep.subr.mxu0 0.0
    %1243 = vmatpush1.msra.mxu0 0.0
    %1244 = vmatprep.subr.mxu0 0.0
    %1245 = vmatpush1.msra.mxu0 0.0
    %1246 = vmatprep.subr.mxu0 0.0
    %1247 = vmatpush1.msra.mxu0 0.0
    %1248 = vmatprep.mubr.f32.mxu0 0.0
    %1249 = vmatmul.mubr.f32.gmra.mrb[0].mxu0 %v1182
    %v1250 = vpop.f32.mrb[0].mxu0
    %v1251 = vadd.f32 0.0, %v1250
    %v1252 = vpop.f32.mrb[0].mxu0
    %1253 = vdwg.mxu0
    %v1254 = vmax.f32 %v1251, 1e-06
    %v1255 = vmin.f32 %v1254, 1000000.0
    %v1256 = vmax.f32 %v1251, 0.0
    %vm1257 = vcmp.ne.f32.partialorder %v1251, %v1251
    %v1258 = vadd.f32 %v1251, 0.0
    %v1259 = vand.u32 2147483647, %v1251
    %v1260 = vsub.f32 0.0, %v1259
    %v1261 = vmul.f32 %v1260, 1.442695
    %v1262 = vpow.pop %v1261
    %v1263 = vadd.f32 %v1262, 1.0
    %v1264 = vlog2.pop %v1263
    %v1265 = vmul.f32 %v1264, 0.6931472
    %v1266 = vmul.f32 -0.5, %v1262
    %v1267 = vadd.f32 %v1266, 1.0
    %v1268 = vmul.f32 %v1267, %v1262
    %v1269 = vand.u32 2147483647, %v1262
    %vm1270 = vcmp.lt.f32.partialorder %v1269, 0.0004427343
    %v1271 = vsel %vm1270, %v1268, %v1265
    %v1272 = vadd.f32 %v1256, %v1271
    %v1273 = vsel %vm1257, %v1258, %v1272
    %v1274 = vmax.f32 %v1273, 1e-06
    %s1275 = scalar_lea.vmem [#allocation7], 20
    %v1276 = vld [vmem:[%s1275] sm:$0xf]
    %v1277 = vunpack.c.l.bf16 %v1276
    %1279 = vrot.lane.b32.xlu0 %v1274, 96
    %v1280 = vpop.permute.xlu0 %1279
    %v1282 = vmul.f32 %v1277, %v1280
    %v1283 = vadd.f32 %v1255, %v1282
    %1285 = vrot.lane.b32.xlu0 %v1178, 64
    %v1286 = vpop.permute.xlu0 %1285
    %1289 = vrot.lane.b32.xlu0 %v1283, 32
    %v1290 = vpop.permute.xlu0 %1289
    %1293 = vrot.lane.b32.xlu0 %v1255, 64
    %v1294 = vpop.permute.xlu0 %1293
    %1296 = vrot.lane.b32.xlu0 %v1274, 64
    %v1297 = vpop.permute.xlu0 %1296
    %v1299 = vsel %vm106, %v1286, %v1290
    %v1300 = vsel %vm299, %v1299, %v1294
    %v1301 = vsel %vm301, %v1300, %v1297
    %s1302 = scalar_lea.vmem [#allocation12], 40
    %1303 = vst [vmem:[%s1302] sm:$0xff] %v1301
    %s1304 = scalar_lea.vmem [#allocation4], 24
    %v1305 = vld [vmem:[%s1304] sm:$0xf]
    %v1306 = vunpack.c.l.bf16 %v1305
    %v1307 = vpack.c.bf16 %v1178, %v1178
    %1309 = vrot.lane.b32.xlu0 %v1307, 64
    %v1310 = vpop.permute.xlu0 %1309
    %v1312 = vsel %vm106, %v1310, 0
    %1314 = vmatprep.subr.bf16.mxu0 0
    %1315 = vmatpush1.bf16.msra.mxu0 %v102
    %1316 = vmatprep.subr.bf16.mxu0 0
    %1317 = vmatpush1.bf16.msra.mxu0 %v103
    %1318 = vmatprep.subr.bf16.mxu0 0
    %1319 = vmatpush1.bf16.msra.mxu0 0
    %1320 = vmatprep.subr.bf16.mxu0 0
    %1321 = vmatpush1.bf16.msra.mxu0 0
    %1322 = vmatprep.subr.bf16.mxu0 0
    %1323 = vmatpush1.bf16.msra.mxu0 0
    %1324 = vmatprep.subr.bf16.mxu0 0
    %1325 = vmatpush1.bf16.msra.mxu0 0
    %1326 = vmatprep.subr.bf16.mxu0 0
    %1327 = vmatpush1.bf16.msra.mxu0 0
    %1328 = vmatprep.subr.bf16.mxu0 0
    %1329 = vmatpush1.bf16.msra.mxu0 0
    %1330 = vmatprep.subr.bf16.mxu0 0
    %1331 = vmatpush1.bf16.msra.mxu0 0
    %1332 = vmatprep.subr.bf16.mxu0 0
    %1333 = vmatpush1.bf16.msra.mxu0 0
    %1334 = vmatprep.subr.bf16.mxu0 0
    %1335 = vmatpush1.bf16.msra.mxu0 0
    %1336 = vmatprep.subr.bf16.mxu0 0
    %1337 = vmatpush1.bf16.msra.mxu0 0
    %1338 = vmatprep.subr.bf16.mxu0 0
    %1339 = vmatpush1.bf16.msra.mxu0 0
    %1340 = vmatprep.subr.bf16.mxu0 0
    %1341 = vmatpush1.bf16.msra.mxu0 0
    %1342 = vmatprep.subr.bf16.mxu0 0
    %1343 = vmatpush1.bf16.msra.mxu0 0
    %1344 = vmatprep.subr.bf16.mxu0 0
    %1345 = vmatpush1.bf16.msra.mxu0 0
    %1346 = vmatprep.mubr.bf16.mxu0 0
    %1347 = vmatmul.mubr.bf16.gmra.mrb[0].mxu0 %v1312
    %v1348 = vpop.f32.mrb[0].mxu0
    %v1349 = vadd.f32 0.0, %v1348
    %v1350 = vpop.f32.mrb[0].mxu0
    %v1351 = vpop.f32.mrb[0].mxu0
    %v1352 = vpop.f32.mrb[0].mxu0
    %1353 = vdwg.mxu0
    %v1354 = vadd.f32 %v1306, %v1349
    %v1355 = vxor.u32 %v1354, 2147483648
    %v1356 = vmul.f32 %v1355, 1.442695
    %v1357 = vpow.pop %v1356
    %v1358 = vadd.f32 %v1357, 1.0
    %v1359 = vrcp.pop %v1358
    %v1360 = vmul.f32 1.0, %v1359
    %v1361 = vtanh.pop %v1354
    %v1362 = vmul.f32 %v1360, %v1290
    %1364 = vrot.lane.b32.xlu0 %v1361, 32
    %v1365 = vpop.permute.xlu0 %1364
    %v1367 = vmul.f32 %v1360, %v1365
    %1369 = vrot.lane.b32.xlu0 %v1367, 32
    %v1370 = vpop.permute.xlu0 %1369
    %v1372 = vadd.f32 %v1362, %v1370
    %v1373 = vtanh.pop %v1283
    %1375 = vrot.lane.b32.xlu0 %v1373, 64
    %v1376 = vpop.permute.xlu0 %1375
    %v1378 = vmul.f32 %v1360, %v1376
    %1380 = vrot.lane.b32.xlu0 %v1372, 96
    %v1381 = vpop.permute.xlu0 %1380
    %v1382 = vsel %vm106, %v1381, 0
    %1384 = vmatprep.subr.mxu0 0.0
    %1385 = vmatpush1.msra.mxu0 %v85
    %1386 = vmatprep.subr.mxu0 0.0
    %1387 = vmatpush1.msra.mxu0 %v86
    %1388 = vmatprep.subr.mxu0 0.0
    %1389 = vmatpush1.msra.mxu0 %v87
    %1390 = vmatprep.subr.mxu0 0.0
    %1391 = vmatpush1.msra.mxu0 %v88
    %1392 = vmatprep.subr.mxu0 0.0
    %1393 = vmatpush1.msra.mxu0 0.0
    %1394 = vmatprep.subr.mxu0 0.0
    %1395 = vmatpush1.msra.mxu0 0.0
    %1396 = vmatprep.subr.mxu0 0.0
    %1397 = vmatpush1.msra.mxu0 0.0
    %1398 = vmatprep.subr.mxu0 0.0
    %1399 = vmatpush1.msra.mxu0 0.0
    %1400 = vmatprep.subr.mxu0 0.0
    %1401 = vmatpush1.msra.mxu0 0.0
    %1402 = vmatprep.subr.mxu0 0.0
    %1403 = vmatpush1.msra.mxu0 0.0
    %1404 = vmatprep.subr.mxu0 0.0
    %1405 = vmatpush1.msra.mxu0 0.0
    %1406 = vmatprep.subr.mxu0 0.0
    %1407 = vmatpush1.msra.mxu0 0.0
    %1408 = vmatprep.subr.mxu0 0.0
    %1409 = vmatpush1.msra.mxu0 0.0
    %1410 = vmatprep.subr.mxu0 0.0
    %1411 = vmatpush1.msra.mxu0 0.0
    %1412 = vmatprep.subr.mxu0 0.0
    %1413 = vmatpush1.msra.mxu0 0.0
    %1414 = vmatprep.subr.mxu0 0.0
    %1415 = vmatpush1.msra.mxu0 0.0
    %1416 = vmatprep.subr.mxu0 0.0
    %1417 = vmatpush1.msra.mxu0 0.0
    %1418 = vmatprep.subr.mxu0 0.0
    %1419 = vmatpush1.msra.mxu0 0.0
    %1420 = vmatprep.subr.mxu0 0.0
    %1421 = vmatpush1.msra.mxu0 0.0
    %1422 = vmatprep.subr.mxu0 0.0
    %1423 = vmatpush1.msra.mxu0 0.0
    %1424 = vmatprep.subr.mxu0 0.0
    %1425 = vmatpush1.msra.mxu0 0.0
    %1426 = vmatprep.subr.mxu0 0.0
    %1427 = vmatpush1.msra.mxu0 0.0
    %1428 = vmatprep.subr.mxu0 0.0
    %1429 = vmatpush1.msra.mxu0 0.0
    %1430 = vmatprep.subr.mxu0 0.0
    %1431 = vmatpush1.msra.mxu0 0.0
    %1432 = vmatprep.subr.mxu0 0.0
    %1433 = vmatpush1.msra.mxu0 0.0
    %1434 = vmatprep.subr.mxu0 0.0
    %1435 = vmatpush1.msra.mxu0 0.0
    %1436 = vmatprep.subr.mxu0 0.0
    %1437 = vmatpush1.msra.mxu0 0.0
    %1438 = vmatprep.subr.mxu0 0.0
    %1439 = vmatpush1.msra.mxu0 0.0
    %1440 = vmatprep.subr.mxu0 0.0
    %1441 = vmatpush1.msra.mxu0 0.0
    %1442 = vmatprep.subr.mxu0 0.0
    %1443 = vmatpush1.msra.mxu0 0.0
    %1444 = vmatprep.subr.mxu0 0.0
    %1445 = vmatpush1.msra.mxu0 0.0
    %1446 = vmatprep.subr.mxu0 0.0
    %1447 = vmatpush1.msra.mxu0 0.0
    %1448 = vmatprep.mubr.f32.mxu0 0.0
    %1449 = vmatmul.mubr.f32.gmra.mrb[0].mxu0 %v1382
    %v1450 = vpop.f32.mrb[0].mxu0
    %v1451 = vadd.f32 0.0, %v1450
    %v1452 = vpop.f32.mrb[0].mxu0
    %1453 = vdwg.mxu0
    %v1454 = vmax.f32 %v1451, 1e-06
    %v1455 = vmin.f32 %v1454, 1000000.0
    %v1456 = vmax.f32 %v1451, 0.0
    %vm1457 = vcmp.ne.f32.partialorder %v1451, %v1451
    %v1458 = vadd.f32 %v1451, 0.0
    %v1459 = vand.u32 2147483647, %v1451
    %v1460 = vsub.f32 0.0, %v1459
    %v1461 = vmul.f32 %v1460, 1.442695
    %v1462 = vpow.pop %v1461
    %v1463 = vadd.f32 %v1462, 1.0
    %v1464 = vlog2.pop %v1463
    %v1465 = vmul.f32 %v1464, 0.6931472
    %v1466 = vmul.f32 -0.5, %v1462
    %v1467 = vadd.f32 %v1466, 1.0
    %v1468 = vmul.f32 %v1467, %v1462
    %v1469 = vand.u32 2147483647, %v1462
    %vm1470 = vcmp.lt.f32.partialorder %v1469, 0.0004427343
    %v1471 = vsel %vm1470, %v1468, %v1465
    %v1472 = vadd.f32 %v1456, %v1471
    %v1473 = vsel %vm1457, %v1458, %v1472
    %v1474 = vmax.f32 %v1473, 1e-06
    %s1475 = scalar_lea.vmem [#allocation7], 24
    %v1476 = vld [vmem:[%s1475] sm:$0xf]
    %v1477 = vunpack.c.l.bf16 %v1476
    %1479 = vrot.lane.b32.xlu0 %v1474, 96
    %v1480 = vpop.permute.xlu0 %1479
    %v1482 = vmul.f32 %v1477, %v1480
    %v1483 = vadd.f32 %v1455, %v1482
    %1485 = vrot.lane.b32.xlu0 %v1378, 64
    %v1486 = vpop.permute.xlu0 %1485
    %1489 = vrot.lane.b32.xlu0 %v1483, 32
    %v1490 = vpop.permute.xlu0 %1489
    %1493 = vrot.lane.b32.xlu0 %v1455, 64
    %v1494 = vpop.permute.xlu0 %1493
    %1496 = vrot.lane.b32.xlu0 %v1474, 64
    %v1497 = vpop.permute.xlu0 %1496
    %v1499 = vsel %vm106, %v1486, %v1490
    %v1500 = vsel %vm299, %v1499, %v1494
    %v1501 = vsel %vm301, %v1500, %v1497
    %s1502 = scalar_lea.vmem [#allocation12], 48
    %1503 = vst [vmem:[%s1502] sm:$0xff] %v1501
    %s1504 = scalar_lea.vmem [#allocation4], 28
    %v1505 = vld [vmem:[%s1504] sm:$0xf]
    %v1506 = vunpack.c.l.bf16 %v1505
    %v1507 = vpack.c.bf16 %v1378, %v1378
    %1509 = vrot.lane.b32.xlu0 %v1507, 64
    %v1510 = vpop.permute.xlu0 %1509
    %v1512 = vsel %vm106, %v1510, 0
    %1514 = vmatprep.subr.bf16.mxu0 0
    %1515 = vmatpush1.bf16.msra.mxu0 %v102
    %1516 = vmatprep.subr.bf16.mxu0 0
    %1517 = vmatpush1.bf16.msra.mxu0 %v103
    %1518 = vmatprep.subr.bf16.mxu0 0
    %1519 = vmatpush1.bf16.msra.mxu0 0
    %1520 = vmatprep.subr.bf16.mxu0 0
    %1521 = vmatpush1.bf16.msra.mxu0 0
    %1522 = vmatprep.subr.bf16.mxu0 0
    %1523 = vmatpush1.bf16.msra.mxu0 0
    %1524 = vmatprep.subr.bf16.mxu0 0
    %1525 = vmatpush1.bf16.msra.mxu0 0
    %1526 = vmatprep.subr.bf16.mxu0 0
    %1527 = vmatpush1.bf16.msra.mxu0 0
    %1528 = vmatprep.subr.bf16.mxu0 0
    %1529 = vmatpush1.bf16.msra.mxu0 0
    %1530 = vmatprep.subr.bf16.mxu0 0
    %1531 = vmatpush1.bf16.msra.mxu0 0
    %1532 = vmatprep.subr.bf16.mxu0 0
    %1533 = vmatpush1.bf16.msra.mxu0 0
    %1534 = vmatprep.subr.bf16.mxu0 0
    %1535 = vmatpush1.bf16.msra.mxu0 0
    %1536 = vmatprep.subr.bf16.mxu0 0
    %1537 = vmatpush1.bf16.msra.mxu0 0
    %1538 = vmatprep.subr.bf16.mxu0 0
    %1539 = vmatpush1.bf16.msra.mxu0 0
    %1540 = vmatprep.subr.bf16.mxu0 0
    %1541 = vmatpush1.bf16.msra.mxu0 0
    %1542 = vmatprep.subr.bf16.mxu0 0
    %1543 = vmatpush1.bf16.msra.mxu0 0
    %1544 = vmatprep.subr.bf16.mxu0 0
    %1545 = vmatpush1.bf16.msra.mxu0 0
    %1546 = vmatprep.mubr.bf16.mxu0 0
    %1547 = vmatmul.mubr.bf16.gmra.mrb[0].mxu0 %v1512
    %v1548 = vpop.f32.mrb[0].mxu0
    %v1549 = vadd.f32 0.0, %v1548
    %v1550 = vpop.f32.mrb[0].mxu0
    %v1551 = vpop.f32.mrb[0].mxu0
    %v1552 = vpop.f32.mrb[0].mxu0
    %1553 = vdwg.mxu0
    %v1554 = vadd.f32 %v1506, %v1549
    %v1555 = vxor.u32 %v1554, 2147483648
    %v1556 = vmul.f32 %v1555, 1.442695
    %v1557 = vpow.pop %v1556
    %v1558 = vadd.f32 %v1557, 1.0
    %v1559 = vrcp.pop %v1558
    %v1560 = vmul.f32 1.0, %v1559
    %v1561 = vtanh.pop %v1554
    %v1562 = vmul.f32 %v1560, %v1490
    %1564 = vrot.lane.b32.xlu0 %v1561, 32
    %v1565 = vpop.permute.xlu0 %1564
    %v1567 = vmul.f32 %v1560, %v1565
    %1569 = vrot.lane.b32.xlu0 %v1567, 32
    %v1570 = vpop.permute.xlu0 %1569
    %v1572 = vadd.f32 %v1562, %v1570
    %v1573 = vtanh.pop %v1483
    %1575 = vrot.lane.b32.xlu0 %v1573, 64
    %v1576 = vpop.permute.xlu0 %1575
    %v1578 = vmul.f32 %v1560, %v1576
    %1580 = vrot.lane.b32.xlu0 %v1572, 96
    %v1581 = vpop.permute.xlu0 %1580
    %v1582 = vsel %vm106, %v1581, 0
    %1584 = vmatprep.subr.mxu0 0.0
    %1585 = vmatpush1.msra.mxu0 %v85
    %1586 = vmatprep.subr.mxu0 0.0
    %1587 = vmatpush1.msra.mxu0 %v86
    %1588 = vmatprep.subr.mxu0 0.0
    %1589 = vmatpush1.msra.mxu0 %v87
    %1590 = vmatprep.subr.mxu0 0.0
    %1591 = vmatpush1.msra.mxu0 %v88
    %1592 = vmatprep.subr.mxu0 0.0
    %1593 = vmatpush1.msra.mxu0 0.0
    %1594 = vmatprep.subr.mxu0 0.0
    %1595 = vmatpush1.msra.mxu0 0.0
    %1596 = vmatprep.subr.mxu0 0.0
    %1597 = vmatpush1.msra.mxu0 0.0
    %1598 = vmatprep.subr.mxu0 0.0
    %1599 = vmatpush1.msra.mxu0 0.0
    %1600 = vmatprep.subr.mxu0 0.0
    %1601 = vmatpush1.msra.mxu0 0.0
    %1602 = vmatprep.subr.mxu0 0.0
    %1603 = vmatpush1.msra.mxu0 0.0
    %1604 = vmatprep.subr.mxu0 0.0
    %1605 = vmatpush1.msra.mxu0 0.0
    %1606 = vmatprep.subr.mxu0 0.0
    %1607 = vmatpush1.msra.mxu0 0.0
    %1608 = vmatprep.subr.mxu0 0.0
    %1609 = vmatpush1.msra.mxu0 0.0
    %1610 = vmatprep.subr.mxu0 0.0
    %1611 = vmatpush1.msra.mxu0 0.0
    %1612 = vmatprep.subr.mxu0 0.0
    %1613 = vmatpush1.msra.mxu0 0.0
    %1614 = vmatprep.subr.mxu0 0.0
    %1615 = vmatpush1.msra.mxu0 0.0
    %1616 = vmatprep.subr.mxu0 0.0
    %1617 = vmatpush1.msra.mxu0 0.0
    %1618 = vmatprep.subr.mxu0 0.0
    %1619 = vmatpush1.msra.mxu0 0.0
    %1620 = vmatprep.subr.mxu0 0.0
    %1621 = vmatpush1.msra.mxu0 0.0
    %1622 = vmatprep.subr.mxu0 0.0
    %1623 = vmatpush1.msra.mxu0 0.0
    %1624 = vmatprep.subr.mxu0 0.0
    %1625 = vmatpush1.msra.mxu0 0.0
    %1626 = vmatprep.subr.mxu0 0.0
    %1627 = vmatpush1.msra.mxu0 0.0
    %1628 = vmatprep.subr.mxu0 0.0
    %1629 = vmatpush1.msra.mxu0 0.0
    %1630 = vmatprep.subr.mxu0 0.0
    %1631 = vmatpush1.msra.mxu0 0.0
    %1632 = vmatprep.subr.mxu0 0.0
    %1633 = vmatpush1.msra.mxu0 0.0
    %1634 = vmatprep.subr.mxu0 0.0
    %1635 = vmatpush1.msra.mxu0 0.0
    %1636 = vmatprep.subr.mxu0 0.0
    %1637 = vmatpush1.msra.mxu0 0.0
    %1638 = vmatprep.subr.mxu0 0.0
    %1639 = vmatpush1.msra.mxu0 0.0
    %1640 = vmatprep.subr.mxu0 0.0
    %1641 = vmatpush1.msra.mxu0 0.0
    %1642 = vmatprep.subr.mxu0 0.0
    %1643 = vmatpush1.msra.mxu0 0.0
    %1644 = vmatprep.subr.mxu0 0.0
    %1645 = vmatpush1.msra.mxu0 0.0
    %1646 = vmatprep.subr.mxu0 0.0
    %1647 = vmatpush1.msra.mxu0 0.0
    %1648 = vmatprep.mubr.f32.mxu0 0.0
    %1649 = vmatmul.mubr.f32.gmra.mrb[0].mxu0 %v1582
    %v1650 = vpop.f32.mrb[0].mxu0
    %v1651 = vadd.f32 0.0, %v1650
    %v1652 = vpop.f32.mrb[0].mxu0
    %1653 = vdwg.mxu0
    %v1654 = vmax.f32 %v1651, 1e-06
    %v1655 = vmin.f32 %v1654, 1000000.0
    %v1656 = vmax.f32 %v1651, 0.0
    %vm1657 = vcmp.ne.f32.partialorder %v1651, %v1651
    %v1658 = vadd.f32 %v1651, 0.0
    %v1659 = vand.u32 2147483647, %v1651
    %v1660 = vsub.f32 0.0, %v1659
    %v1661 = vmul.f32 %v1660, 1.442695
    %v1662 = vpow.pop %v1661
    %v1663 = vadd.f32 %v1662, 1.0
    %v1664 = vlog2.pop %v1663
    %v1665 = vmul.f32 %v1664, 0.6931472
    %v1666 = vmul.f32 -0.5, %v1662
    %v1667 = vadd.f32 %v1666, 1.0
    %v1668 = vmul.f32 %v1667, %v1662
    %v1669 = vand.u32 2147483647, %v1662
    %vm1670 = vcmp.lt.f32.partialorder %v1669, 0.0004427343
    %v1671 = vsel %vm1670, %v1668, %v1665
    %v1672 = vadd.f32 %v1656, %v1671
    %v1673 = vsel %vm1657, %v1658, %v1672
    %v1674 = vmax.f32 %v1673, 1e-06
    %s1675 = scalar_lea.vmem [#allocation7], 28
    %v1676 = vld [vmem:[%s1675] sm:$0xf]
    %v1677 = vunpack.c.l.bf16 %v1676
    %1679 = vrot.lane.b32.xlu0 %v1674, 96
    %v1680 = vpop.permute.xlu0 %1679
    %v1682 = vmul.f32 %v1677, %v1680
    %v1683 = vadd.f32 %v1655, %v1682
    %1685 = vrot.lane.b32.xlu0 %v1578, 64
    %v1686 = vpop.permute.xlu0 %1685
    %1689 = vrot.lane.b32.xlu0 %v1683, 32
    %v1690 = vpop.permute.xlu0 %1689
    %1693 = vrot.lane.b32.xlu0 %v1655, 64
    %v1694 = vpop.permute.xlu0 %1693
    %1696 = vrot.lane.b32.xlu0 %v1674, 64
    %v1697 = vpop.permute.xlu0 %1696
    %v1699 = vsel %vm106, %v1686, %v1690
    %v1700 = vsel %vm299, %v1699, %v1694
    %v1701 = vsel %vm301, %v1700, %v1697
    %s1702 = scalar_lea.vmem [#allocation12], 56
    %1703 = vst [vmem:[%s1702] sm:$0xff] %v1701
    %1704 = vst.msk [vmem:[#allocation2] sm:$0xff] %vm106, %v1686
    %1705 = vst.msk [vmem:[#allocation3] sm:$0xff] %vm106, %v1683
    // Predicated region
    $region38: #{tpu_custom_call.1} parent=1 // pred_check
      _
    $region39: #{tpu_custom_call.1} parent=1 // pred_check_branch
      %1707 = sbr.rel (0) target = $region41
    $region40: #{tpu_custom_call.1} parent=1 // pred_region
      %s1709 = ssub.s32 1024, 1024
      %1710 = vsyncadd [#allocation6], %s1709
      %s1711 = sshll.u32 [#allocation12], 4
      %s1712 = int_to_ptr.vmem [resolvable:$true] %s1711
      %1717 = dma.vmem_to_hbm [thread:$0]  %s1712, 1024, %s4, [#allocation6], 128, 128, 8
    $region41: #{tpu_custom_call.1} parent=1 // pred_fallthru
      _
    // Predicated region
    $region42: #{tpu_custom_call.1} parent=1 // pred_check
      _
    $region43: #{tpu_custom_call.1} parent=1 // pred_check_branch
      %1719 = sbr.rel (0) target = $region45
    $region44: #{tpu_custom_call.1} parent=1 // pred_region
      %1720 = dma.done [#allocation6], 1024
    $region45: #{tpu_custom_call.1} parent=1 // pred_fallthru
      _
    %1721 = vsyncpa [#allocation5], 1
    %1722 = vsyncpa [#allocation8], 1
    %1723 = vsyncpa [#allocation11], 1
    %1724 = vsyncpa [#allocation6], 1

</llo_original>
